<compile_context>
chip_gen: v7x
topology: tpu7x:2x2x1
jax: 0.10.0
libtpu: 0.0.40
codegen_flags: <defaults>
</compile_context>

<pallas_src>
import functools

import jax
import jax.numpy as jnp
from jax.experimental import pallas as pl
from jax.experimental.pallas import tpu as pltpu


def _round_up(x, m):
    return (x + m - 1) // m * m


def _resnet_block_kernel(x_ref, w1_ref, b1_ref, w2_ref, b2_ref, o_ref, h1_ref,
                         *, H, W):
    # x_ref : (1, M8, Cp) f32   zero-padded, flattened input slab (one image)
    # w1_ref: (9*Cp, Fp)  bf16  conv1 weights, taps fused along K
    # b1_ref: (1, Fp)     f32
    # w2_ref: (9*Fp, Fp)  bf16  conv2 weights, taps fused along K
    # b2_ref: (1, Fp)     f32
    # o_ref : (1, Mo, Fp) f32   output slab (row r <-> flat padded pos (Wp+1)+r)
    # h1_ref: (M8, Fp)    bf16  VMEM scratch: zero-bordered ReLU(conv1) slab
    Wp = W + 2
    Mc = (H - 1) * Wp + W              # row band covering all interior outputs
    M8 = h1_ref.shape[0]
    Fp = h1_ref.shape[1]
    bf16 = jnp.bfloat16

    # Validity mask for the interior row band: row r corresponds to padded-flat
    # position p = (Wp+1)+r; padded columns 0 and Wp-1 are left/right halo junk
    # produced by the row-shifted-slice convolution and must be zero in h1.
    r_idx = jax.lax.broadcasted_iota(jnp.int32, (Mc, 1), 0)
    col = (r_idx + 1) % Wp
    valid = jnp.logical_and(col != 0, col != Wp - 1)

    def conv3x3(read_tap, w_ref):
        # All 9 taps fused along the contraction dim -> a single MXU matmul
        # with K = 9 * C_padded (bf16 operands, f32 accumulation).
        taps = [read_tap(dy * Wp + dx) for dy in range(3) for dx in range(3)]
        patch = jnp.concatenate(taps, axis=-1)              # (Mc, 9*Cin_p)
        return jax.lax.dot_general(
            patch, w_ref[...], (((1,), (0,)), ((), ())),
            preferred_element_type=jnp.float32)             # (Mc, Fp) f32

    # ---- conv1 + bias + ReLU ------------------------------------------------
    acc1 = conv3x3(lambda s: x_ref[0, pl.ds(s, Mc), :].astype(bf16), w1_ref)
    h1 = jnp.maximum(acc1 + b1_ref[...], 0.0)
    h1 = jnp.where(valid, h1, 0.0)                          # zero halo columns

    # Stash ReLU(conv1) into the bf16 slab. Only the tiny top/bottom halo bands
    # are re-zeroed each step (the interior band is fully overwritten, and its
    # halo columns were zeroed above), so conv2 sees correct SAME zero padding.
    h1_ref[pl.ds(0, Wp + 1), :] = jnp.zeros((Wp + 1, Fp), bf16)
    tail = M8 - (Wp + 1 + Mc)
    h1_ref[pl.ds(Wp + 1 + Mc, tail), :] = jnp.zeros((tail, Fp), bf16)
    h1_ref[pl.ds(Wp + 1, Mc), :] = h1.astype(bf16)

    # ---- conv2 + bias + residual (f32) + final ReLU ---------------------------
    acc2 = conv3x3(lambda s: h1_ref[pl.ds(s, Mc), :], w2_ref)
    resid = x_ref[0, pl.ds(Wp + 1, Mc), :]                  # original f32 x
    out = jnp.maximum(acc2 + b2_ref[...] + resid, 0.0)
    o_ref[0, pl.ds(0, Mc), :] = out.astype(o_ref.dtype)     # lane-dense store


def resnet_block(x_nchw, w1_oihw, b1, w2_oihw, b2):
    """PyTorch-equivalent ResnetBlock forward. x_nchw: (N,C,H,W), weights OIHW."""
    N, C, H, W = x_nchw.shape
    F = w1_oihw.shape[0]
    assert C == F, "residual add requires nb_features == input_features"
    assert w2_oihw.shape == (F, F, 3, 3)

    Hp, Wp = H + 2, W + 2
    Cp = _round_up(C, 128)             # lane-dense channel padding
    Fp = _round_up(F, 128)
    assert Cp == Fp
    M = Hp * Wp
    M8 = _round_up(M, 8)               # input / scratch slab rows
    Mc = (H - 1) * Wp + W              # interior-covering output band
    Mo = _round_up(H * Wp, 8)          # output slab rows

    # NCHW -> zero-padded NHWC (spatial + channel pad fused into one op) ->
    # flattened (row-major over padded H,W) slab. Residual is taken from this
    # same f32 slab inside the kernel; the convs cast to bf16 in-kernel.
    x_nhwc = jnp.transpose(x_nchw, (0, 2, 3, 1)).astype(jnp.float32)
    x_slab = jnp.pad(x_nhwc, ((0, 0), (1, 1), (1, 1), (0, Cp - C)))
    x_slab = x_slab.reshape(N, M, Cp)
    x_slab = jnp.pad(x_slab, ((0, 0), (0, M8 - M), (0, 0)))

    # OIHW -> HWIO, pad channels to 128 multiples, fuse all 9 taps along K.
    def fuse_weights(w_oihw, cin_p, cout_p):
        cout, cin = w_oihw.shape[0], w_oihw.shape[1]
        w = jnp.transpose(w_oihw, (2, 3, 1, 0)).astype(jnp.float32)
        w = jnp.pad(w, ((0, 0), (0, 0), (0, cin_p - cin), (0, cout_p - cout)))
        return w.reshape(9 * cin_p, cout_p).astype(jnp.bfloat16)

    w1f = fuse_weights(w1_oihw, Cp, Fp)
    w2f = fuse_weights(w2_oihw, Fp, Fp)
    b1p = jnp.pad(b1.astype(jnp.float32), (0, Fp - F)).reshape(1, Fp)
    b2p = jnp.pad(b2.astype(jnp.float32), (0, Fp - F)).reshape(1, Fp)

    kernel = functools.partial(_resnet_block_kernel, H=H, W=W)

    out_slab = pl.pallas_call(
        kernel,
        out_shape=jax.ShapeDtypeStruct((N, Mo, Fp), jnp.float32),
        grid_spec=pltpu.PrefetchScalarGridSpec(
            num_scalar_prefetch=0,
            grid=(N,),                                      # one image per step
            in_specs=[
                pl.BlockSpec((1, M8, Cp), lambda n: (n, 0, 0)),
                pl.BlockSpec((9 * Cp, Fp), lambda n: (0, 0)),
                pl.BlockSpec((1, Fp), lambda n: (0, 0)),
                pl.BlockSpec((9 * Fp, Fp), lambda n: (0, 0)),
                pl.BlockSpec((1, Fp), lambda n: (0, 0)),
            ],
            out_specs=pl.BlockSpec((1, Mo, Fp), lambda n: (n, 0, 0)),
            scratch_shapes=[pltpu.VMEM((M8, Fp), jnp.bfloat16)],
        ),
        compiler_params=pltpu.CompilerParams(
            dimension_semantics=("parallel",),
            vmem_limit_bytes=32 * 1024 * 1024),
    )(x_slab, w1f, b1p, w2f, b2p)

    # Drop alignment tail, right-halo junk columns and channel padding; -> NCHW.
    out = out_slab[:, :H * Wp, :].reshape(N, H, Wp, Fp)[:, :, :W, :F]
    return jnp.transpose(out, (0, 3, 1, 2))


if __name__ == "__main__":
    key = jax.random.PRNGKey(0)
    N, C, H, W = 2, 8, 16, 16
    F = C  # nb_features must equal input_features for the residual add
    k1, k2, k3, k4, k5 = jax.random.split(key, 5)

    x = jax.random.normal(k1, (N, C, H, W), jnp.float32)
    w1 = jax.random.normal(k2, (F, C, 3, 3), jnp.float32) * 0.1
    b1 = jax.random.normal(k3, (F,), jnp.float32) * 0.1
    w2 = jax.random.normal(k4, (F, F, 3, 3), jnp.float32) * 0.1
    b2 = jax.random.normal(k5, (F,), jnp.float32) * 0.1

    out = jax.block_until_ready(resnet_block(x, w1, b1, w2, b2))

    # Reference with the same precision choices as the kernel: conv operands in
    # bf16, f32 accumulation, f32 bias / residual / final ReLU (same semantics
    # as the PyTorch module up to the documented mixed-precision choice).
    def ref(x, w1, b1, w2, b2):
        bf = lambda a: a.astype(jnp.bfloat16).astype(jnp.float32)
        y = jax.lax.conv_general_dilated(
            bf(x), bf(w1), (1, 1), ((1, 1), (1, 1)),
            dimension_numbers=("NCHW", "OIHW", "NCHW"))
        y = jnp.maximum(y + b1[None, :, None, None], 0.0)
        y = jax.lax.conv_general_dilated(
            bf(y), bf(w2), (1, 1), ((1, 1), (1, 1)),
            dimension_numbers=("NCHW", "OIHW", "NCHW"))
        y = y + b2[None, :, None, None]
        return jnp.maximum(y + x, 0.0)

    expected = ref(x, w1, b1, w2, b2)
    assert out.shape == (N, F, H, W)
    err = float(jnp.max(jnp.abs(out - expected)))
    assert jnp.allclose(out, expected, atol=1e-2, rtol=1e-2), f"mismatch, max err {err}"
    print("KERNEL_OK")
</pallas_src>

<mosaic_0001>
module attributes {stable_mosaic.version = 11 : i64} {
  func.func @_resnet_block_kernel(%arg0: i32, %arg1: memref<1x328x128xf32, #tpu.memory_space<vmem>>, %arg2: memref<1152x128xbf16, #tpu.memory_space<vmem>>, %arg3: memref<1x128xf32, #tpu.memory_space<vmem>>, %arg4: memref<1152x128xbf16, #tpu.memory_space<vmem>>, %arg5: memref<1x128xf32, #tpu.memory_space<vmem>>, %arg6: memref<1x288x128xf32, #tpu.memory_space<vmem>>, %arg7: memref<328x128xbf16, #tpu.memory_space<vmem>>) attributes {dimension_semantics = [#tpu.dimension_semantics<parallel>], iteration_bounds = array<i64: 2>, scalar_prefetch = 0 : i64, scratch_operands = 1 : i64, tpu.core_type = #tpu.core_type<tc>, window_params = [{transform_indices = @transform_0, window_bounds = array<i64: 1, 328, 128>}, {pipeline_mode = #tpu.pipeline_mode<synchronous>, transform_indices = @transform_1, window_bounds = array<i64: 1152, 128>}, {pipeline_mode = #tpu.pipeline_mode<synchronous>, transform_indices = @transform_2, window_bounds = array<i64: 1, 128>}, {pipeline_mode = #tpu.pipeline_mode<synchronous>, transform_indices = @transform_3, window_bounds = array<i64: 1152, 128>}, {pipeline_mode = #tpu.pipeline_mode<synchronous>, transform_indices = @transform_4, window_bounds = array<i64: 1, 128>}, {transform_indices = @transform_5, window_bounds = array<i64: 1, 288, 128>}]} {
    %0 = tpu.iota {dimensions = array<i32: 0>} : vector<286x1xi32>
    %c1_i32 = arith.constant 1 : i32
    %1 = vector.broadcast %c1_i32 : i32 to vector<286x1xi32>
    %2 = arith.addi %0, %1 : vector<286x1xi32>
    %c18_i32 = arith.constant 18 : i32
    %c0_i32 = arith.constant 0 : i32
    %3 = arith.cmpi eq, %c18_i32, %c0_i32 : i32
    %c1_i32_0 = arith.constant 1 : i32
    %4 = arith.select %3, %c1_i32_0, %c18_i32 : i32
    %5 = vector.broadcast %4 : i32 to vector<286x1xi32>
    %6 = arith.remsi %2, %5 : vector<286x1xi32>
    %c0_i32_1 = arith.constant 0 : i32
    %7 = vector.broadcast %c0_i32_1 : i32 to vector<286x1xi32>
    %8 = arith.cmpi ne, %6, %7 : vector<286x1xi32>
    %c0_i32_2 = arith.constant 0 : i32
    %9 = vector.broadcast %c0_i32_2 : i32 to vector<286x1xi32>
    %10 = arith.cmpi slt, %6, %9 : vector<286x1xi32>
    %c0_i32_3 = arith.constant 0 : i32
    %11 = arith.cmpi slt, %4, %c0_i32_3 : i32
    %12 = vector.broadcast %11 : i1 to vector<286x1xi1>
    %13 = vector.broadcast %12 : vector<286x1xi1> to vector<286x1xi1>
    %14 = arith.xori %10, %13 : vector<286x1xi1>
    %15 = arith.andi %14, %8 : vector<286x1xi1>
    %16 = vector.broadcast %4 : i32 to vector<286x1xi32>
    %17 = arith.addi %6, %16 : vector<286x1xi32>
    %18 = arith.select %15, %17, %6 : vector<286x1xi1>, vector<286x1xi32>
    %c0_i32_4 = arith.constant 0 : i32
    %19 = vector.broadcast %c0_i32_4 : i32 to vector<286x1xi32>
    %20 = arith.cmpi ne, %18, %19 : vector<286x1xi32>
    %c17_i32 = arith.constant 17 : i32
    %21 = vector.broadcast %c17_i32 : i32 to vector<286x1xi32>
    %22 = arith.cmpi ne, %18, %21 : vector<286x1xi32>
    %23 = arith.andi %20, %22 : vector<286x1xi1>
    %c0 = arith.constant 0 : index
    %c0_5 = arith.constant 0 : index
    %c0_6 = arith.constant 0 : index
    %24 = vector.load %arg1[%c0, %c0_5, %c0_6] : memref<1x328x128xf32, #tpu.memory_space<vmem>>, vector<1x286x128xf32>
    %25 = vector.shape_cast %24 : vector<1x286x128xf32> to vector<286x128xf32>
    %26 = arith.truncf %25 : vector<286x128xf32> to vector<286x128xbf16>
    %c0_7 = arith.constant 0 : index
    %c1 = arith.constant 1 : index
    %c0_8 = arith.constant 0 : index
    %27 = vector.load %arg1[%c0_7, %c1, %c0_8] : memref<1x328x128xf32, #tpu.memory_space<vmem>>, vector<1x286x128xf32>
    %28 = vector.shape_cast %27 : vector<1x286x128xf32> to vector<286x128xf32>
    %29 = arith.truncf %28 : vector<286x128xf32> to vector<286x128xbf16>
    %c0_9 = arith.constant 0 : index
    %c2 = arith.constant 2 : index
    %c0_10 = arith.constant 0 : index
    %30 = vector.load %arg1[%c0_9, %c2, %c0_10] : memref<1x328x128xf32, #tpu.memory_space<vmem>>, vector<1x286x128xf32>
    %31 = vector.shape_cast %30 : vector<1x286x128xf32> to vector<286x128xf32>
    %32 = arith.truncf %31 : vector<286x128xf32> to vector<286x128xbf16>
    %c0_11 = arith.constant 0 : index
    %c18 = arith.constant 18 : index
    %c0_12 = arith.constant 0 : index
    %33 = vector.load %arg1[%c0_11, %c18, %c0_12] : memref<1x328x128xf32, #tpu.memory_space<vmem>>, vector<1x286x128xf32>
    %34 = vector.shape_cast %33 : vector<1x286x128xf32> to vector<286x128xf32>
    %35 = arith.truncf %34 : vector<286x128xf32> to vector<286x128xbf16>
    %c0_13 = arith.constant 0 : index
    %c19 = arith.constant 19 : index
    %c0_14 = arith.constant 0 : index
    %36 = vector.load %arg1[%c0_13, %c19, %c0_14] : memref<1x328x128xf32, #tpu.memory_space<vmem>>, vector<1x286x128xf32>
    %37 = vector.shape_cast %36 : vector<1x286x128xf32> to vector<286x128xf32>
    %38 = arith.truncf %37 : vector<286x128xf32> to vector<286x128xbf16>
    %c0_15 = arith.constant 0 : index
    %c20 = arith.constant 20 : index
    %c0_16 = arith.constant 0 : index
    %39 = vector.load %arg1[%c0_15, %c20, %c0_16] : memref<1x328x128xf32, #tpu.memory_space<vmem>>, vector<1x286x128xf32>
    %40 = vector.shape_cast %39 : vector<1x286x128xf32> to vector<286x128xf32>
    %41 = arith.truncf %40 : vector<286x128xf32> to vector<286x128xbf16>
    %c0_17 = arith.constant 0 : index
    %c36 = arith.constant 36 : index
    %c0_18 = arith.constant 0 : index
    %42 = vector.load %arg1[%c0_17, %c36, %c0_18] : memref<1x328x128xf32, #tpu.memory_space<vmem>>, vector<1x286x128xf32>
    %43 = vector.shape_cast %42 : vector<1x286x128xf32> to vector<286x128xf32>
    %44 = arith.truncf %43 : vector<286x128xf32> to vector<286x128xbf16>
    %c0_19 = arith.constant 0 : index
    %c37 = arith.constant 37 : index
    %c0_20 = arith.constant 0 : index
    %45 = vector.load %arg1[%c0_19, %c37, %c0_20] : memref<1x328x128xf32, #tpu.memory_space<vmem>>, vector<1x286x128xf32>
    %46 = vector.shape_cast %45 : vector<1x286x128xf32> to vector<286x128xf32>
    %47 = arith.truncf %46 : vector<286x128xf32> to vector<286x128xbf16>
    %c0_21 = arith.constant 0 : index
    %c38 = arith.constant 38 : index
    %c0_22 = arith.constant 0 : index
    %48 = vector.load %arg1[%c0_21, %c38, %c0_22] : memref<1x328x128xf32, #tpu.memory_space<vmem>>, vector<1x286x128xf32>
    %49 = vector.shape_cast %48 : vector<1x286x128xf32> to vector<286x128xf32>
    %50 = arith.truncf %49 : vector<286x128xf32> to vector<286x128xbf16>
    %51 = tpu.concatenate %26, %29, %32, %35, %38, %41, %44, %47, %50 in 1 : vector<286x128xbf16>, vector<286x128xbf16>, vector<286x128xbf16>, vector<286x128xbf16>, vector<286x128xbf16>, vector<286x128xbf16>, vector<286x128xbf16>, vector<286x128xbf16>, vector<286x128xbf16> -> vector<286x1152xbf16>
    %c0_23 = arith.constant 0 : index
    %c0_24 = arith.constant 0 : index
    %52 = vector.load %arg2[%c0_23, %c0_24] : memref<1152x128xbf16, #tpu.memory_space<vmem>>, vector<1152x128xbf16>
    %cst = arith.constant dense<0.000000e+00> : vector<286x128xf32>
    %53 = tpu.matmul %51, %52, %cst {dimension_numbers = #tpu.dot_dimension_numbers<[1], [0], [0], [1], [0, 0, 1, 1], [], []>} : vector<286x1152xbf16>, vector<1152x128xbf16>, vector<286x128xf32> -> vector<286x128xf32>
    %c0_25 = arith.constant 0 : index
    %c0_26 = arith.constant 0 : index
    %54 = vector.load %arg3[%c0_25, %c0_26] : memref<1x128xf32, #tpu.memory_space<vmem>>, vector<1x128xf32>
    %55 = vector.broadcast %54 : vector<1x128xf32> to vector<286x128xf32>
    %56 = arith.addf %53, %55 : vector<286x128xf32>
    %cst_27 = arith.constant 0.000000e+00 : f32
    %57 = vector.broadcast %cst_27 : f32 to vector<286x128xf32>
    %58 = arith.maximumf %56, %57 : vector<286x128xf32>
    %cst_28 = arith.constant 0.000000e+00 : f32
    %59 = vector.shape_cast %23 : vector<286x1xi1> to vector<286x1xi1>
    %60 = vector.broadcast %59 : vector<286x1xi1> to vector<286x128xi1>
    %61 = vector.broadcast %cst_28 : f32 to vector<286x128xf32>
    %62 = arith.select %60, %58, %61 : vector<286x128xi1>, vector<286x128xf32>
    %cst_29 = arith.constant 0.000000e+00 : bf16
    %63 = vector.broadcast %cst_29 : bf16 to vector<19x128xbf16>
    %c0_30 = arith.constant 0 : index
    %c0_31 = arith.constant 0 : index
    %64 = vector.load %arg7[%c0_30, %c0_31] : memref<328x128xbf16, #tpu.memory_space<vmem>>, vector<19x128xbf16>
    tpu.vector_store %arg7[%c0_30, %c0_31], %63 {strides = array<i32>} : memref<328x128xbf16, #tpu.memory_space<vmem>>, vector<19x128xbf16>,
    %cst_32 = arith.constant 0.000000e+00 : bf16
    %65 = vector.broadcast %cst_32 : bf16 to vector<23x128xbf16>
    %c305 = arith.constant 305 : index
    %c0_33 = arith.constant 0 : index
    %66 = vector.load %arg7[%c305, %c0_33] : memref<328x128xbf16, #tpu.memory_space<vmem>>, vector<23x128xbf16>
    tpu.vector_store %arg7[%c305, %c0_33], %65 {strides = array<i32>} : memref<328x128xbf16, #tpu.memory_space<vmem>>, vector<23x128xbf16>,
    %67 = arith.truncf %62 : vector<286x128xf32> to vector<286x128xbf16>
    %c19_34 = arith.constant 19 : index
    %c0_35 = arith.constant 0 : index
    %68 = vector.load %arg7[%c19_34, %c0_35] : memref<328x128xbf16, #tpu.memory_space<vmem>>, vector<286x128xbf16>
    tpu.vector_store %arg7[%c19_34, %c0_35], %67 {strides = array<i32>} : memref<328x128xbf16, #tpu.memory_space<vmem>>, vector<286x128xbf16>,
    %c0_36 = arith.constant 0 : index
    %c0_37 = arith.constant 0 : index
    %69 = vector.load %arg7[%c0_36, %c0_37] : memref<328x128xbf16, #tpu.memory_space<vmem>>, vector<286x128xbf16>
    %c1_38 = arith.constant 1 : index
    %c0_39 = arith.constant 0 : index
    %70 = vector.load %arg7[%c1_38, %c0_39] : memref<328x128xbf16, #tpu.memory_space<vmem>>, vector<286x128xbf16>
    %c2_40 = arith.constant 2 : index
    %c0_41 = arith.constant 0 : index
    %71 = vector.load %arg7[%c2_40, %c0_41] : memref<328x128xbf16, #tpu.memory_space<vmem>>, vector<286x128xbf16>
    %c18_42 = arith.constant 18 : index
    %c0_43 = arith.constant 0 : index
    %72 = vector.load %arg7[%c18_42, %c0_43] : memref<328x128xbf16, #tpu.memory_space<vmem>>, vector<286x128xbf16>
    %c19_44 = arith.constant 19 : index
    %c0_45 = arith.constant 0 : index
    %73 = vector.load %arg7[%c19_44, %c0_45] : memref<328x128xbf16, #tpu.memory_space<vmem>>, vector<286x128xbf16>
    %c20_46 = arith.constant 20 : index
    %c0_47 = arith.constant 0 : index
    %74 = vector.load %arg7[%c20_46, %c0_47] : memref<328x128xbf16, #tpu.memory_space<vmem>>, vector<286x128xbf16>
    %c36_48 = arith.constant 36 : index
    %c0_49 = arith.constant 0 : index
    %75 = vector.load %arg7[%c36_48, %c0_49] : memref<328x128xbf16, #tpu.memory_space<vmem>>, vector<286x128xbf16>
    %c37_50 = arith.constant 37 : index
    %c0_51 = arith.constant 0 : index
    %76 = vector.load %arg7[%c37_50, %c0_51] : memref<328x128xbf16, #tpu.memory_space<vmem>>, vector<286x128xbf16>
    %c38_52 = arith.constant 38 : index
    %c0_53 = arith.constant 0 : index
    %77 = vector.load %arg7[%c38_52, %c0_53] : memref<328x128xbf16, #tpu.memory_space<vmem>>, vector<286x128xbf16>
    %78 = tpu.concatenate %69, %70, %71, %72, %73, %74, %75, %76, %77 in 1 : vector<286x128xbf16>, vector<286x128xbf16>, vector<286x128xbf16>, vector<286x128xbf16>, vector<286x128xbf16>, vector<286x128xbf16>, vector<286x128xbf16>, vector<286x128xbf16>, vector<286x128xbf16> -> vector<286x1152xbf16>
    %c0_54 = arith.constant 0 : index
    %c0_55 = arith.constant 0 : index
    %79 = vector.load %arg4[%c0_54, %c0_55] : memref<1152x128xbf16, #tpu.memory_space<vmem>>, vector<1152x128xbf16>
    %cst_56 = arith.constant dense<0.000000e+00> : vector<286x128xf32>
    %80 = tpu.matmul %78, %79, %cst_56 {dimension_numbers = #tpu.dot_dimension_numbers<[1], [0], [0], [1], [0, 0, 1, 1], [], []>} : vector<286x1152xbf16>, vector<1152x128xbf16>, vector<286x128xf32> -> vector<286x128xf32>
    %c0_57 = arith.constant 0 : index
    %c19_58 = arith.constant 19 : index
    %c0_59 = arith.constant 0 : index
    %81 = vector.load %arg1[%c0_57, %c19_58, %c0_59] : memref<1x328x128xf32, #tpu.memory_space<vmem>>, vector<1x286x128xf32>
    %82 = vector.shape_cast %81 : vector<1x286x128xf32> to vector<286x128xf32>
    %c0_60 = arith.constant 0 : index
    %c0_61 = arith.constant 0 : index
    %83 = vector.load %arg5[%c0_60, %c0_61] : memref<1x128xf32, #tpu.memory_space<vmem>>, vector<1x128xf32>
    %84 = vector.broadcast %83 : vector<1x128xf32> to vector<286x128xf32>
    %85 = arith.addf %80, %84 : vector<286x128xf32>
    %86 = arith.addf %85, %82 : vector<286x128xf32>
    %cst_62 = arith.constant 0.000000e+00 : f32
    %87 = vector.broadcast %cst_62 : f32 to vector<286x128xf32>
    %88 = arith.maximumf %86, %87 : vector<286x128xf32>
    %c0_63 = arith.constant 0 : index
    %c0_64 = arith.constant 0 : index
    %c0_65 = arith.constant 0 : index
    %89 = vector.load %arg6[%c0_63, %c0_64, %c0_65] : memref<1x288x128xf32, #tpu.memory_space<vmem>>, vector<1x286x128xf32>
    %90 = vector.shape_cast %89 : vector<1x286x128xf32> to vector<286x128xf32>
    %91 = vector.shape_cast %88 : vector<286x128xf32> to vector<1x286x128xf32>
    tpu.vector_store %arg6[%c0_63, %c0_64, %c0_65], %91 {strides = array<i32>} : memref<1x288x128xf32, #tpu.memory_space<vmem>>, vector<1x286x128xf32>,
    return
  }
  func.func @transform_0(%arg0: i32) -> (i32, i32, i32) {
    %c0_i32 = arith.constant 0 : i32
    %c0_i32_0 = arith.constant 0 : i32
    %c0_i32_1 = arith.constant 0 : i32
    return %arg0, %c0_i32, %c0_i32_0 : i32, i32, i32
  }
  func.func @transform_1(%arg0: i32) -> (i32, i32) {
    %c0_i32 = arith.constant 0 : i32
    %c0_i32_0 = arith.constant 0 : i32
    %c0_i32_1 = arith.constant 0 : i32
    return %c0_i32, %c0_i32_0 : i32, i32
  }
  func.func @transform_2(%arg0: i32) -> (i32, i32) {
    %c0_i32 = arith.constant 0 : i32
    %c0_i32_0 = arith.constant 0 : i32
    %c0_i32_1 = arith.constant 0 : i32
    return %c0_i32, %c0_i32_0 : i32, i32
  }
  func.func @transform_3(%arg0: i32) -> (i32, i32) {
    %c0_i32 = arith.constant 0 : i32
    %c0_i32_0 = arith.constant 0 : i32
    %c0_i32_1 = arith.constant 0 : i32
    return %c0_i32, %c0_i32_0 : i32, i32
  }
  func.func @transform_4(%arg0: i32) -> (i32, i32) {
    %c0_i32 = arith.constant 0 : i32
    %c0_i32_0 = arith.constant 0 : i32
    %c0_i32_1 = arith.constant 0 : i32
    return %c0_i32, %c0_i32_0 : i32, i32
  }
  func.func @transform_5(%arg0: i32) -> (i32, i32, i32) {
    %c0_i32 = arith.constant 0 : i32
    %c0_i32_0 = arith.constant 0 : i32
    %c0_i32_1 = arith.constant 0 : i32
    return %arg0, %c0_i32, %c0_i32_0 : i32, i32, i32
  }
}

</mosaic_0001>

<llo_original>
// kernel: tpu_custom_call.1
$region0: #{tpu_custom_call.1}
  #allocation0 [shape = 'u32[]', space=smem, size = 0x4, offset = 0x4, fixed_abs, tag = 'smem constant byte address 0x4 - core index']
  #allocation1 [shape = 'u32[144,128]{1,0:T(1,128)}', space=vmem, size = 0x12000, scoped, tag = 'internal scratch']
  #allocation2 [shape = 'bf16[328,128]{1,0:T(8,128)(2,1)}', space=vmem, size = 0x14800, scoped, tag = 'scratch operand']
  %s0 = inlined_call_operand.hbm [shape: f32[2,328,128], index: 0, kind: input, shape index: {}]
  %s1 = inlined_call_operand.hbm [shape: bf16[1152,128], index: 1, kind: input, shape index: {}]
  %s2 = inlined_call_operand.vmem [shape: f32[1,128], index: 2, kind: input, shape index: {}]
  %s3 = inlined_call_operand.hbm [shape: bf16[1152,128], index: 3, kind: input, shape index: {}]
  %s4 = inlined_call_operand.vmem [shape: f32[1,128], index: 4, kind: input, shape index: {}]
  %s5 = inlined_call_operand.hbm [shape: f32[2,288,128], index: 5, kind: output, shape index: {}]
  %s6 = sld [smem:[#allocation0]]
  $region65: #{tpu_custom_call.1} parent=0
    _
  %s8 = ssub.s32 1, %s6
  %s9 = scalar_select 0, %s8, %s6
  $region1: #{tpu_custom_call.1} parent=0
    #allocation3 [shape = 'u8[335872]{0}', space=vmem, size = 0x52000, scoped, tag = 'input window, operand 0']
    #allocation4 [shape = 's32[2]{0}', space=sflag, size = 0x8, scoped, tag = 'scoped memory for tpu_custom_call.1']
    #allocation5 [shape = 's32[2]{0}', space=sflag, size = 0x8, scoped, tag = 'scoped memory for tpu_custom_call.1']
    #allocation6 [shape = 'u8[294912]{0}', space=vmem, size = 0x48000, scoped, tag = 'input window, operand 1, single buffered']
    #allocation7 [shape = 's32[1]{0}', space=sflag, size = 0x4, scoped, tag = 'scoped memory for tpu_custom_call.1']
    #allocation8 [shape = 'u8[294912]{0}', space=vmem, size = 0x48000, scoped, tag = 'input window, operand 3, single buffered']
    #allocation9 [shape = 'u8[294912]{0}', space=vmem, size = 0x48000, scoped, tag = 'output window, operand 0']
    %10 = vsyncpa [#allocation4], 0
    %s11 = scalar_lea.sflag [#allocation4], 1
    %12 = vsyncpa %s11, 0
    %13 = vsyncpa [#allocation7], 0
    %14 = vsyncpa [#allocation5], 0
    %s15 = scalar_lea.sflag [#allocation5], 1
    %16 = vsyncpa %s15, 0
    loop: start=0, step=1, limit=4
    $region2: #{tpu_custom_call.1} parent=1 // loop_pre_header
      _
    $region3: #{tpu_custom_call.1} parent=1 // loop_header
      %s18 = sphi 0, %s22
      %p19 = scmp.ge.s32.totalorder %s18, 4
      %s28 = sphi 0, %s30
      %s31 = sphi 0, %s28
      %s32 = sphi 0, %s31
      %s48 = sphi 0, %s32
      %s52 = sphi 0, %s52
      %s54 = sphi 0, %s52
      %s55 = sphi 0, %s54
      %s69 = sphi 0, %s55
      %s73 = sphi 0, %s73
      %s75 = sphi 0, %s73
      %s76 = sphi 0, %s75
      %s90 = sphi 0, %s76
      %s94 = sphi 0, %s94
      %s96 = sphi 0, %s94
      %s97 = sphi 0, %s96
      %s111 = sphi 0, %s97
      %s115 = sphi 0, %s115
      %s117 = sphi 0, %s115
      %s118 = sphi 0, %s117
      %s132 = sphi 0, %s118
      %s138 = sphi 0, %s140
      %s141 = sphi 0, %s138
      %s142 = sphi 0, %s141
      %s158 = sphi 0, %s142
    $region4: #{tpu_custom_call.1} parent=1 // loop_header_branch
      %21 = sbr.rel (%p19) target = $region8
    $region5: #{tpu_custom_call.1} parent=1 // loop_body
      %s23 = ssub.s32 %s18, 1
      %s24 = ssub.s32 %s18, 2
      %s25 = sadd.s32 %s18, 1
      %s26 = ssub.s32 %s18, %s25
      %p27 = scmp.eq.s32.totalorder %s26, 0
      %s29 = sadd.s32 %s28, 1
      %s30 = scalar_select %p27, %s28, %s29
      %p33 = pneg %p27
      %p34 = scmp.eq.s32.totalorder %s18, 1
      %p35 = por %p33, %p34
      %p36 = scmp.ne.s32.totalorder %s28, %s31
      %p37 = scmp.eq.s32.totalorder %s18, 0
      %p38 = por %p36, %p37
      %p39 = scmp.ne.s32.totalorder %s28, %s31
      %p40 = scmp.eq.s32.totalorder %s23, 1
      %p41 = por %p39, %p40
      %p42 = scmp.ne.s32.totalorder %s31, %s32
      %p43 = scmp.eq.s32.totalorder %s23, 0
      %p44 = por %p42, %p43
      %p45 = scmp.ne.s32.totalorder %s31, %s32
      %p46 = scmp.eq.s32.totalorder %s24, 1
      %p47 = por %p45, %p46
      %p49 = scmp.ne.s32.totalorder %s32, %s48
      %p50 = scmp.eq.s32.totalorder %s24, 0
      %p51 = por %p49, %p50
      %s53 = sadd.s32 %s52, 1
      %p56 = scmp.eq.s32.totalorder %s18, 1
      %p57 = scmp.ne.s32.totalorder %s52, %s54
      %p58 = scmp.eq.s32.totalorder %s18, 0
      %p59 = por %p57, %p58
      %p60 = scmp.ne.s32.totalorder %s52, %s54
      %p61 = scmp.eq.s32.totalorder %s23, 1
      %p62 = por %p60, %p61
      %p63 = scmp.ne.s32.totalorder %s54, %s55
      %p64 = scmp.eq.s32.totalorder %s23, 0
      %p65 = por %p63, %p64
      %p66 = scmp.ne.s32.totalorder %s54, %s55
      %p67 = scmp.eq.s32.totalorder %s24, 1
      %p68 = por %p66, %p67
      %p70 = scmp.ne.s32.totalorder %s55, %s69
      %p71 = scmp.eq.s32.totalorder %s24, 0
      %p72 = por %p70, %p71
      %s74 = sadd.s32 %s73, 1
      %p77 = scmp.eq.s32.totalorder %s18, 1
      %p78 = scmp.ne.s32.totalorder %s73, %s75
      %p79 = scmp.eq.s32.totalorder %s18, 0
      %p80 = por %p78, %p79
      %p81 = scmp.ne.s32.totalorder %s73, %s75
      %p82 = scmp.eq.s32.totalorder %s23, 1
      %p83 = por %p81, %p82
      %p84 = scmp.ne.s32.totalorder %s75, %s76
      %p85 = scmp.eq.s32.totalorder %s23, 0
      %p86 = por %p84, %p85
      %p87 = scmp.ne.s32.totalorder %s75, %s76
      %p88 = scmp.eq.s32.totalorder %s24, 1
      %p89 = por %p87, %p88
      %p91 = scmp.ne.s32.totalorder %s76, %s90
      %p92 = scmp.eq.s32.totalorder %s24, 0
      %p93 = por %p91, %p92
      %s95 = sadd.s32 %s94, 1
      %p98 = scmp.eq.s32.totalorder %s18, 1
      %p99 = scmp.ne.s32.totalorder %s94, %s96
      %p100 = scmp.eq.s32.totalorder %s18, 0
      %p101 = por %p99, %p100
      %p102 = scmp.ne.s32.totalorder %s94, %s96
      %p103 = scmp.eq.s32.totalorder %s23, 1
      %p104 = por %p102, %p103
      %p105 = scmp.ne.s32.totalorder %s96, %s97
      %p106 = scmp.eq.s32.totalorder %s23, 0
      %p107 = por %p105, %p106
      %p108 = scmp.ne.s32.totalorder %s96, %s97
      %p109 = scmp.eq.s32.totalorder %s24, 1
      %p110 = por %p108, %p109
      %p112 = scmp.ne.s32.totalorder %s97, %s111
      %p113 = scmp.eq.s32.totalorder %s24, 0
      %p114 = por %p112, %p113
      %s116 = sadd.s32 %s115, 1
      %p119 = scmp.eq.s32.totalorder %s18, 1
      %p120 = scmp.ne.s32.totalorder %s115, %s117
      %p121 = scmp.eq.s32.totalorder %s18, 0
      %p122 = por %p120, %p121
      %p123 = scmp.ne.s32.totalorder %s115, %s117
      %p124 = scmp.eq.s32.totalorder %s23, 1
      %p125 = por %p123, %p124
      %p126 = scmp.ne.s32.totalorder %s117, %s118
      %p127 = scmp.eq.s32.totalorder %s23, 0
      %p128 = por %p126, %p127
      %p129 = scmp.ne.s32.totalorder %s117, %s118
      %p130 = scmp.eq.s32.totalorder %s24, 1
      %p131 = por %p129, %p130
      %p133 = scmp.ne.s32.totalorder %s118, %s132
      %p134 = scmp.eq.s32.totalorder %s24, 0
      %p135 = por %p133, %p134
      %s136 = ssub.s32 %s18, %s25
      %p137 = scmp.eq.s32.totalorder %s136, 0
      %s139 = sadd.s32 %s138, 1
      %s140 = scalar_select %p137, %s138, %s139
      %p143 = pneg %p137
      %p144 = scmp.eq.s32.totalorder %s18, 1
      %p145 = por %p143, %p144
      %p146 = scmp.ne.s32.totalorder %s138, %s141
      %p147 = scmp.eq.s32.totalorder %s18, 0
      %p148 = por %p146, %p147
      %p149 = scmp.ne.s32.totalorder %s138, %s141
      %p150 = scmp.eq.s32.totalorder %s23, 1
      %p151 = por %p149, %p150
      %p152 = scmp.ne.s32.totalorder %s141, %s142
      %p153 = scmp.eq.s32.totalorder %s23, 0
      %p154 = por %p152, %p153
      %p155 = scmp.ne.s32.totalorder %s141, %s142
      %p156 = scmp.eq.s32.totalorder %s24, 1
      %p157 = por %p155, %p156
      %p159 = scmp.ne.s32.totalorder %s142, %s158
      %p160 = scmp.eq.s32.totalorder %s24, 0
      %p161 = por %p159, %p160
      %p162 = scmp.le.s32.totalorder 1, %s18
      %p163 = scmp.lt.s32.totalorder %s18, 3
      %p164 = pnand %p162, %p163
      %p165 = pneg %p164
      // Predicated region
      $region9: #{tpu_custom_call.1} parent=5 // pred_check
        _
      $region10: #{tpu_custom_call.1} parent=5 // pred_check_branch
        %167 = sbr.rel (%p164) target = $region12
      $region11: #{tpu_custom_call.1} parent=5 // pred_region
        %s168 = ssub.s32 %s18, 1
        // Predicated region
        $region13: #{tpu_custom_call.1} parent=11 // pred_check
          %p169 = pneg %p65
        $region14: #{tpu_custom_call.1} parent=11 // pred_check_branch
          %171 = sbr.rel (%p169) target = $region16
        $region15: #{tpu_custom_call.1} parent=11 // pred_region
          %s173 = ssub.s32 9216, 9216
          %174 = vsyncadd [#allocation7], %s173
          %s175 = sshll.u32 [#allocation6], 4
          %s176 = int_to_ptr.vmem [resolvable:$true] %s175
          %181 = dma.hbm_to_vmem [thread:$0]  %s1, 9216, %s176, [#allocation7], 64, 64, 4
        $region16: #{tpu_custom_call.1} parent=11 // pred_fallthru
          _
        // Predicated region
        $region17: #{tpu_custom_call.1} parent=11 // pred_check
          %p182 = pneg %p86
        $region18: #{tpu_custom_call.1} parent=11 // pred_check_branch
          %184 = sbr.rel (%p182) target = $region20
        $region19: #{tpu_custom_call.1} parent=11 // pred_region
          _
        $region20: #{tpu_custom_call.1} parent=11 // pred_fallthru
          _
        // Predicated region
        $region21: #{tpu_custom_call.1} parent=11 // pred_check
          %p185 = pneg %p107
        $region22: #{tpu_custom_call.1} parent=11 // pred_check_branch
          %187 = sbr.rel (%p185) target = $region24
        $region23: #{tpu_custom_call.1} parent=11 // pred_region
          %s189 = ssub.s32 9216, 9216
          %190 = vsyncadd [#allocation7], %s189
          %s191 = sshll.u32 [#allocation8], 4
          %s192 = int_to_ptr.vmem [resolvable:$true] %s191
          %197 = dma.hbm_to_vmem [thread:$0]  %s3, 9216, %s192, [#allocation7], 64, 64, 4
        $region24: #{tpu_custom_call.1} parent=11 // pred_fallthru
          _
        // Predicated region
        $region25: #{tpu_custom_call.1} parent=11 // pred_check
          %p198 = pneg %p128
        $region26: #{tpu_custom_call.1} parent=11 // pred_check_branch
          %200 = sbr.rel (%p198) target = $region28
        $region27: #{tpu_custom_call.1} parent=11 // pred_region
          _
        $region28: #{tpu_custom_call.1} parent=11 // pred_fallthru
          _
      $region12: #{tpu_custom_call.1} parent=5 // pred_fallthru
        _
      %p201 = scmp.lt.s32.totalorder %s18, 2
      // Predicated region
      $region29: #{tpu_custom_call.1} parent=5 // pred_check
        %p202 = pneg %p201
      $region30: #{tpu_custom_call.1} parent=5 // pred_check_branch
        %204 = sbr.rel (%p202) target = $region32
      $region31: #{tpu_custom_call.1} parent=5 // pred_region
        // Predicated region
        $region33: #{tpu_custom_call.1} parent=31 // pred_check
          %p205 = pneg %p38
        $region34: #{tpu_custom_call.1} parent=31 // pred_check_branch
          %207 = sbr.rel (%p205) target = $region36
        $region35: #{tpu_custom_call.1} parent=31 // pred_region
          %s208 = sand.u32 %s28, 1
          %s209 = scalar_lea.sflag [#allocation4], %s208
          %s210 = sand.u32 %s28, 1
          %s211 = smul.addr %s210, 328
          %s212 = scalar_lea.vmem [#allocation3], %s211
          %s214 = ssub.s32 5248, 5248
          %215 = vsyncadd %s209, %s214
          %s216 = smul.addr %s18, 41
          %s217 = smul.addr %s216, 128
          %s218 = scalar_lea.hbm %s0, %s217
          %s219 = sshll.u32 %s212, 4
          %s220 = int_to_ptr.vmem [resolvable:$true] %s219
          %225 = dma.hbm_to_vmem [thread:$0]  %s218, 5248, %s220, %s209, 128, 128, 8
        $region36: #{tpu_custom_call.1} parent=31 // pred_fallthru
          _
      $region32: #{tpu_custom_call.1} parent=5 // pred_fallthru
        _
      %p226 = scmp.le.s32.totalorder 1, %s18
      %p227 = scmp.lt.s32.totalorder %s18, 3
      %p228 = pnand %p226, %p227
      %p229 = pneg %p228
      // Predicated region
      $region37: #{tpu_custom_call.1} parent=5 // pred_check
        _
      $region38: #{tpu_custom_call.1} parent=5 // pred_check_branch
        %231 = sbr.rel (%p228) target = $region40
      $region39: #{tpu_custom_call.1} parent=5 // pred_region
        %s232 = ssub.s32 %s18, 1
        %s233 = sand.u32 %s31, 1
        %s234 = scalar_lea.sflag [#allocation4], %s233
        %s235 = sand.u32 %s31, 1
        %s236 = smul.addr %s235, 328
        %s237 = scalar_lea.vmem [#allocation3], %s236
        // Predicated region
        $region41: #{tpu_custom_call.1} parent=39 // pred_check
          %p238 = pneg %p44
        $region42: #{tpu_custom_call.1} parent=39 // pred_check_branch
          %240 = sbr.rel (%p238) target = $region44
        $region43: #{tpu_custom_call.1} parent=39 // pred_region
          %241 = dma.done %s234, 5248
        $region44: #{tpu_custom_call.1} parent=39 // pred_fallthru
          _
        // Predicated region
        $region45: #{tpu_custom_call.1} parent=39 // pred_check
          %p242 = pneg %p65
        $region46: #{tpu_custom_call.1} parent=39 // pred_check_branch
          %244 = sbr.rel (%p242) target = $region48
        $region47: #{tpu_custom_call.1} parent=39 // pred_region
          %245 = dma.done [#allocation7], 9216
        $region48: #{tpu_custom_call.1} parent=39 // pred_fallthru
          _
        // Predicated region
        $region49: #{tpu_custom_call.1} parent=39 // pred_check
          %p246 = pneg %p107
        $region50: #{tpu_custom_call.1} parent=39 // pred_check_branch
          %248 = sbr.rel (%p246) target = $region52
        $region51: #{tpu_custom_call.1} parent=39 // pred_region
          %249 = dma.done [#allocation7], 9216
        $region52: #{tpu_custom_call.1} parent=39 // pred_fallthru
          _
        %s250 = sand.u32 %s31, 1
        %s251 = scalar_lea.sflag [#allocation4], %s250
        %s252 = sand.u32 %s31, 1
        %s253 = smul.addr %s252, 328
        %s254 = scalar_lea.vmem [#allocation3], %s253
        %p255 = pneg %p44
        %p256 = pneg %p41
        %p257 = pneg %p65
        %p258 = pneg %p62
        %p259 = pneg %p86
        %p260 = pneg %p83
        %p261 = pneg %p107
        %p262 = pneg %p104
        %p263 = pneg %p128
        %p264 = pneg %p125
        %p265 = pneg %p154
        %p266 = pneg %p151
        %s267 = sand.u32 %s141, 1
        %s268 = scalar_lea.sflag [#allocation5], %s267
        %s269 = sand.u32 %s141, 1
        %s270 = smul.addr %s269, 288
        %s271 = scalar_lea.vmem [#allocation9], %s270
        %v273 = vlaneseq
        %v274 = vshrl.u32 %v273, 7
        %v275 = vadd.s32 %v274, 8
        %v276 = vadd.s32 %v274, 16
        %v277 = vadd.s32 %v274, 24
        %v278 = vadd.s32 %v274, 32
        %v279 = vadd.s32 %v274, 40
        %v280 = vadd.s32 %v274, 48
        %v281 = vadd.s32 %v274, 56
        %v282 = vadd.s32 %v274, 64
        %v283 = vadd.s32 %v274, 72
        %v284 = vadd.s32 %v274, 80
        %v285 = vadd.s32 %v274, 88
        %v286 = vadd.s32 %v274, 96
        %v287 = vadd.s32 %v274, 104
        %v288 = vadd.s32 %v274, 112
        %v289 = vadd.s32 %v274, 120
        %v290 = vadd.s32 %v274, 128
        %v291 = vadd.s32 %v274, 136
        %v292 = vadd.s32 %v274, 144
        %v293 = vadd.s32 %v274, 152
        %v294 = vadd.s32 %v274, 160
        %v295 = vadd.s32 %v274, 168
        %v296 = vadd.s32 %v274, 176
        %v297 = vadd.s32 %v274, 184
        %v298 = vadd.s32 %v274, 192
        %v299 = vadd.s32 %v274, 200
        %v300 = vadd.s32 %v274, 208
        %v301 = vadd.s32 %v274, 216
        %v302 = vadd.s32 %v274, 224
        %v303 = vadd.s32 %v274, 232
        %v304 = vadd.s32 %v274, 240
        %v305 = vadd.s32 %v274, 248
        %v306 = vadd.s32 %v274, 256
        %v307 = vadd.s32 %v274, 264
        %v308 = vadd.s32 %v274, 272
        %v309 = vadd.s32 %v274, 280
        %v310 = vadd.s32 %v274, 1
        %v311 = vadd.s32 %v275, 1
        %v312 = vadd.s32 %v276, 1
        %v313 = vadd.s32 %v277, 1
        %v314 = vadd.s32 %v278, 1
        %v315 = vadd.s32 %v279, 1
        %v316 = vadd.s32 %v280, 1
        %v317 = vadd.s32 %v281, 1
        %v318 = vadd.s32 %v282, 1
        %v319 = vadd.s32 %v283, 1
        %v320 = vadd.s32 %v284, 1
        %v321 = vadd.s32 %v285, 1
        %v322 = vadd.s32 %v286, 1
        %v323 = vadd.s32 %v287, 1
        %v324 = vadd.s32 %v288, 1
        %v325 = vadd.s32 %v289, 1
        %v326 = vadd.s32 %v290, 1
        %v327 = vadd.s32 %v291, 1
        %v328 = vadd.s32 %v292, 1
        %v329 = vadd.s32 %v293, 1
        %v330 = vadd.s32 %v294, 1
        %v331 = vadd.s32 %v295, 1
        %v332 = vadd.s32 %v296, 1
        %v333 = vadd.s32 %v297, 1
        %v334 = vadd.s32 %v298, 1
        %v335 = vadd.s32 %v299, 1
        %v336 = vadd.s32 %v300, 1
        %v337 = vadd.s32 %v301, 1
        %v338 = vadd.s32 %v302, 1
        %v339 = vadd.s32 %v303, 1
        %v340 = vadd.s32 %v304, 1
        %v341 = vadd.s32 %v305, 1
        %v342 = vadd.s32 %v306, 1
        %v343 = vadd.s32 %v307, 1
        %v344 = vadd.s32 %v308, 1
        %v345 = vadd.s32 %v309, 1
        %vm346 = vcmp.lt.s32.totalorder %v310, 0
        %v347 = vsub.s32 0, %v310
        %v348 = vsel %vm346, %v347, %v310
        %v349 = vmul.u32.u64.compose %v348, 3817748708
        %v350 = vextract.low.u32 %v349
        %v351 = vextract.high.u32 %v349
        %v352 = vshrl.u32 %v351, 4
        %v353 = vmul.u32 %v352, 18
        %v354 = vsub.s32 %v348, %v353
        %v355 = vsub.s32 0, %v354
        %v356 = vsel %vm346, %v355, %v354
        %vm357 = vcmp.lt.s32.totalorder %v311, 0
        %v358 = vsub.s32 0, %v311
        %v359 = vsel %vm357, %v358, %v311
        %v360 = vmul.u32.u64.compose %v359, 3817748708
        %v361 = vextract.low.u32 %v360
        %v362 = vextract.high.u32 %v360
        %v363 = vshrl.u32 %v362, 4
        %v364 = vmul.u32 %v363, 18
        %v365 = vsub.s32 %v359, %v364
        %v366 = vsub.s32 0, %v365
        %v367 = vsel %vm357, %v366, %v365
        %vm368 = vcmp.lt.s32.totalorder %v312, 0
        %v369 = vsub.s32 0, %v312
        %v370 = vsel %vm368, %v369, %v312
        %v371 = vmul.u32.u64.compose %v370, 3817748708
        %v372 = vextract.low.u32 %v371
        %v373 = vextract.high.u32 %v371
        %v374 = vshrl.u32 %v373, 4
        %v375 = vmul.u32 %v374, 18
        %v376 = vsub.s32 %v370, %v375
        %v377 = vsub.s32 0, %v376
        %v378 = vsel %vm368, %v377, %v376
        %vm379 = vcmp.lt.s32.totalorder %v313, 0
        %v380 = vsub.s32 0, %v313
        %v381 = vsel %vm379, %v380, %v313
        %v382 = vmul.u32.u64.compose %v381, 3817748708
        %v383 = vextract.low.u32 %v382
        %v384 = vextract.high.u32 %v382
        %v385 = vshrl.u32 %v384, 4
        %v386 = vmul.u32 %v385, 18
        %v387 = vsub.s32 %v381, %v386
        %v388 = vsub.s32 0, %v387
        %v389 = vsel %vm379, %v388, %v387
        %vm390 = vcmp.lt.s32.totalorder %v314, 0
        %v391 = vsub.s32 0, %v314
        %v392 = vsel %vm390, %v391, %v314
        %v393 = vmul.u32.u64.compose %v392, 3817748708
        %v394 = vextract.low.u32 %v393
        %v395 = vextract.high.u32 %v393
        %v396 = vshrl.u32 %v395, 4
        %v397 = vmul.u32 %v396, 18
        %v398 = vsub.s32 %v392, %v397
        %v399 = vsub.s32 0, %v398
        %v400 = vsel %vm390, %v399, %v398
        %vm401 = vcmp.lt.s32.totalorder %v315, 0
        %v402 = vsub.s32 0, %v315
        %v403 = vsel %vm401, %v402, %v315
        %v404 = vmul.u32.u64.compose %v403, 3817748708
        %v405 = vextract.low.u32 %v404
        %v406 = vextract.high.u32 %v404
        %v407 = vshrl.u32 %v406, 4
        %v408 = vmul.u32 %v407, 18
        %v409 = vsub.s32 %v403, %v408
        %v410 = vsub.s32 0, %v409
        %v411 = vsel %vm401, %v410, %v409
        %vm412 = vcmp.lt.s32.totalorder %v316, 0
        %v413 = vsub.s32 0, %v316
        %v414 = vsel %vm412, %v413, %v316
        %v415 = vmul.u32.u64.compose %v414, 3817748708
        %v416 = vextract.low.u32 %v415
        %v417 = vextract.high.u32 %v415
        %v418 = vshrl.u32 %v417, 4
        %v419 = vmul.u32 %v418, 18
        %v420 = vsub.s32 %v414, %v419
        %v421 = vsub.s32 0, %v420
        %v422 = vsel %vm412, %v421, %v420
        %vm423 = vcmp.lt.s32.totalorder %v317, 0
        %v424 = vsub.s32 0, %v317
        %v425 = vsel %vm423, %v424, %v317
        %v426 = vmul.u32.u64.compose %v425, 3817748708
        %v427 = vextract.low.u32 %v426
        %v428 = vextract.high.u32 %v426
        %v429 = vshrl.u32 %v428, 4
        %v430 = vmul.u32 %v429, 18
        %v431 = vsub.s32 %v425, %v430
        %v432 = vsub.s32 0, %v431
        %v433 = vsel %vm423, %v432, %v431
        %vm434 = vcmp.lt.s32.totalorder %v318, 0
        %v435 = vsub.s32 0, %v318
        %v436 = vsel %vm434, %v435, %v318
        %v437 = vmul.u32.u64.compose %v436, 3817748708
        %v438 = vextract.low.u32 %v437
        %v439 = vextract.high.u32 %v437
        %v440 = vshrl.u32 %v439, 4
        %v441 = vmul.u32 %v440, 18
        %v442 = vsub.s32 %v436, %v441
        %v443 = vsub.s32 0, %v442
        %v444 = vsel %vm434, %v443, %v442
        %vm445 = vcmp.lt.s32.totalorder %v319, 0
        %v446 = vsub.s32 0, %v319
        %v447 = vsel %vm445, %v446, %v319
        %v448 = vmul.u32.u64.compose %v447, 3817748708
        %v449 = vextract.low.u32 %v448
        %v450 = vextract.high.u32 %v448
        %v451 = vshrl.u32 %v450, 4
        %v452 = vmul.u32 %v451, 18
        %v453 = vsub.s32 %v447, %v452
        %v454 = vsub.s32 0, %v453
        %v455 = vsel %vm445, %v454, %v453
        %vm456 = vcmp.lt.s32.totalorder %v320, 0
        %v457 = vsub.s32 0, %v320
        %v458 = vsel %vm456, %v457, %v320
        %v459 = vmul.u32.u64.compose %v458, 3817748708
        %v460 = vextract.low.u32 %v459
        %v461 = vextract.high.u32 %v459
        %v462 = vshrl.u32 %v461, 4
        %v463 = vmul.u32 %v462, 18
        %v464 = vsub.s32 %v458, %v463
        %v465 = vsub.s32 0, %v464
        %v466 = vsel %vm456, %v465, %v464
        %vm467 = vcmp.lt.s32.totalorder %v321, 0
        %v468 = vsub.s32 0, %v321
        %v469 = vsel %vm467, %v468, %v321
        %v470 = vmul.u32.u64.compose %v469, 3817748708
        %v471 = vextract.low.u32 %v470
        %v472 = vextract.high.u32 %v470
        %v473 = vshrl.u32 %v472, 4
        %v474 = vmul.u32 %v473, 18
        %v475 = vsub.s32 %v469, %v474
        %v476 = vsub.s32 0, %v475
        %v477 = vsel %vm467, %v476, %v475
        %vm478 = vcmp.lt.s32.totalorder %v322, 0
        %v479 = vsub.s32 0, %v322
        %v480 = vsel %vm478, %v479, %v322
        %v481 = vmul.u32.u64.compose %v480, 3817748708
        %v482 = vextract.low.u32 %v481
        %v483 = vextract.high.u32 %v481
        %v484 = vshrl.u32 %v483, 4
        %v485 = vmul.u32 %v484, 18
        %v486 = vsub.s32 %v480, %v485
        %v487 = vsub.s32 0, %v486
        %v488 = vsel %vm478, %v487, %v486
        %vm489 = vcmp.lt.s32.totalorder %v323, 0
        %v490 = vsub.s32 0, %v323
        %v491 = vsel %vm489, %v490, %v323
        %v492 = vmul.u32.u64.compose %v491, 3817748708
        %v493 = vextract.low.u32 %v492
        %v494 = vextract.high.u32 %v492
        %v495 = vshrl.u32 %v494, 4
        %v496 = vmul.u32 %v495, 18
        %v497 = vsub.s32 %v491, %v496
        %v498 = vsub.s32 0, %v497
        %v499 = vsel %vm489, %v498, %v497
        %vm500 = vcmp.lt.s32.totalorder %v324, 0
        %v501 = vsub.s32 0, %v324
        %v502 = vsel %vm500, %v501, %v324
        %v503 = vmul.u32.u64.compose %v502, 3817748708
        %v504 = vextract.low.u32 %v503
        %v505 = vextract.high.u32 %v503
        %v506 = vshrl.u32 %v505, 4
        %v507 = vmul.u32 %v506, 18
        %v508 = vsub.s32 %v502, %v507
        %v509 = vsub.s32 0, %v508
        %v510 = vsel %vm500, %v509, %v508
        %vm511 = vcmp.lt.s32.totalorder %v325, 0
        %v512 = vsub.s32 0, %v325
        %v513 = vsel %vm511, %v512, %v325
        %v514 = vmul.u32.u64.compose %v513, 3817748708
        %v515 = vextract.low.u32 %v514
        %v516 = vextract.high.u32 %v514
        %v517 = vshrl.u32 %v516, 4
        %v518 = vmul.u32 %v517, 18
        %v519 = vsub.s32 %v513, %v518
        %v520 = vsub.s32 0, %v519
        %v521 = vsel %vm511, %v520, %v519
        %vm522 = vcmp.lt.s32.totalorder %v326, 0
        %v523 = vsub.s32 0, %v326
        %v524 = vsel %vm522, %v523, %v326
        %v525 = vmul.u32.u64.compose %v524, 3817748708
        %v526 = vextract.low.u32 %v525
        %v527 = vextract.high.u32 %v525
        %v528 = vshrl.u32 %v527, 4
        %v529 = vmul.u32 %v528, 18
        %v530 = vsub.s32 %v524, %v529
        %v531 = vsub.s32 0, %v530
        %v532 = vsel %vm522, %v531, %v530
        %vm533 = vcmp.lt.s32.totalorder %v327, 0
        %v534 = vsub.s32 0, %v327
        %v535 = vsel %vm533, %v534, %v327
        %v536 = vmul.u32.u64.compose %v535, 3817748708
        %v537 = vextract.low.u32 %v536
        %v538 = vextract.high.u32 %v536
        %v539 = vshrl.u32 %v538, 4
        %v540 = vmul.u32 %v539, 18
        %v541 = vsub.s32 %v535, %v540
        %v542 = vsub.s32 0, %v541
        %v543 = vsel %vm533, %v542, %v541
        %vm544 = vcmp.lt.s32.totalorder %v328, 0
        %v545 = vsub.s32 0, %v328
        %v546 = vsel %vm544, %v545, %v328
        %v547 = vmul.u32.u64.compose %v546, 3817748708
        %v548 = vextract.low.u32 %v547
        %v549 = vextract.high.u32 %v547
        %v550 = vshrl.u32 %v549, 4
        %v551 = vmul.u32 %v550, 18
        %v552 = vsub.s32 %v546, %v551
        %v553 = vsub.s32 0, %v552
        %v554 = vsel %vm544, %v553, %v552
        %vm555 = vcmp.lt.s32.totalorder %v329, 0
        %v556 = vsub.s32 0, %v329
        %v557 = vsel %vm555, %v556, %v329
        %v558 = vmul.u32.u64.compose %v557, 3817748708
        %v559 = vextract.low.u32 %v558
        %v560 = vextract.high.u32 %v558
        %v561 = vshrl.u32 %v560, 4
        %v562 = vmul.u32 %v561, 18
        %v563 = vsub.s32 %v557, %v562
        %v564 = vsub.s32 0, %v563
        %v565 = vsel %vm555, %v564, %v563
        %vm566 = vcmp.lt.s32.totalorder %v330, 0
        %v567 = vsub.s32 0, %v330
        %v568 = vsel %vm566, %v567, %v330
        %v569 = vmul.u32.u64.compose %v568, 3817748708
        %v570 = vextract.low.u32 %v569
        %v571 = vextract.high.u32 %v569
        %v572 = vshrl.u32 %v571, 4
        %v573 = vmul.u32 %v572, 18
        %v574 = vsub.s32 %v568, %v573
        %v575 = vsub.s32 0, %v574
        %v576 = vsel %vm566, %v575, %v574
        %vm577 = vcmp.lt.s32.totalorder %v331, 0
        %v578 = vsub.s32 0, %v331
        %v579 = vsel %vm577, %v578, %v331
        %v580 = vmul.u32.u64.compose %v579, 3817748708
        %v581 = vextract.low.u32 %v580
        %v582 = vextract.high.u32 %v580
        %v583 = vshrl.u32 %v582, 4
        %v584 = vmul.u32 %v583, 18
        %v585 = vsub.s32 %v579, %v584
        %v586 = vsub.s32 0, %v585
        %v587 = vsel %vm577, %v586, %v585
        %vm588 = vcmp.lt.s32.totalorder %v332, 0
        %v589 = vsub.s32 0, %v332
        %v590 = vsel %vm588, %v589, %v332
        %v591 = vmul.u32.u64.compose %v590, 3817748708
        %v592 = vextract.low.u32 %v591
        %v593 = vextract.high.u32 %v591
        %v594 = vshrl.u32 %v593, 4
        %v595 = vmul.u32 %v594, 18
        %v596 = vsub.s32 %v590, %v595
        %v597 = vsub.s32 0, %v596
        %v598 = vsel %vm588, %v597, %v596
        %vm599 = vcmp.lt.s32.totalorder %v333, 0
        %v600 = vsub.s32 0, %v333
        %v601 = vsel %vm599, %v600, %v333
        %v602 = vmul.u32.u64.compose %v601, 3817748708
        %v603 = vextract.low.u32 %v602
        %v604 = vextract.high.u32 %v602
        %v605 = vshrl.u32 %v604, 4
        %v606 = vmul.u32 %v605, 18
        %v607 = vsub.s32 %v601, %v606
        %v608 = vsub.s32 0, %v607
        %v609 = vsel %vm599, %v608, %v607
        %vm610 = vcmp.lt.s32.totalorder %v334, 0
        %v611 = vsub.s32 0, %v334
        %v612 = vsel %vm610, %v611, %v334
        %v613 = vmul.u32.u64.compose %v612, 3817748708
        %v614 = vextract.low.u32 %v613
        %v615 = vextract.high.u32 %v613
        %v616 = vshrl.u32 %v615, 4
        %v617 = vmul.u32 %v616, 18
        %v618 = vsub.s32 %v612, %v617
        %v619 = vsub.s32 0, %v618
        %v620 = vsel %vm610, %v619, %v618
        %vm621 = vcmp.lt.s32.totalorder %v335, 0
        %v622 = vsub.s32 0, %v335
        %v623 = vsel %vm621, %v622, %v335
        %v624 = vmul.u32.u64.compose %v623, 3817748708
        %v625 = vextract.low.u32 %v624
        %v626 = vextract.high.u32 %v624
        %v627 = vshrl.u32 %v626, 4
        %v628 = vmul.u32 %v627, 18
        %v629 = vsub.s32 %v623, %v628
        %v630 = vsub.s32 0, %v629
        %v631 = vsel %vm621, %v630, %v629
        %vm632 = vcmp.lt.s32.totalorder %v336, 0
        %v633 = vsub.s32 0, %v336
        %v634 = vsel %vm632, %v633, %v336
        %v635 = vmul.u32.u64.compose %v634, 3817748708
        %v636 = vextract.low.u32 %v635
        %v637 = vextract.high.u32 %v635
        %v638 = vshrl.u32 %v637, 4
        %v639 = vmul.u32 %v638, 18
        %v640 = vsub.s32 %v634, %v639
        %v641 = vsub.s32 0, %v640
        %v642 = vsel %vm632, %v641, %v640
        %vm643 = vcmp.lt.s32.totalorder %v337, 0
        %v644 = vsub.s32 0, %v337
        %v645 = vsel %vm643, %v644, %v337
        %v646 = vmul.u32.u64.compose %v645, 3817748708
        %v647 = vextract.low.u32 %v646
        %v648 = vextract.high.u32 %v646
        %v649 = vshrl.u32 %v648, 4
        %v650 = vmul.u32 %v649, 18
        %v651 = vsub.s32 %v645, %v650
        %v652 = vsub.s32 0, %v651
        %v653 = vsel %vm643, %v652, %v651
        %vm654 = vcmp.lt.s32.totalorder %v338, 0
        %v655 = vsub.s32 0, %v338
        %v656 = vsel %vm654, %v655, %v338
        %v657 = vmul.u32.u64.compose %v656, 3817748708
        %v658 = vextract.low.u32 %v657
        %v659 = vextract.high.u32 %v657
        %v660 = vshrl.u32 %v659, 4
        %v661 = vmul.u32 %v660, 18
        %v662 = vsub.s32 %v656, %v661
        %v663 = vsub.s32 0, %v662
        %v664 = vsel %vm654, %v663, %v662
        %vm665 = vcmp.lt.s32.totalorder %v339, 0
        %v666 = vsub.s32 0, %v339
        %v667 = vsel %vm665, %v666, %v339
        %v668 = vmul.u32.u64.compose %v667, 3817748708
        %v669 = vextract.low.u32 %v668
        %v670 = vextract.high.u32 %v668
        %v671 = vshrl.u32 %v670, 4
        %v672 = vmul.u32 %v671, 18
        %v673 = vsub.s32 %v667, %v672
        %v674 = vsub.s32 0, %v673
        %v675 = vsel %vm665, %v674, %v673
        %vm676 = vcmp.lt.s32.totalorder %v340, 0
        %v677 = vsub.s32 0, %v340
        %v678 = vsel %vm676, %v677, %v340
        %v679 = vmul.u32.u64.compose %v678, 3817748708
        %v680 = vextract.low.u32 %v679
        %v681 = vextract.high.u32 %v679
        %v682 = vshrl.u32 %v681, 4
        %v683 = vmul.u32 %v682, 18
        %v684 = vsub.s32 %v678, %v683
        %v685 = vsub.s32 0, %v684
        %v686 = vsel %vm676, %v685, %v684
        %vm687 = vcmp.lt.s32.totalorder %v341, 0
        %v688 = vsub.s32 0, %v341
        %v689 = vsel %vm687, %v688, %v341
        %v690 = vmul.u32.u64.compose %v689, 3817748708
        %v691 = vextract.low.u32 %v690
        %v692 = vextract.high.u32 %v690
        %v693 = vshrl.u32 %v692, 4
        %v694 = vmul.u32 %v693, 18
        %v695 = vsub.s32 %v689, %v694
        %v696 = vsub.s32 0, %v695
        %v697 = vsel %vm687, %v696, %v695
        %vm698 = vcmp.lt.s32.totalorder %v342, 0
        %v699 = vsub.s32 0, %v342
        %v700 = vsel %vm698, %v699, %v342
        %v701 = vmul.u32.u64.compose %v700, 3817748708
        %v702 = vextract.low.u32 %v701
        %v703 = vextract.high.u32 %v701
        %v704 = vshrl.u32 %v703, 4
        %v705 = vmul.u32 %v704, 18
        %v706 = vsub.s32 %v700, %v705
        %v707 = vsub.s32 0, %v706
        %v708 = vsel %vm698, %v707, %v706
        %vm709 = vcmp.lt.s32.totalorder %v343, 0
        %v710 = vsub.s32 0, %v343
        %v711 = vsel %vm709, %v710, %v343
        %v712 = vmul.u32.u64.compose %v711, 3817748708
        %v713 = vextract.low.u32 %v712
        %v714 = vextract.high.u32 %v712
        %v715 = vshrl.u32 %v714, 4
        %v716 = vmul.u32 %v715, 18
        %v717 = vsub.s32 %v711, %v716
        %v718 = vsub.s32 0, %v717
        %v719 = vsel %vm709, %v718, %v717
        %vm720 = vcmp.lt.s32.totalorder %v344, 0
        %v721 = vsub.s32 0, %v344
        %v722 = vsel %vm720, %v721, %v344
        %v723 = vmul.u32.u64.compose %v722, 3817748708
        %v724 = vextract.low.u32 %v723
        %v725 = vextract.high.u32 %v723
        %v726 = vshrl.u32 %v725, 4
        %v727 = vmul.u32 %v726, 18
        %v728 = vsub.s32 %v722, %v727
        %v729 = vsub.s32 0, %v728
        %v730 = vsel %vm720, %v729, %v728
        %vm731 = vcmp.lt.s32.totalorder %v345, 0
        %v732 = vsub.s32 0, %v345
        %v733 = vsel %vm731, %v732, %v345
        %v734 = vmul.u32.u64.compose %v733, 3817748708
        %v735 = vextract.low.u32 %v734
        %v736 = vextract.high.u32 %v734
        %v737 = vshrl.u32 %v736, 4
        %v738 = vmul.u32 %v737, 18
        %v739 = vsub.s32 %v733, %v738
        %v740 = vsub.s32 0, %v739
        %v741 = vsel %vm731, %v740, %v739
        %vm742 = vcmp.ne.s32.totalorder %v356, 0
        %vm743 = vcmp.ne.s32.totalorder %v367, 0
        %vm744 = vcmp.ne.s32.totalorder %v378, 0
        %vm745 = vcmp.ne.s32.totalorder %v389, 0
        %vm746 = vcmp.ne.s32.totalorder %v400, 0
        %vm747 = vcmp.ne.s32.totalorder %v411, 0
        %vm748 = vcmp.ne.s32.totalorder %v422, 0
        %vm749 = vcmp.ne.s32.totalorder %v433, 0
        %vm750 = vcmp.ne.s32.totalorder %v444, 0
        %vm751 = vcmp.ne.s32.totalorder %v455, 0
        %vm752 = vcmp.ne.s32.totalorder %v466, 0
        %vm753 = vcmp.ne.s32.totalorder %v477, 0
        %vm754 = vcmp.ne.s32.totalorder %v488, 0
        %vm755 = vcmp.ne.s32.totalorder %v499, 0
        %vm756 = vcmp.ne.s32.totalorder %v510, 0
        %vm757 = vcmp.ne.s32.totalorder %v521, 0
        %vm758 = vcmp.ne.s32.totalorder %v532, 0
        %vm759 = vcmp.ne.s32.totalorder %v543, 0
        %vm760 = vcmp.ne.s32.totalorder %v554, 0
        %vm761 = vcmp.ne.s32.totalorder %v565, 0
        %vm762 = vcmp.ne.s32.totalorder %v576, 0
        %vm763 = vcmp.ne.s32.totalorder %v587, 0
        %vm764 = vcmp.ne.s32.totalorder %v598, 0
        %vm765 = vcmp.ne.s32.totalorder %v609, 0
        %vm766 = vcmp.ne.s32.totalorder %v620, 0
        %vm767 = vcmp.ne.s32.totalorder %v631, 0
        %vm768 = vcmp.ne.s32.totalorder %v642, 0
        %vm769 = vcmp.ne.s32.totalorder %v653, 0
        %vm770 = vcmp.ne.s32.totalorder %v664, 0
        %vm771 = vcmp.ne.s32.totalorder %v675, 0
        %vm772 = vcmp.ne.s32.totalorder %v686, 0
        %vm773 = vcmp.ne.s32.totalorder %v697, 0
        %vm774 = vcmp.ne.s32.totalorder %v708, 0
        %vm775 = vcmp.ne.s32.totalorder %v719, 0
        %vm776 = vcmp.ne.s32.totalorder %v730, 0
        %vm777 = vcmp.ne.s32.totalorder %v741, 0
        %vm778 = vcmp.lt.s32.totalorder %v356, 0
        %vm779 = vcmp.lt.s32.totalorder %v367, 0
        %vm780 = vcmp.lt.s32.totalorder %v378, 0
        %vm781 = vcmp.lt.s32.totalorder %v389, 0
        %vm782 = vcmp.lt.s32.totalorder %v400, 0
        %vm783 = vcmp.lt.s32.totalorder %v411, 0
        %vm784 = vcmp.lt.s32.totalorder %v422, 0
        %vm785 = vcmp.lt.s32.totalorder %v433, 0
        %vm786 = vcmp.lt.s32.totalorder %v444, 0
        %vm787 = vcmp.lt.s32.totalorder %v455, 0
        %vm788 = vcmp.lt.s32.totalorder %v466, 0
        %vm789 = vcmp.lt.s32.totalorder %v477, 0
        %vm790 = vcmp.lt.s32.totalorder %v488, 0
        %vm791 = vcmp.lt.s32.totalorder %v499, 0
        %vm792 = vcmp.lt.s32.totalorder %v510, 0
        %vm793 = vcmp.lt.s32.totalorder %v521, 0
        %vm794 = vcmp.lt.s32.totalorder %v532, 0
        %vm795 = vcmp.lt.s32.totalorder %v543, 0
        %vm796 = vcmp.lt.s32.totalorder %v554, 0
        %vm797 = vcmp.lt.s32.totalorder %v565, 0
        %vm798 = vcmp.lt.s32.totalorder %v576, 0
        %vm799 = vcmp.lt.s32.totalorder %v587, 0
        %vm800 = vcmp.lt.s32.totalorder %v598, 0
        %vm801 = vcmp.lt.s32.totalorder %v609, 0
        %vm802 = vcmp.lt.s32.totalorder %v620, 0
        %vm803 = vcmp.lt.s32.totalorder %v631, 0
        %vm804 = vcmp.lt.s32.totalorder %v642, 0
        %vm805 = vcmp.lt.s32.totalorder %v653, 0
        %vm806 = vcmp.lt.s32.totalorder %v664, 0
        %vm807 = vcmp.lt.s32.totalorder %v675, 0
        %vm808 = vcmp.lt.s32.totalorder %v686, 0
        %vm809 = vcmp.lt.s32.totalorder %v697, 0
        %vm810 = vcmp.lt.s32.totalorder %v708, 0
        %vm811 = vcmp.lt.s32.totalorder %v719, 0
        %vm812 = vcmp.lt.s32.totalorder %v730, 0
        %vm813 = vcmp.lt.s32.totalorder %v741, 0
        %vm814 = vmand %vm778, %vm742
        %vm815 = vmand %vm779, %vm743
        %vm816 = vmand %vm780, %vm744
        %vm817 = vmand %vm781, %vm745
        %vm818 = vmand %vm782, %vm746
        %vm819 = vmand %vm783, %vm747
        %vm820 = vmand %vm784, %vm748
        %vm821 = vmand %vm785, %vm749
        %vm822 = vmand %vm786, %vm750
        %vm823 = vmand %vm787, %vm751
        %vm824 = vmand %vm788, %vm752
        %vm825 = vmand %vm789, %vm753
        %vm826 = vmand %vm790, %vm754
        %vm827 = vmand %vm791, %vm755
        %vm828 = vmand %vm792, %vm756
        %vm829 = vmand %vm793, %vm757
        %vm830 = vmand %vm794, %vm758
        %vm831 = vmand %vm795, %vm759
        %vm832 = vmand %vm796, %vm760
        %vm833 = vmand %vm797, %vm761
        %vm834 = vmand %vm798, %vm762
        %vm835 = vmand %vm799, %vm763
        %vm836 = vmand %vm800, %vm764
        %vm837 = vmand %vm801, %vm765
        %vm838 = vmand %vm802, %vm766
        %vm839 = vmand %vm803, %vm767
        %vm840 = vmand %vm804, %vm768
        %vm841 = vmand %vm805, %vm769
        %vm842 = vmand %vm806, %vm770
        %vm843 = vmand %vm807, %vm771
        %vm844 = vmand %vm808, %vm772
        %vm845 = vmand %vm809, %vm773
        %vm846 = vmand %vm810, %vm774
        %vm847 = vmand %vm811, %vm775
        %vm848 = vmand %vm812, %vm776
        %vm849 = vmand %vm813, %vm777
        %v850 = vadd.s32 %v356, 18
        %v851 = vadd.s32 %v367, 18
        %v852 = vadd.s32 %v378, 18
        %v853 = vadd.s32 %v389, 18
        %v854 = vadd.s32 %v400, 18
        %v855 = vadd.s32 %v411, 18
        %v856 = vadd.s32 %v422, 18
        %v857 = vadd.s32 %v433, 18
        %v858 = vadd.s32 %v444, 18
        %v859 = vadd.s32 %v455, 18
        %v860 = vadd.s32 %v466, 18
        %v861 = vadd.s32 %v477, 18
        %v862 = vadd.s32 %v488, 18
        %v863 = vadd.s32 %v499, 18
        %v864 = vadd.s32 %v510, 18
        %v865 = vadd.s32 %v521, 18
        %v866 = vadd.s32 %v532, 18
        %v867 = vadd.s32 %v543, 18
        %v868 = vadd.s32 %v554, 18
        %v869 = vadd.s32 %v565, 18
        %v870 = vadd.s32 %v576, 18
        %v871 = vadd.s32 %v587, 18
        %v872 = vadd.s32 %v598, 18
        %v873 = vadd.s32 %v609, 18
        %v874 = vadd.s32 %v620, 18
        %v875 = vadd.s32 %v631, 18
        %v876 = vadd.s32 %v642, 18
        %v877 = vadd.s32 %v653, 18
        %v878 = vadd.s32 %v664, 18
        %v879 = vadd.s32 %v675, 18
        %v880 = vadd.s32 %v686, 18
        %v881 = vadd.s32 %v697, 18
        %v882 = vadd.s32 %v708, 18
        %v883 = vadd.s32 %v719, 18
        %v884 = vadd.s32 %v730, 18
        %v885 = vadd.s32 %v741, 18
        %v886 = vsel %vm814, %v850, %v356
        %v887 = vsel %vm815, %v851, %v367
        %v888 = vsel %vm816, %v852, %v378
        %v889 = vsel %vm817, %v853, %v389
        %v890 = vsel %vm818, %v854, %v400
        %v891 = vsel %vm819, %v855, %v411
        %v892 = vsel %vm820, %v856, %v422
        %v893 = vsel %vm821, %v857, %v433
        %v894 = vsel %vm822, %v858, %v444
        %v895 = vsel %vm823, %v859, %v455
        %v896 = vsel %vm824, %v860, %v466
        %v897 = vsel %vm825, %v861, %v477
        %v898 = vsel %vm826, %v862, %v488
        %v899 = vsel %vm827, %v863, %v499
        %v900 = vsel %vm828, %v864, %v510
        %v901 = vsel %vm829, %v865, %v521
        %v902 = vsel %vm830, %v866, %v532
        %v903 = vsel %vm831, %v867, %v543
        %v904 = vsel %vm832, %v868, %v554
        %v905 = vsel %vm833, %v869, %v565
        %v906 = vsel %vm834, %v870, %v576
        %v907 = vsel %vm835, %v871, %v587
        %v908 = vsel %vm836, %v872, %v598
        %v909 = vsel %vm837, %v873, %v609
        %v910 = vsel %vm838, %v874, %v620
        %v911 = vsel %vm839, %v875, %v631
        %v912 = vsel %vm840, %v876, %v642
        %v913 = vsel %vm841, %v877, %v653
        %v914 = vsel %vm842, %v878, %v664
        %v915 = vsel %vm843, %v879, %v675
        %v916 = vsel %vm844, %v880, %v686
        %v917 = vsel %vm845, %v881, %v697
        %v918 = vsel %vm846, %v882, %v708
        %v919 = vsel %vm847, %v883, %v719
        %v920 = vsel %vm848, %v884, %v730
        %v921 = vsel %vm849, %v885, %v741
        %vm922 = vcmp.ne.s32.totalorder %v886, 0
        %vm923 = vcmp.ne.s32.totalorder %v887, 0
        %vm924 = vcmp.ne.s32.totalorder %v888, 0
        %vm925 = vcmp.ne.s32.totalorder %v889, 0
        %vm926 = vcmp.ne.s32.totalorder %v890, 0
        %vm927 = vcmp.ne.s32.totalorder %v891, 0
        %vm928 = vcmp.ne.s32.totalorder %v892, 0
        %vm929 = vcmp.ne.s32.totalorder %v893, 0
        %vm930 = vcmp.ne.s32.totalorder %v894, 0
        %vm931 = vcmp.ne.s32.totalorder %v895, 0
        %vm932 = vcmp.ne.s32.totalorder %v896, 0
        %vm933 = vcmp.ne.s32.totalorder %v897, 0
        %vm934 = vcmp.ne.s32.totalorder %v898, 0
        %vm935 = vcmp.ne.s32.totalorder %v899, 0
        %vm936 = vcmp.ne.s32.totalorder %v900, 0
        %vm937 = vcmp.ne.s32.totalorder %v901, 0
        %vm938 = vcmp.ne.s32.totalorder %v902, 0
        %vm939 = vcmp.ne.s32.totalorder %v903, 0
        %vm940 = vcmp.ne.s32.totalorder %v904, 0
        %vm941 = vcmp.ne.s32.totalorder %v905, 0
        %vm942 = vcmp.ne.s32.totalorder %v906, 0
        %vm943 = vcmp.ne.s32.totalorder %v907, 0
        %vm944 = vcmp.ne.s32.totalorder %v908, 0
        %vm945 = vcmp.ne.s32.totalorder %v909, 0
        %vm946 = vcmp.ne.s32.totalorder %v910, 0
        %vm947 = vcmp.ne.s32.totalorder %v911, 0
        %vm948 = vcmp.ne.s32.totalorder %v912, 0
        %vm949 = vcmp.ne.s32.totalorder %v913, 0
        %vm950 = vcmp.ne.s32.totalorder %v914, 0
        %vm951 = vcmp.ne.s32.totalorder %v915, 0
        %vm952 = vcmp.ne.s32.totalorder %v916, 0
        %vm953 = vcmp.ne.s32.totalorder %v917, 0
        %vm954 = vcmp.ne.s32.totalorder %v918, 0
        %vm955 = vcmp.ne.s32.totalorder %v919, 0
        %vm956 = vcmp.ne.s32.totalorder %v920, 0
        %vm957 = vcmp.ne.s32.totalorder %v921, 0
        %vm958 = vcmp.ne.s32.totalorder %v886, 17
        %vm959 = vcmp.ne.s32.totalorder %v887, 17
        %vm960 = vcmp.ne.s32.totalorder %v888, 17
        %vm961 = vcmp.ne.s32.totalorder %v889, 17
        %vm962 = vcmp.ne.s32.totalorder %v890, 17
        %vm963 = vcmp.ne.s32.totalorder %v891, 17
        %vm964 = vcmp.ne.s32.totalorder %v892, 17
        %vm965 = vcmp.ne.s32.totalorder %v893, 17
        %vm966 = vcmp.ne.s32.totalorder %v894, 17
        %vm967 = vcmp.ne.s32.totalorder %v895, 17
        %vm968 = vcmp.ne.s32.totalorder %v896, 17
        %vm969 = vcmp.ne.s32.totalorder %v897, 17
        %vm970 = vcmp.ne.s32.totalorder %v898, 17
        %vm971 = vcmp.ne.s32.totalorder %v899, 17
        %vm972 = vcmp.ne.s32.totalorder %v900, 17
        %vm973 = vcmp.ne.s32.totalorder %v901, 17
        %vm974 = vcmp.ne.s32.totalorder %v902, 17
        %vm975 = vcmp.ne.s32.totalorder %v903, 17
        %vm976 = vcmp.ne.s32.totalorder %v904, 17
        %vm977 = vcmp.ne.s32.totalorder %v905, 17
        %vm978 = vcmp.ne.s32.totalorder %v906, 17
        %vm979 = vcmp.ne.s32.totalorder %v907, 17
        %vm980 = vcmp.ne.s32.totalorder %v908, 17
        %vm981 = vcmp.ne.s32.totalorder %v909, 17
        %vm982 = vcmp.ne.s32.totalorder %v910, 17
        %vm983 = vcmp.ne.s32.totalorder %v911, 17
        %vm984 = vcmp.ne.s32.totalorder %v912, 17
        %vm985 = vcmp.ne.s32.totalorder %v913, 17
        %vm986 = vcmp.ne.s32.totalorder %v914, 17
        %vm987 = vcmp.ne.s32.totalorder %v915, 17
        %vm988 = vcmp.ne.s32.totalorder %v916, 17
        %vm989 = vcmp.ne.s32.totalorder %v917, 17
        %vm990 = vcmp.ne.s32.totalorder %v918, 17
        %vm991 = vcmp.ne.s32.totalorder %v919, 17
        %vm992 = vcmp.ne.s32.totalorder %v920, 17
        %vm993 = vcmp.ne.s32.totalorder %v921, 17
        %vm994 = vmand %vm922, %vm958
        %vm995 = vmand %vm923, %vm959
        %vm996 = vmand %vm924, %vm960
        %vm997 = vmand %vm925, %vm961
        %vm998 = vmand %vm926, %vm962
        %vm999 = vmand %vm927, %vm963
        %vm1000 = vmand %vm928, %vm964
        %vm1001 = vmand %vm929, %vm965
        %vm1002 = vmand %vm930, %vm966
        %vm1003 = vmand %vm931, %vm967
        %vm1004 = vmand %vm932, %vm968
        %vm1005 = vmand %vm933, %vm969
        %vm1006 = vmand %vm934, %vm970
        %vm1007 = vmand %vm935, %vm971
        %vm1008 = vmand %vm936, %vm972
        %vm1009 = vmand %vm937, %vm973
        %vm1010 = vmand %vm938, %vm974
        %vm1011 = vmand %vm939, %vm975
        %vm1012 = vmand %vm940, %vm976
        %vm1013 = vmand %vm941, %vm977
        %vm1014 = vmand %vm942, %vm978
        %vm1015 = vmand %vm943, %vm979
        %vm1016 = vmand %vm944, %vm980
        %vm1017 = vmand %vm945, %vm981
        %vm1018 = vmand %vm946, %vm982
        %vm1019 = vmand %vm947, %vm983
        %vm1020 = vmand %vm948, %vm984
        %vm1021 = vmand %vm949, %vm985
        %vm1022 = vmand %vm950, %vm986
        %vm1023 = vmand %vm951, %vm987
        %vm1024 = vmand %vm952, %vm988
        %vm1025 = vmand %vm953, %vm989
        %vm1026 = vmand %vm954, %vm990
        %vm1027 = vmand %vm955, %vm991
        %vm1028 = vmand %vm956, %vm992
        %vm1029 = vmand %vm957, %vm993
        %v1030 = vld [vmem:[%s237] sm:$0xff]
        %v1031 = vld [vmem:[%s237 + $0x8] sm:$0xff]
        %v1032 = vld [vmem:[%s237 + $0x10] sm:$0xff]
        %v1033 = vld [vmem:[%s237 + $0x18] sm:$0xff]
        %v1034 = vld [vmem:[%s237 + $0x20] sm:$0xff]
        %v1035 = vld [vmem:[%s237 + $0x28] sm:$0xff]
        %v1036 = vld [vmem:[%s237 + $0x30] sm:$0xff]
        %v1037 = vld [vmem:[%s237 + $0x38] sm:$0xff]
        %v1038 = vld [vmem:[%s237 + $0x40] sm:$0xff]
        %v1039 = vld [vmem:[%s237 + $0x48] sm:$0xff]
        %v1040 = vld [vmem:[%s237 + $0x50] sm:$0xff]
        %v1041 = vld [vmem:[%s237 + $0x58] sm:$0xff]
        %v1042 = vld [vmem:[%s237 + $0x60] sm:$0xff]
        %v1043 = vld [vmem:[%s237 + $0x68] sm:$0xff]
        %v1044 = vld [vmem:[%s237 + $0x70] sm:$0xff]
        %v1045 = vld [vmem:[%s237 + $0x78] sm:$0xff]
        %v1046 = vld [vmem:[%s237 + $0x80] sm:$0xff]
        %v1047 = vld [vmem:[%s237 + $0x88] sm:$0xff]
        %v1048 = vld [vmem:[%s237 + $0x90] sm:$0xff]
        %v1049 = vld [vmem:[%s237 + $0x98] sm:$0xff]
        %v1050 = vld [vmem:[%s237 + $0xa0] sm:$0xff]
        %v1051 = vld [vmem:[%s237 + $0xa8] sm:$0xff]
        %v1052 = vld [vmem:[%s237 + $0xb0] sm:$0xff]
        %v1053 = vld [vmem:[%s237 + $0xb8] sm:$0xff]
        %v1054 = vld [vmem:[%s237 + $0xc0] sm:$0xff]
        %v1055 = vld [vmem:[%s237 + $0xc8] sm:$0xff]
        %v1056 = vld [vmem:[%s237 + $0xd0] sm:$0xff]
        %v1057 = vld [vmem:[%s237 + $0xd8] sm:$0xff]
        %v1058 = vld [vmem:[%s237 + $0xe0] sm:$0xff]
        %v1059 = vld [vmem:[%s237 + $0xe8] sm:$0xff]
        %v1060 = vld [vmem:[%s237 + $0xf0] sm:$0xff]
        %v1061 = vld [vmem:[%s237 + $0xf8] sm:$0xff]
        %v1062 = vld [vmem:[%s237 + $0x100] sm:$0xff]
        %v1063 = vld [vmem:[%s237 + $0x108] sm:$0xff]
        %v1064 = vld [vmem:[%s237 + $0x110] sm:$0xff]
        %v1065 = vld [vmem:[%s237 + $0x118] sm:$0x3f]
        %v1066 = vpack.c.bf16 %v1031, %v1030
        %v1067 = vpack.c.bf16 %v1033, %v1032
        %v1068 = vpack.c.bf16 %v1035, %v1034
        %v1069 = vpack.c.bf16 %v1037, %v1036
        %v1070 = vpack.c.bf16 %v1039, %v1038
        %v1071 = vpack.c.bf16 %v1041, %v1040
        %v1072 = vpack.c.bf16 %v1043, %v1042
        %v1073 = vpack.c.bf16 %v1045, %v1044
        %v1074 = vpack.c.bf16 %v1047, %v1046
        %v1075 = vpack.c.bf16 %v1049, %v1048
        %v1076 = vpack.c.bf16 %v1051, %v1050
        %v1077 = vpack.c.bf16 %v1053, %v1052
        %v1078 = vpack.c.bf16 %v1055, %v1054
        %v1079 = vpack.c.bf16 %v1057, %v1056
        %v1080 = vpack.c.bf16 %v1059, %v1058
        %v1081 = vpack.c.bf16 %v1061, %v1060
        %v1082 = vpack.c.bf16 %v1063, %v1062
        %v1083 = vpack.c.bf16 %v1065, %v1064
        %v1084 = vld [vmem:[%s237 + $0x1] sm:$0xff]
        %v1085 = vld [vmem:[%s237 + $0x9] sm:$0xff]
        %v1086 = vld [vmem:[%s237 + $0x11] sm:$0xff]
        %v1087 = vld [vmem:[%s237 + $0x19] sm:$0xff]
        %v1088 = vld [vmem:[%s237 + $0x21] sm:$0xff]
        %v1089 = vld [vmem:[%s237 + $0x29] sm:$0xff]
        %v1090 = vld [vmem:[%s237 + $0x31] sm:$0xff]
        %v1091 = vld [vmem:[%s237 + $0x39] sm:$0xff]
        %v1092 = vld [vmem:[%s237 + $0x41] sm:$0xff]
        %v1093 = vld [vmem:[%s237 + $0x49] sm:$0xff]
        %v1094 = vld [vmem:[%s237 + $0x51] sm:$0xff]
        %v1095 = vld [vmem:[%s237 + $0x59] sm:$0xff]
        %v1096 = vld [vmem:[%s237 + $0x61] sm:$0xff]
        %v1097 = vld [vmem:[%s237 + $0x69] sm:$0xff]
        %v1098 = vld [vmem:[%s237 + $0x71] sm:$0xff]
        %v1099 = vld [vmem:[%s237 + $0x79] sm:$0xff]
        %v1100 = vld [vmem:[%s237 + $0x81] sm:$0xff]
        %v1101 = vld [vmem:[%s237 + $0x89] sm:$0xff]
        %v1102 = vld [vmem:[%s237 + $0x91] sm:$0xff]
        %v1103 = vld [vmem:[%s237 + $0x99] sm:$0xff]
        %v1104 = vld [vmem:[%s237 + $0xa1] sm:$0xff]
        %v1105 = vld [vmem:[%s237 + $0xa9] sm:$0xff]
        %v1106 = vld [vmem:[%s237 + $0xb1] sm:$0xff]
        %v1107 = vld [vmem:[%s237 + $0xb9] sm:$0xff]
        %v1108 = vld [vmem:[%s237 + $0xc1] sm:$0xff]
        %v1109 = vld [vmem:[%s237 + $0xc9] sm:$0xff]
        %v1110 = vld [vmem:[%s237 + $0xd1] sm:$0xff]
        %v1111 = vld [vmem:[%s237 + $0xd9] sm:$0xff]
        %v1112 = vld [vmem:[%s237 + $0xe1] sm:$0xff]
        %v1113 = vld [vmem:[%s237 + $0xe9] sm:$0xff]
        %v1114 = vld [vmem:[%s237 + $0xf1] sm:$0xff]
        %v1115 = vld [vmem:[%s237 + $0xf9] sm:$0xff]
        %v1116 = vld [vmem:[%s237 + $0x101] sm:$0xff]
        %v1117 = vld [vmem:[%s237 + $0x109] sm:$0xff]
        %v1118 = vld [vmem:[%s237 + $0x111] sm:$0xff]
        %v1119 = vld [vmem:[%s237 + $0x119] sm:$0x3f]
        %v1120 = vpack.c.bf16 %v1085, %v1084
        %v1121 = vpack.c.bf16 %v1087, %v1086
        %v1122 = vpack.c.bf16 %v1089, %v1088
        %v1123 = vpack.c.bf16 %v1091, %v1090
        %v1124 = vpack.c.bf16 %v1093, %v1092
        %v1125 = vpack.c.bf16 %v1095, %v1094
        %v1126 = vpack.c.bf16 %v1097, %v1096
        %v1127 = vpack.c.bf16 %v1099, %v1098
        %v1128 = vpack.c.bf16 %v1101, %v1100
        %v1129 = vpack.c.bf16 %v1103, %v1102
        %v1130 = vpack.c.bf16 %v1105, %v1104
        %v1131 = vpack.c.bf16 %v1107, %v1106
        %v1132 = vpack.c.bf16 %v1109, %v1108
        %v1133 = vpack.c.bf16 %v1111, %v1110
        %v1134 = vpack.c.bf16 %v1113, %v1112
        %v1135 = vpack.c.bf16 %v1115, %v1114
        %v1136 = vpack.c.bf16 %v1117, %v1116
        %v1137 = vpack.c.bf16 %v1119, %v1118
        %v1138 = vld [vmem:[%s237 + $0x2] sm:$0xff]
        %v1139 = vld [vmem:[%s237 + $0xa] sm:$0xff]
        %v1140 = vld [vmem:[%s237 + $0x12] sm:$0xff]
        %v1141 = vld [vmem:[%s237 + $0x1a] sm:$0xff]
        %v1142 = vld [vmem:[%s237 + $0x22] sm:$0xff]
        %v1143 = vld [vmem:[%s237 + $0x2a] sm:$0xff]
        %v1144 = vld [vmem:[%s237 + $0x32] sm:$0xff]
        %v1145 = vld [vmem:[%s237 + $0x3a] sm:$0xff]
        %v1146 = vld [vmem:[%s237 + $0x42] sm:$0xff]
        %v1147 = vld [vmem:[%s237 + $0x4a] sm:$0xff]
        %v1148 = vld [vmem:[%s237 + $0x52] sm:$0xff]
        %v1149 = vld [vmem:[%s237 + $0x5a] sm:$0xff]
        %v1150 = vld [vmem:[%s237 + $0x62] sm:$0xff]
        %v1151 = vld [vmem:[%s237 + $0x6a] sm:$0xff]
        %v1152 = vld [vmem:[%s237 + $0x72] sm:$0xff]
        %v1153 = vld [vmem:[%s237 + $0x7a] sm:$0xff]
        %v1154 = vld [vmem:[%s237 + $0x82] sm:$0xff]
        %v1155 = vld [vmem:[%s237 + $0x8a] sm:$0xff]
        %v1156 = vld [vmem:[%s237 + $0x92] sm:$0xff]
        %v1157 = vld [vmem:[%s237 + $0x9a] sm:$0xff]
        %v1158 = vld [vmem:[%s237 + $0xa2] sm:$0xff]
        %v1159 = vld [vmem:[%s237 + $0xaa] sm:$0xff]
        %v1160 = vld [vmem:[%s237 + $0xb2] sm:$0xff]
        %v1161 = vld [vmem:[%s237 + $0xba] sm:$0xff]
        %v1162 = vld [vmem:[%s237 + $0xc2] sm:$0xff]
        %v1163 = vld [vmem:[%s237 + $0xca] sm:$0xff]
        %v1164 = vld [vmem:[%s237 + $0xd2] sm:$0xff]
        %v1165 = vld [vmem:[%s237 + $0xda] sm:$0xff]
        %v1166 = vld [vmem:[%s237 + $0xe2] sm:$0xff]
        %v1167 = vld [vmem:[%s237 + $0xea] sm:$0xff]
        %v1168 = vld [vmem:[%s237 + $0xf2] sm:$0xff]
        %v1169 = vld [vmem:[%s237 + $0xfa] sm:$0xff]
        %v1170 = vld [vmem:[%s237 + $0x102] sm:$0xff]
        %v1171 = vld [vmem:[%s237 + $0x10a] sm:$0xff]
        %v1172 = vld [vmem:[%s237 + $0x112] sm:$0xff]
        %v1173 = vld [vmem:[%s237 + $0x11a] sm:$0x3f]
        %v1174 = vpack.c.bf16 %v1139, %v1138
        %v1175 = vpack.c.bf16 %v1141, %v1140
        %v1176 = vpack.c.bf16 %v1143, %v1142
        %v1177 = vpack.c.bf16 %v1145, %v1144
        %v1178 = vpack.c.bf16 %v1147, %v1146
        %v1179 = vpack.c.bf16 %v1149, %v1148
        %v1180 = vpack.c.bf16 %v1151, %v1150
        %v1181 = vpack.c.bf16 %v1153, %v1152
        %v1182 = vpack.c.bf16 %v1155, %v1154
        %v1183 = vpack.c.bf16 %v1157, %v1156
        %v1184 = vpack.c.bf16 %v1159, %v1158
        %v1185 = vpack.c.bf16 %v1161, %v1160
        %v1186 = vpack.c.bf16 %v1163, %v1162
        %v1187 = vpack.c.bf16 %v1165, %v1164
        %v1188 = vpack.c.bf16 %v1167, %v1166
        %v1189 = vpack.c.bf16 %v1169, %v1168
        %v1190 = vpack.c.bf16 %v1171, %v1170
        %v1191 = vpack.c.bf16 %v1173, %v1172
        %v1192 = vld [vmem:[%s237 + $0x11a] sm:$0xff]
        %v1193 = vld [vmem:[%s237 + $0x122] sm:$0xff]
        %v1194 = vld [vmem:[%s237 + $0x12a] sm:$0x3f]
        %v1195 = vpack.c.bf16 %v1192, %v1172
        %v1196 = vpack.c.bf16 %v1194, %v1193
        %v1197 = vld [vmem:[%s237 + $0x13] sm:$0xff]
        %v1198 = vld [vmem:[%s237 + $0x1b] sm:$0xff]
        %v1199 = vld [vmem:[%s237 + $0x23] sm:$0xff]
        %v1200 = vld [vmem:[%s237 + $0x2b] sm:$0xff]
        %v1201 = vld [vmem:[%s237 + $0x33] sm:$0xff]
        %v1202 = vld [vmem:[%s237 + $0x3b] sm:$0xff]
        %v1203 = vld [vmem:[%s237 + $0x43] sm:$0xff]
        %v1204 = vld [vmem:[%s237 + $0x4b] sm:$0xff]
        %v1205 = vld [vmem:[%s237 + $0x53] sm:$0xff]
        %v1206 = vld [vmem:[%s237 + $0x5b] sm:$0xff]
        %v1207 = vld [vmem:[%s237 + $0x63] sm:$0xff]
        %v1208 = vld [vmem:[%s237 + $0x6b] sm:$0xff]
        %v1209 = vld [vmem:[%s237 + $0x73] sm:$0xff]
        %v1210 = vld [vmem:[%s237 + $0x7b] sm:$0xff]
        %v1211 = vld [vmem:[%s237 + $0x83] sm:$0xff]
        %v1212 = vld [vmem:[%s237 + $0x8b] sm:$0xff]
        %v1213 = vld [vmem:[%s237 + $0x93] sm:$0xff]
        %v1214 = vld [vmem:[%s237 + $0x9b] sm:$0xff]
        %v1215 = vld [vmem:[%s237 + $0xa3] sm:$0xff]
        %v1216 = vld [vmem:[%s237 + $0xab] sm:$0xff]
        %v1217 = vld [vmem:[%s237 + $0xb3] sm:$0xff]
        %v1218 = vld [vmem:[%s237 + $0xbb] sm:$0xff]
        %v1219 = vld [vmem:[%s237 + $0xc3] sm:$0xff]
        %v1220 = vld [vmem:[%s237 + $0xcb] sm:$0xff]
        %v1221 = vld [vmem:[%s237 + $0xd3] sm:$0xff]
        %v1222 = vld [vmem:[%s237 + $0xdb] sm:$0xff]
        %v1223 = vld [vmem:[%s237 + $0xe3] sm:$0xff]
        %v1224 = vld [vmem:[%s237 + $0xeb] sm:$0xff]
        %v1225 = vld [vmem:[%s237 + $0xf3] sm:$0xff]
        %v1226 = vld [vmem:[%s237 + $0xfb] sm:$0xff]
        %v1227 = vld [vmem:[%s237 + $0x103] sm:$0xff]
        %v1228 = vld [vmem:[%s237 + $0x10b] sm:$0xff]
        %v1229 = vld [vmem:[%s237 + $0x113] sm:$0xff]
        %v1230 = vld [vmem:[%s237 + $0x11b] sm:$0xff]
        %v1231 = vld [vmem:[%s237 + $0x123] sm:$0xff]
        %v1232 = vld [vmem:[%s237 + $0x12b] sm:$0x3f]
        %v1233 = vpack.c.bf16 %v1198, %v1197
        %v1234 = vpack.c.bf16 %v1200, %v1199
        %v1235 = vpack.c.bf16 %v1202, %v1201
        %v1236 = vpack.c.bf16 %v1204, %v1203
        %v1237 = vpack.c.bf16 %v1206, %v1205
        %v1238 = vpack.c.bf16 %v1208, %v1207
        %v1239 = vpack.c.bf16 %v1210, %v1209
        %v1240 = vpack.c.bf16 %v1212, %v1211
        %v1241 = vpack.c.bf16 %v1214, %v1213
        %v1242 = vpack.c.bf16 %v1216, %v1215
        %v1243 = vpack.c.bf16 %v1218, %v1217
        %v1244 = vpack.c.bf16 %v1220, %v1219
        %v1245 = vpack.c.bf16 %v1222, %v1221
        %v1246 = vpack.c.bf16 %v1224, %v1223
        %v1247 = vpack.c.bf16 %v1226, %v1225
        %v1248 = vpack.c.bf16 %v1228, %v1227
        %v1249 = vpack.c.bf16 %v1230, %v1229
        %v1250 = vpack.c.bf16 %v1232, %v1231
        %v1251 = vld [vmem:[%s237 + $0x14] sm:$0xff]
        %v1252 = vld [vmem:[%s237 + $0x1c] sm:$0xff]
        %v1253 = vld [vmem:[%s237 + $0x24] sm:$0xff]
        %v1254 = vld [vmem:[%s237 + $0x2c] sm:$0xff]
        %v1255 = vld [vmem:[%s237 + $0x34] sm:$0xff]
        %v1256 = vld [vmem:[%s237 + $0x3c] sm:$0xff]
        %v1257 = vld [vmem:[%s237 + $0x44] sm:$0xff]
        %v1258 = vld [vmem:[%s237 + $0x4c] sm:$0xff]
        %v1259 = vld [vmem:[%s237 + $0x54] sm:$0xff]
        %v1260 = vld [vmem:[%s237 + $0x5c] sm:$0xff]
        %v1261 = vld [vmem:[%s237 + $0x64] sm:$0xff]
        %v1262 = vld [vmem:[%s237 + $0x6c] sm:$0xff]
        %v1263 = vld [vmem:[%s237 + $0x74] sm:$0xff]
        %v1264 = vld [vmem:[%s237 + $0x7c] sm:$0xff]
        %v1265 = vld [vmem:[%s237 + $0x84] sm:$0xff]
        %v1266 = vld [vmem:[%s237 + $0x8c] sm:$0xff]
        %v1267 = vld [vmem:[%s237 + $0x94] sm:$0xff]
        %v1268 = vld [vmem:[%s237 + $0x9c] sm:$0xff]
        %v1269 = vld [vmem:[%s237 + $0xa4] sm:$0xff]
        %v1270 = vld [vmem:[%s237 + $0xac] sm:$0xff]
        %v1271 = vld [vmem:[%s237 + $0xb4] sm:$0xff]
        %v1272 = vld [vmem:[%s237 + $0xbc] sm:$0xff]
        %v1273 = vld [vmem:[%s237 + $0xc4] sm:$0xff]
        %v1274 = vld [vmem:[%s237 + $0xcc] sm:$0xff]
        %v1275 = vld [vmem:[%s237 + $0xd4] sm:$0xff]
        %v1276 = vld [vmem:[%s237 + $0xdc] sm:$0xff]
        %v1277 = vld [vmem:[%s237 + $0xe4] sm:$0xff]
        %v1278 = vld [vmem:[%s237 + $0xec] sm:$0xff]
        %v1279 = vld [vmem:[%s237 + $0xf4] sm:$0xff]
        %v1280 = vld [vmem:[%s237 + $0xfc] sm:$0xff]
        %v1281 = vld [vmem:[%s237 + $0x104] sm:$0xff]
        %v1282 = vld [vmem:[%s237 + $0x10c] sm:$0xff]
        %v1283 = vld [vmem:[%s237 + $0x114] sm:$0xff]
        %v1284 = vld [vmem:[%s237 + $0x11c] sm:$0xff]
        %v1285 = vld [vmem:[%s237 + $0x124] sm:$0xff]
        %v1286 = vld [vmem:[%s237 + $0x12c] sm:$0x3f]
        %v1287 = vpack.c.bf16 %v1252, %v1251
        %v1288 = vpack.c.bf16 %v1254, %v1253
        %v1289 = vpack.c.bf16 %v1256, %v1255
        %v1290 = vpack.c.bf16 %v1258, %v1257
        %v1291 = vpack.c.bf16 %v1260, %v1259
        %v1292 = vpack.c.bf16 %v1262, %v1261
        %v1293 = vpack.c.bf16 %v1264, %v1263
        %v1294 = vpack.c.bf16 %v1266, %v1265
        %v1295 = vpack.c.bf16 %v1268, %v1267
        %v1296 = vpack.c.bf16 %v1270, %v1269
        %v1297 = vpack.c.bf16 %v1272, %v1271
        %v1298 = vpack.c.bf16 %v1274, %v1273
        %v1299 = vpack.c.bf16 %v1276, %v1275
        %v1300 = vpack.c.bf16 %v1278, %v1277
        %v1301 = vpack.c.bf16 %v1280, %v1279
        %v1302 = vpack.c.bf16 %v1282, %v1281
        %v1303 = vpack.c.bf16 %v1284, %v1283
        %v1304 = vpack.c.bf16 %v1286, %v1285
        %v1305 = vld [vmem:[%s237 + $0x12c] sm:$0xff]
        %v1306 = vld [vmem:[%s237 + $0x134] sm:$0xff]
        %v1307 = vld [vmem:[%s237 + $0x13c] sm:$0x3f]
        %v1308 = vpack.c.bf16 %v1305, %v1285
        %v1309 = vpack.c.bf16 %v1307, %v1306
        %v1310 = vld [vmem:[%s237 + $0x25] sm:$0xff]
        %v1311 = vld [vmem:[%s237 + $0x2d] sm:$0xff]
        %v1312 = vld [vmem:[%s237 + $0x35] sm:$0xff]
        %v1313 = vld [vmem:[%s237 + $0x3d] sm:$0xff]
        %v1314 = vld [vmem:[%s237 + $0x45] sm:$0xff]
        %v1315 = vld [vmem:[%s237 + $0x4d] sm:$0xff]
        %v1316 = vld [vmem:[%s237 + $0x55] sm:$0xff]
        %v1317 = vld [vmem:[%s237 + $0x5d] sm:$0xff]
        %v1318 = vld [vmem:[%s237 + $0x65] sm:$0xff]
        %v1319 = vld [vmem:[%s237 + $0x6d] sm:$0xff]
        %v1320 = vld [vmem:[%s237 + $0x75] sm:$0xff]
        %v1321 = vld [vmem:[%s237 + $0x7d] sm:$0xff]
        %v1322 = vld [vmem:[%s237 + $0x85] sm:$0xff]
        %v1323 = vld [vmem:[%s237 + $0x8d] sm:$0xff]
        %v1324 = vld [vmem:[%s237 + $0x95] sm:$0xff]
        %v1325 = vld [vmem:[%s237 + $0x9d] sm:$0xff]
        %v1326 = vld [vmem:[%s237 + $0xa5] sm:$0xff]
        %v1327 = vld [vmem:[%s237 + $0xad] sm:$0xff]
        %v1328 = vld [vmem:[%s237 + $0xb5] sm:$0xff]
        %v1329 = vld [vmem:[%s237 + $0xbd] sm:$0xff]
        %v1330 = vld [vmem:[%s237 + $0xc5] sm:$0xff]
        %v1331 = vld [vmem:[%s237 + $0xcd] sm:$0xff]
        %v1332 = vld [vmem:[%s237 + $0xd5] sm:$0xff]
        %v1333 = vld [vmem:[%s237 + $0xdd] sm:$0xff]
        %v1334 = vld [vmem:[%s237 + $0xe5] sm:$0xff]
        %v1335 = vld [vmem:[%s237 + $0xed] sm:$0xff]
        %v1336 = vld [vmem:[%s237 + $0xf5] sm:$0xff]
        %v1337 = vld [vmem:[%s237 + $0xfd] sm:$0xff]
        %v1338 = vld [vmem:[%s237 + $0x105] sm:$0xff]
        %v1339 = vld [vmem:[%s237 + $0x10d] sm:$0xff]
        %v1340 = vld [vmem:[%s237 + $0x115] sm:$0xff]
        %v1341 = vld [vmem:[%s237 + $0x11d] sm:$0xff]
        %v1342 = vld [vmem:[%s237 + $0x125] sm:$0xff]
        %v1343 = vld [vmem:[%s237 + $0x12d] sm:$0xff]
        %v1344 = vld [vmem:[%s237 + $0x135] sm:$0xff]
        %v1345 = vld [vmem:[%s237 + $0x13d] sm:$0x3f]
        %v1346 = vpack.c.bf16 %v1311, %v1310
        %v1347 = vpack.c.bf16 %v1313, %v1312
        %v1348 = vpack.c.bf16 %v1315, %v1314
        %v1349 = vpack.c.bf16 %v1317, %v1316
        %v1350 = vpack.c.bf16 %v1319, %v1318
        %v1351 = vpack.c.bf16 %v1321, %v1320
        %v1352 = vpack.c.bf16 %v1323, %v1322
        %v1353 = vpack.c.bf16 %v1325, %v1324
        %v1354 = vpack.c.bf16 %v1327, %v1326
        %v1355 = vpack.c.bf16 %v1329, %v1328
        %v1356 = vpack.c.bf16 %v1331, %v1330
        %v1357 = vpack.c.bf16 %v1333, %v1332
        %v1358 = vpack.c.bf16 %v1335, %v1334
        %v1359 = vpack.c.bf16 %v1337, %v1336
        %v1360 = vpack.c.bf16 %v1339, %v1338
        %v1361 = vpack.c.bf16 %v1341, %v1340
        %v1362 = vpack.c.bf16 %v1343, %v1342
        %v1363 = vpack.c.bf16 %v1345, %v1344
        %v1364 = vld [vmem:[%s237 + $0x26] sm:$0xff]
        %v1365 = vld [vmem:[%s237 + $0x2e] sm:$0xff]
        %v1366 = vld [vmem:[%s237 + $0x36] sm:$0xff]
        %v1367 = vld [vmem:[%s237 + $0x3e] sm:$0xff]
        %v1368 = vld [vmem:[%s237 + $0x46] sm:$0xff]
        %v1369 = vld [vmem:[%s237 + $0x4e] sm:$0xff]
        %v1370 = vld [vmem:[%s237 + $0x56] sm:$0xff]
        %v1371 = vld [vmem:[%s237 + $0x5e] sm:$0xff]
        %v1372 = vld [vmem:[%s237 + $0x66] sm:$0xff]
        %v1373 = vld [vmem:[%s237 + $0x6e] sm:$0xff]
        %v1374 = vld [vmem:[%s237 + $0x76] sm:$0xff]
        %v1375 = vld [vmem:[%s237 + $0x7e] sm:$0xff]
        %v1376 = vld [vmem:[%s237 + $0x86] sm:$0xff]
        %v1377 = vld [vmem:[%s237 + $0x8e] sm:$0xff]
        %v1378 = vld [vmem:[%s237 + $0x96] sm:$0xff]
        %v1379 = vld [vmem:[%s237 + $0x9e] sm:$0xff]
        %v1380 = vld [vmem:[%s237 + $0xa6] sm:$0xff]
        %v1381 = vld [vmem:[%s237 + $0xae] sm:$0xff]
        %v1382 = vld [vmem:[%s237 + $0xb6] sm:$0xff]
        %v1383 = vld [vmem:[%s237 + $0xbe] sm:$0xff]
        %v1384 = vld [vmem:[%s237 + $0xc6] sm:$0xff]
        %v1385 = vld [vmem:[%s237 + $0xce] sm:$0xff]
        %v1386 = vld [vmem:[%s237 + $0xd6] sm:$0xff]
        %v1387 = vld [vmem:[%s237 + $0xde] sm:$0xff]
        %v1388 = vld [vmem:[%s237 + $0xe6] sm:$0xff]
        %v1389 = vld [vmem:[%s237 + $0xee] sm:$0xff]
        %v1390 = vld [vmem:[%s237 + $0xf6] sm:$0xff]
        %v1391 = vld [vmem:[%s237 + $0xfe] sm:$0xff]
        %v1392 = vld [vmem:[%s237 + $0x106] sm:$0xff]
        %v1393 = vld [vmem:[%s237 + $0x10e] sm:$0xff]
        %v1394 = vld [vmem:[%s237 + $0x116] sm:$0xff]
        %v1395 = vld [vmem:[%s237 + $0x11e] sm:$0xff]
        %v1396 = vld [vmem:[%s237 + $0x126] sm:$0xff]
        %v1397 = vld [vmem:[%s237 + $0x12e] sm:$0xff]
        %v1398 = vld [vmem:[%s237 + $0x136] sm:$0xff]
        %v1399 = vld [vmem:[%s237 + $0x13e] sm:$0x3f]
        %v1400 = vpack.c.bf16 %v1365, %v1364
        %v1401 = vpack.c.bf16 %v1367, %v1366
        %v1402 = vpack.c.bf16 %v1369, %v1368
        %v1403 = vpack.c.bf16 %v1371, %v1370
        %v1404 = vpack.c.bf16 %v1373, %v1372
        %v1405 = vpack.c.bf16 %v1375, %v1374
        %v1406 = vpack.c.bf16 %v1377, %v1376
        %v1407 = vpack.c.bf16 %v1379, %v1378
        %v1408 = vpack.c.bf16 %v1381, %v1380
        %v1409 = vpack.c.bf16 %v1383, %v1382
        %v1410 = vpack.c.bf16 %v1385, %v1384
        %v1411 = vpack.c.bf16 %v1387, %v1386
        %v1412 = vpack.c.bf16 %v1389, %v1388
        %v1413 = vpack.c.bf16 %v1391, %v1390
        %v1414 = vpack.c.bf16 %v1393, %v1392
        %v1415 = vpack.c.bf16 %v1395, %v1394
        %v1416 = vpack.c.bf16 %v1397, %v1396
        %v1417 = vpack.c.bf16 %v1399, %v1398
        %v1418 = vld [vmem:[#allocation6] sm:$0xf]
        %v1419 = vld [vmem:[#allocation6 + $0x4] sm:$0xf]
        %v1420 = vld [vmem:[#allocation6 + $0x8] sm:$0xf]
        %v1421 = vld [vmem:[#allocation6 + $0xc] sm:$0xf]
        %v1422 = vld [vmem:[#allocation6 + $0x10] sm:$0xf]
        %v1423 = vld [vmem:[#allocation6 + $0x14] sm:$0xf]
        %v1424 = vld [vmem:[#allocation6 + $0x18] sm:$0xf]
        %v1425 = vld [vmem:[#allocation6 + $0x1c] sm:$0xf]
        %v1426 = vld [vmem:[#allocation6 + $0x20] sm:$0xf]
        %v1427 = vld [vmem:[#allocation6 + $0x24] sm:$0xf]
        %v1428 = vld [vmem:[#allocation6 + $0x28] sm:$0xf]
        %v1429 = vld [vmem:[#allocation6 + $0x2c] sm:$0xf]
        %v1430 = vld [vmem:[#allocation6 + $0x30] sm:$0xf]
        %v1431 = vld [vmem:[#allocation6 + $0x34] sm:$0xf]
        %v1432 = vld [vmem:[#allocation6 + $0x38] sm:$0xf]
        %v1433 = vld [vmem:[#allocation6 + $0x3c] sm:$0xf]
        %v1434 = vld [vmem:[#allocation6 + $0x40] sm:$0xf]
        %v1435 = vld [vmem:[#allocation6 + $0x44] sm:$0xf]
        %v1436 = vld [vmem:[#allocation6 + $0x48] sm:$0xf]
        %v1437 = vld [vmem:[#allocation6 + $0x4c] sm:$0xf]
        %v1438 = vld [vmem:[#allocation6 + $0x50] sm:$0xf]
        %v1439 = vld [vmem:[#allocation6 + $0x54] sm:$0xf]
        %v1440 = vld [vmem:[#allocation6 + $0x58] sm:$0xf]
        %v1441 = vld [vmem:[#allocation6 + $0x5c] sm:$0xf]
        %v1442 = vld [vmem:[#allocation6 + $0x60] sm:$0xf]
        %v1443 = vld [vmem:[#allocation6 + $0x64] sm:$0xf]
        %v1444 = vld [vmem:[#allocation6 + $0x68] sm:$0xf]
        %v1445 = vld [vmem:[#allocation6 + $0x6c] sm:$0xf]
        %v1446 = vld [vmem:[#allocation6 + $0x70] sm:$0xf]
        %v1447 = vld [vmem:[#allocation6 + $0x74] sm:$0xf]
        %v1448 = vld [vmem:[#allocation6 + $0x78] sm:$0xf]
        %v1449 = vld [vmem:[#allocation6 + $0x7c] sm:$0xf]
        %v1450 = vld [vmem:[#allocation6 + $0x80] sm:$0xf]
        %v1451 = vld [vmem:[#allocation6 + $0x84] sm:$0xf]
        %v1452 = vld [vmem:[#allocation6 + $0x88] sm:$0xf]
        %v1453 = vld [vmem:[#allocation6 + $0x8c] sm:$0xf]
        %v1454 = vld [vmem:[#allocation6 + $0x90] sm:$0xf]
        %v1455 = vld [vmem:[#allocation6 + $0x94] sm:$0xf]
        %v1456 = vld [vmem:[#allocation6 + $0x98] sm:$0xf]
        %v1457 = vld [vmem:[#allocation6 + $0x9c] sm:$0xf]
        %v1458 = vld [vmem:[#allocation6 + $0xa0] sm:$0xf]
        %v1459 = vld [vmem:[#allocation6 + $0xa4] sm:$0xf]
        %v1460 = vld [vmem:[#allocation6 + $0xa8] sm:$0xf]
        %v1461 = vld [vmem:[#allocation6 + $0xac] sm:$0xf]
        %v1462 = vld [vmem:[#allocation6 + $0xb0] sm:$0xf]
        %v1463 = vld [vmem:[#allocation6 + $0xb4] sm:$0xf]
        %v1464 = vld [vmem:[#allocation6 + $0xb8] sm:$0xf]
        %v1465 = vld [vmem:[#allocation6 + $0xbc] sm:$0xf]
        %v1466 = vld [vmem:[#allocation6 + $0xc0] sm:$0xf]
        %v1467 = vld [vmem:[#allocation6 + $0xc4] sm:$0xf]
        %v1468 = vld [vmem:[#allocation6 + $0xc8] sm:$0xf]
        %v1469 = vld [vmem:[#allocation6 + $0xcc] sm:$0xf]
        %v1470 = vld [vmem:[#allocation6 + $0xd0] sm:$0xf]
        %v1471 = vld [vmem:[#allocation6 + $0xd4] sm:$0xf]
        %v1472 = vld [vmem:[#allocation6 + $0xd8] sm:$0xf]
        %v1473 = vld [vmem:[#allocation6 + $0xdc] sm:$0xf]
        %v1474 = vld [vmem:[#allocation6 + $0xe0] sm:$0xf]
        %v1475 = vld [vmem:[#allocation6 + $0xe4] sm:$0xf]
        %v1476 = vld [vmem:[#allocation6 + $0xe8] sm:$0xf]
        %v1477 = vld [vmem:[#allocation6 + $0xec] sm:$0xf]
        %v1478 = vld [vmem:[#allocation6 + $0xf0] sm:$0xf]
        %v1479 = vld [vmem:[#allocation6 + $0xf4] sm:$0xf]
        %v1480 = vld [vmem:[#allocation6 + $0xf8] sm:$0xf]
        %v1481 = vld [vmem:[#allocation6 + $0xfc] sm:$0xf]
        %v1482 = vld [vmem:[#allocation6 + $0x100] sm:$0xf]
        %v1483 = vld [vmem:[#allocation6 + $0x104] sm:$0xf]
        %v1484 = vld [vmem:[#allocation6 + $0x108] sm:$0xf]
        %v1485 = vld [vmem:[#allocation6 + $0x10c] sm:$0xf]
        %v1486 = vld [vmem:[#allocation6 + $0x110] sm:$0xf]
        %v1487 = vld [vmem:[#allocation6 + $0x114] sm:$0xf]
        %v1488 = vld [vmem:[#allocation6 + $0x118] sm:$0xf]
        %v1489 = vld [vmem:[#allocation6 + $0x11c] sm:$0xf]
        %v1490 = vld [vmem:[#allocation6 + $0x120] sm:$0xf]
        %v1491 = vld [vmem:[#allocation6 + $0x124] sm:$0xf]
        %v1492 = vld [vmem:[#allocation6 + $0x128] sm:$0xf]
        %v1493 = vld [vmem:[#allocation6 + $0x12c] sm:$0xf]
        %v1494 = vld [vmem:[#allocation6 + $0x130] sm:$0xf]
        %v1495 = vld [vmem:[#allocation6 + $0x134] sm:$0xf]
        %v1496 = vld [vmem:[#allocation6 + $0x138] sm:$0xf]
        %v1497 = vld [vmem:[#allocation6 + $0x13c] sm:$0xf]
        %v1498 = vld [vmem:[#allocation6 + $0x140] sm:$0xf]
        %v1499 = vld [vmem:[#allocation6 + $0x144] sm:$0xf]
        %v1500 = vld [vmem:[#allocation6 + $0x148] sm:$0xf]
        %v1501 = vld [vmem:[#allocation6 + $0x14c] sm:$0xf]
        %v1502 = vld [vmem:[#allocation6 + $0x150] sm:$0xf]
        %v1503 = vld [vmem:[#allocation6 + $0x154] sm:$0xf]
        %v1504 = vld [vmem:[#allocation6 + $0x158] sm:$0xf]
        %v1505 = vld [vmem:[#allocation6 + $0x15c] sm:$0xf]
        %v1506 = vld [vmem:[#allocation6 + $0x160] sm:$0xf]
        %v1507 = vld [vmem:[#allocation6 + $0x164] sm:$0xf]
        %v1508 = vld [vmem:[#allocation6 + $0x168] sm:$0xf]
        %v1509 = vld [vmem:[#allocation6 + $0x16c] sm:$0xf]
        %v1510 = vld [vmem:[#allocation6 + $0x170] sm:$0xf]
        %v1511 = vld [vmem:[#allocation6 + $0x174] sm:$0xf]
        %v1512 = vld [vmem:[#allocation6 + $0x178] sm:$0xf]
        %v1513 = vld [vmem:[#allocation6 + $0x17c] sm:$0xf]
        %v1514 = vld [vmem:[#allocation6 + $0x180] sm:$0xf]
        %v1515 = vld [vmem:[#allocation6 + $0x184] sm:$0xf]
        %v1516 = vld [vmem:[#allocation6 + $0x188] sm:$0xf]
        %v1517 = vld [vmem:[#allocation6 + $0x18c] sm:$0xf]
        %v1518 = vld [vmem:[#allocation6 + $0x190] sm:$0xf]
        %v1519 = vld [vmem:[#allocation6 + $0x194] sm:$0xf]
        %v1520 = vld [vmem:[#allocation6 + $0x198] sm:$0xf]
        %v1521 = vld [vmem:[#allocation6 + $0x19c] sm:$0xf]
        %v1522 = vld [vmem:[#allocation6 + $0x1a0] sm:$0xf]
        %v1523 = vld [vmem:[#allocation6 + $0x1a4] sm:$0xf]
        %v1524 = vld [vmem:[#allocation6 + $0x1a8] sm:$0xf]
        %v1525 = vld [vmem:[#allocation6 + $0x1ac] sm:$0xf]
        %v1526 = vld [vmem:[#allocation6 + $0x1b0] sm:$0xf]
        %v1527 = vld [vmem:[#allocation6 + $0x1b4] sm:$0xf]
        %v1528 = vld [vmem:[#allocation6 + $0x1b8] sm:$0xf]
        %v1529 = vld [vmem:[#allocation6 + $0x1bc] sm:$0xf]
        %v1530 = vld [vmem:[#allocation6 + $0x1c0] sm:$0xf]
        %v1531 = vld [vmem:[#allocation6 + $0x1c4] sm:$0xf]
        %v1532 = vld [vmem:[#allocation6 + $0x1c8] sm:$0xf]
        %v1533 = vld [vmem:[#allocation6 + $0x1cc] sm:$0xf]
        %v1534 = vld [vmem:[#allocation6 + $0x1d0] sm:$0xf]
        %v1535 = vld [vmem:[#allocation6 + $0x1d4] sm:$0xf]
        %v1536 = vld [vmem:[#allocation6 + $0x1d8] sm:$0xf]
        %v1537 = vld [vmem:[#allocation6 + $0x1dc] sm:$0xf]
        %v1538 = vld [vmem:[#allocation6 + $0x1e0] sm:$0xf]
        %v1539 = vld [vmem:[#allocation6 + $0x1e4] sm:$0xf]
        %v1540 = vld [vmem:[#allocation6 + $0x1e8] sm:$0xf]
        %v1541 = vld [vmem:[#allocation6 + $0x1ec] sm:$0xf]
        %v1542 = vld [vmem:[#allocation6 + $0x1f0] sm:$0xf]
        %v1543 = vld [vmem:[#allocation6 + $0x1f4] sm:$0xf]
        %v1544 = vld [vmem:[#allocation6 + $0x1f8] sm:$0xf]
        %v1545 = vld [vmem:[#allocation6 + $0x1fc] sm:$0xf]
        %v1546 = vld [vmem:[#allocation6 + $0x200] sm:$0xf]
        %v1547 = vld [vmem:[#allocation6 + $0x204] sm:$0xf]
        %v1548 = vld [vmem:[#allocation6 + $0x208] sm:$0xf]
        %v1549 = vld [vmem:[#allocation6 + $0x20c] sm:$0xf]
        %v1550 = vld [vmem:[#allocation6 + $0x210] sm:$0xf]
        %v1551 = vld [vmem:[#allocation6 + $0x214] sm:$0xf]
        %v1552 = vld [vmem:[#allocation6 + $0x218] sm:$0xf]
        %v1553 = vld [vmem:[#allocation6 + $0x21c] sm:$0xf]
        %v1554 = vld [vmem:[#allocation6 + $0x220] sm:$0xf]
        %v1555 = vld [vmem:[#allocation6 + $0x224] sm:$0xf]
        %v1556 = vld [vmem:[#allocation6 + $0x228] sm:$0xf]
        %v1557 = vld [vmem:[#allocation6 + $0x22c] sm:$0xf]
        %v1558 = vld [vmem:[#allocation6 + $0x230] sm:$0xf]
        %v1559 = vld [vmem:[#allocation6 + $0x234] sm:$0xf]
        %v1560 = vld [vmem:[#allocation6 + $0x238] sm:$0xf]
        %v1561 = vld [vmem:[#allocation6 + $0x23c] sm:$0xf]
        %v1562 = vld [vmem:[%s2] sm:$0x1]
        %v1564 = vlaneseq
        %v1565 = vshrl.u32 %v1564, 7
        %v1566 = vsub.s32 0, %v1565
        %v1567 = vrot.slane %v1562, %v1566
        %v1713 = vunpack.c.l.b16 %v1418
        %v1714 = vunpack.c.l.b16 %v1419
        %v1715 = vunpack.c.l.b16 %v1420
        %v1716 = vunpack.c.l.b16 %v1421
        %v1717 = vunpack.c.l.b16 %v1422
        %v1718 = vunpack.c.l.b16 %v1423
        %v1719 = vunpack.c.l.b16 %v1424
        %v1720 = vunpack.c.l.b16 %v1425
        %v1721 = vunpack.c.l.b16 %v1426
        %v1722 = vunpack.c.l.b16 %v1427
        %v1723 = vunpack.c.l.b16 %v1428
        %v1724 = vunpack.c.l.b16 %v1429
        %v1725 = vunpack.c.l.b16 %v1430
        %v1726 = vunpack.c.l.b16 %v1431
        %v1727 = vunpack.c.l.b16 %v1432
        %v1728 = vunpack.c.l.b16 %v1433
        %v1729 = vunpack.c.l.b16 %v1434
        %v1730 = vunpack.c.l.b16 %v1435
        %v1731 = vunpack.c.l.b16 %v1436
        %v1732 = vunpack.c.l.b16 %v1437
        %v1733 = vunpack.c.l.b16 %v1438
        %v1734 = vunpack.c.l.b16 %v1439
        %v1735 = vunpack.c.l.b16 %v1440
        %v1736 = vunpack.c.l.b16 %v1441
        %v1737 = vunpack.c.l.b16 %v1442
        %v1738 = vunpack.c.l.b16 %v1443
        %v1739 = vunpack.c.l.b16 %v1444
        %v1740 = vunpack.c.l.b16 %v1445
        %v1741 = vunpack.c.l.b16 %v1446
        %v1742 = vunpack.c.l.b16 %v1447
        %v1743 = vunpack.c.l.b16 %v1448
        %v1744 = vunpack.c.l.b16 %v1449
        %v1745 = vunpack.c.l.b16 %v1450
        %v1746 = vunpack.c.l.b16 %v1451
        %v1747 = vunpack.c.l.b16 %v1452
        %v1748 = vunpack.c.l.b16 %v1453
        %v1749 = vunpack.c.l.b16 %v1454
        %v1750 = vunpack.c.l.b16 %v1455
        %v1751 = vunpack.c.l.b16 %v1456
        %v1752 = vunpack.c.l.b16 %v1457
        %v1753 = vunpack.c.l.b16 %v1458
        %v1754 = vunpack.c.l.b16 %v1459
        %v1755 = vunpack.c.l.b16 %v1460
        %v1756 = vunpack.c.l.b16 %v1461
        %v1757 = vunpack.c.l.b16 %v1462
        %v1758 = vunpack.c.l.b16 %v1463
        %v1759 = vunpack.c.l.b16 %v1464
        %v1760 = vunpack.c.l.b16 %v1465
        %v1761 = vunpack.c.l.b16 %v1466
        %v1762 = vunpack.c.l.b16 %v1467
        %v1763 = vunpack.c.l.b16 %v1468
        %v1764 = vunpack.c.l.b16 %v1469
        %v1765 = vunpack.c.l.b16 %v1470
        %v1766 = vunpack.c.l.b16 %v1471
        %v1767 = vunpack.c.l.b16 %v1472
        %v1768 = vunpack.c.l.b16 %v1473
        %v1769 = vunpack.c.l.b16 %v1474
        %v1770 = vunpack.c.l.b16 %v1475
        %v1771 = vunpack.c.l.b16 %v1476
        %v1772 = vunpack.c.l.b16 %v1477
        %v1773 = vunpack.c.l.b16 %v1478
        %v1774 = vunpack.c.l.b16 %v1479
        %v1775 = vunpack.c.l.b16 %v1480
        %v1776 = vunpack.c.l.b16 %v1481
        %v1777 = vunpack.c.l.b16 %v1482
        %v1778 = vunpack.c.l.b16 %v1483
        %v1779 = vunpack.c.l.b16 %v1484
        %v1780 = vunpack.c.l.b16 %v1485
        %v1781 = vunpack.c.l.b16 %v1486
        %v1782 = vunpack.c.l.b16 %v1487
        %v1783 = vunpack.c.l.b16 %v1488
        %v1784 = vunpack.c.l.b16 %v1489
        %v1785 = vunpack.c.l.b16 %v1490
        %v1786 = vunpack.c.l.b16 %v1491
        %v1787 = vunpack.c.l.b16 %v1492
        %v1788 = vunpack.c.l.b16 %v1493
        %v1789 = vunpack.c.l.b16 %v1494
        %v1790 = vunpack.c.l.b16 %v1495
        %v1791 = vunpack.c.l.b16 %v1496
        %v1792 = vunpack.c.l.b16 %v1497
        %v1793 = vunpack.c.l.b16 %v1498
        %v1794 = vunpack.c.l.b16 %v1499
        %v1795 = vunpack.c.l.b16 %v1500
        %v1796 = vunpack.c.l.b16 %v1501
        %v1797 = vunpack.c.l.b16 %v1502
        %v1798 = vunpack.c.l.b16 %v1503
        %v1799 = vunpack.c.l.b16 %v1504
        %v1800 = vunpack.c.l.b16 %v1505
        %v1801 = vunpack.c.l.b16 %v1506
        %v1802 = vunpack.c.l.b16 %v1507
        %v1803 = vunpack.c.l.b16 %v1508
        %v1804 = vunpack.c.l.b16 %v1509
        %v1805 = vunpack.c.l.b16 %v1510
        %v1806 = vunpack.c.l.b16 %v1511
        %v1807 = vunpack.c.l.b16 %v1512
        %v1808 = vunpack.c.l.b16 %v1513
        %v1809 = vunpack.c.l.b16 %v1514
        %v1810 = vunpack.c.l.b16 %v1515
        %v1811 = vunpack.c.l.b16 %v1516
        %v1812 = vunpack.c.l.b16 %v1517
        %v1813 = vunpack.c.l.b16 %v1518
        %v1814 = vunpack.c.l.b16 %v1519
        %v1815 = vunpack.c.l.b16 %v1520
        %v1816 = vunpack.c.l.b16 %v1521
        %v1817 = vunpack.c.l.b16 %v1522
        %v1818 = vunpack.c.l.b16 %v1523
        %v1819 = vunpack.c.l.b16 %v1524
        %v1820 = vunpack.c.l.b16 %v1525
        %v1821 = vunpack.c.l.b16 %v1526
        %v1822 = vunpack.c.l.b16 %v1527
        %v1823 = vunpack.c.l.b16 %v1528
        %v1824 = vunpack.c.l.b16 %v1529
        %v1825 = vunpack.c.l.b16 %v1530
        %v1826 = vunpack.c.l.b16 %v1531
        %v1827 = vunpack.c.l.b16 %v1532
        %v1828 = vunpack.c.l.b16 %v1533
        %v1829 = vunpack.c.l.b16 %v1534
        %v1830 = vunpack.c.l.b16 %v1535
        %v1831 = vunpack.c.l.b16 %v1536
        %v1832 = vunpack.c.l.b16 %v1537
        %v1833 = vunpack.c.l.b16 %v1538
        %v1834 = vunpack.c.l.b16 %v1539
        %v1835 = vunpack.c.l.b16 %v1540
        %v1836 = vunpack.c.l.b16 %v1541
        %v1837 = vunpack.c.l.b16 %v1542
        %v1838 = vunpack.c.l.b16 %v1543
        %v1839 = vunpack.c.l.b16 %v1544
        %v1840 = vunpack.c.l.b16 %v1545
        %v1841 = vunpack.c.l.b16 %v1546
        %v1842 = vunpack.c.l.b16 %v1547
        %v1843 = vunpack.c.l.b16 %v1548
        %v1844 = vunpack.c.l.b16 %v1549
        %v1845 = vunpack.c.l.b16 %v1550
        %v1846 = vunpack.c.l.b16 %v1551
        %v1847 = vunpack.c.l.b16 %v1552
        %v1848 = vunpack.c.l.b16 %v1553
        %v1849 = vunpack.c.l.b16 %v1554
        %v1850 = vunpack.c.l.b16 %v1555
        %v1851 = vunpack.c.l.b16 %v1556
        %v1852 = vunpack.c.l.b16 %v1557
        %v1853 = vunpack.c.l.b16 %v1558
        %v1854 = vunpack.c.l.b16 %v1559
        %v1855 = vunpack.c.l.b16 %v1560
        %v1856 = vunpack.c.l.b16 %v1561
        %v1857 = vpack.c.b16 %v1714, %v1713
        %v1858 = vpack.c.b16 %v1716, %v1715
        %v1859 = vpack.c.b16 %v1718, %v1717
        %v1860 = vpack.c.b16 %v1720, %v1719
        %v1861 = vpack.c.b16 %v1722, %v1721
        %v1862 = vpack.c.b16 %v1724, %v1723
        %v1863 = vpack.c.b16 %v1726, %v1725
        %v1864 = vpack.c.b16 %v1728, %v1727
        %v1865 = vpack.c.b16 %v1730, %v1729
        %v1866 = vpack.c.b16 %v1732, %v1731
        %v1867 = vpack.c.b16 %v1734, %v1733
        %v1868 = vpack.c.b16 %v1736, %v1735
        %v1869 = vpack.c.b16 %v1738, %v1737
        %v1870 = vpack.c.b16 %v1740, %v1739
        %v1871 = vpack.c.b16 %v1742, %v1741
        %v1872 = vpack.c.b16 %v1744, %v1743
        %v1873 = vpack.c.b16 %v1746, %v1745
        %v1874 = vpack.c.b16 %v1748, %v1747
        %v1875 = vpack.c.b16 %v1750, %v1749
        %v1876 = vpack.c.b16 %v1752, %v1751
        %v1877 = vpack.c.b16 %v1754, %v1753
        %v1878 = vpack.c.b16 %v1756, %v1755
        %v1879 = vpack.c.b16 %v1758, %v1757
        %v1880 = vpack.c.b16 %v1760, %v1759
        %v1881 = vpack.c.b16 %v1762, %v1761
        %v1882 = vpack.c.b16 %v1764, %v1763
        %v1883 = vpack.c.b16 %v1766, %v1765
        %v1884 = vpack.c.b16 %v1768, %v1767
        %v1885 = vpack.c.b16 %v1770, %v1769
        %v1886 = vpack.c.b16 %v1772, %v1771
        %v1887 = vpack.c.b16 %v1774, %v1773
        %v1888 = vpack.c.b16 %v1776, %v1775
        %v1889 = vpack.c.b16 %v1778, %v1777
        %v1890 = vpack.c.b16 %v1780, %v1779
        %v1891 = vpack.c.b16 %v1782, %v1781
        %v1892 = vpack.c.b16 %v1784, %v1783
        %v1893 = vpack.c.b16 %v1786, %v1785
        %v1894 = vpack.c.b16 %v1788, %v1787
        %v1895 = vpack.c.b16 %v1790, %v1789
        %v1896 = vpack.c.b16 %v1792, %v1791
        %v1897 = vpack.c.b16 %v1794, %v1793
        %v1898 = vpack.c.b16 %v1796, %v1795
        %v1899 = vpack.c.b16 %v1798, %v1797
        %v1900 = vpack.c.b16 %v1800, %v1799
        %v1901 = vpack.c.b16 %v1802, %v1801
        %v1902 = vpack.c.b16 %v1804, %v1803
        %v1903 = vpack.c.b16 %v1806, %v1805
        %v1904 = vpack.c.b16 %v1808, %v1807
        %v1905 = vpack.c.b16 %v1810, %v1809
        %v1906 = vpack.c.b16 %v1812, %v1811
        %v1907 = vpack.c.b16 %v1814, %v1813
        %v1908 = vpack.c.b16 %v1816, %v1815
        %v1909 = vpack.c.b16 %v1818, %v1817
        %v1910 = vpack.c.b16 %v1820, %v1819
        %v1911 = vpack.c.b16 %v1822, %v1821
        %v1912 = vpack.c.b16 %v1824, %v1823
        %v1913 = vpack.c.b16 %v1826, %v1825
        %v1914 = vpack.c.b16 %v1828, %v1827
        %v1915 = vpack.c.b16 %v1830, %v1829
        %v1916 = vpack.c.b16 %v1832, %v1831
        %v1917 = vpack.c.b16 %v1834, %v1833
        %v1918 = vpack.c.b16 %v1836, %v1835
        %v1919 = vpack.c.b16 %v1838, %v1837
        %v1920 = vpack.c.b16 %v1840, %v1839
        %v1921 = vpack.c.b16 %v1842, %v1841
        %v1922 = vpack.c.b16 %v1844, %v1843
        %v1923 = vpack.c.b16 %v1846, %v1845
        %v1924 = vpack.c.b16 %v1848, %v1847
        %v1925 = vpack.c.b16 %v1850, %v1849
        %v1926 = vpack.c.b16 %v1852, %v1851
        %v1927 = vpack.c.b16 %v1854, %v1853
        %v1928 = vpack.c.b16 %v1856, %v1855
        %2001 = vmatprep.subr.bf16.mxu0 0
        %2002 = vmatpush1.bf16.msra.mxu0 %v1857
        %2003 = vmatprep.subr.bf16.mxu0 0
        %2004 = vmatpush1.bf16.msra.mxu0 %v1858
        %2005 = vmatprep.subr.bf16.mxu0 0
        %2006 = vmatpush1.bf16.msra.mxu0 %v1859
        %2007 = vmatprep.subr.bf16.mxu0 0
        %2008 = vmatpush1.bf16.msra.mxu0 %v1860
        %2009 = vmatprep.subr.bf16.mxu0 0
        %2010 = vmatpush1.bf16.msra.mxu0 %v1861
        %2011 = vmatprep.subr.bf16.mxu0 0
        %2012 = vmatpush1.bf16.msra.mxu0 %v1862
        %2013 = vmatprep.subr.bf16.mxu0 0
        %2014 = vmatpush1.bf16.msra.mxu0 %v1863
        %2015 = vmatprep.subr.bf16.mxu0 0
        %2016 = vmatpush1.bf16.msra.mxu0 %v1864
        %2017 = vmatprep.subr.bf16.mxu0 0
        %2018 = vmatpush1.bf16.msra.mxu0 %v1865
        %2019 = vmatprep.subr.bf16.mxu0 0
        %2020 = vmatpush1.bf16.msra.mxu0 %v1866
        %2021 = vmatprep.subr.bf16.mxu0 0
        %2022 = vmatpush1.bf16.msra.mxu0 %v1867
        %2023 = vmatprep.subr.bf16.mxu0 0
        %2024 = vmatpush1.bf16.msra.mxu0 %v1868
        %2025 = vmatprep.subr.bf16.mxu0 0
        %2026 = vmatpush1.bf16.msra.mxu0 %v1869
        %2027 = vmatprep.subr.bf16.mxu0 0
        %2028 = vmatpush1.bf16.msra.mxu0 %v1870
        %2029 = vmatprep.subr.bf16.mxu0 0
        %2030 = vmatpush1.bf16.msra.mxu0 %v1871
        %2031 = vmatprep.subr.bf16.mxu0 0
        %2032 = vmatpush1.bf16.msra.mxu0 %v1872
        %2033 = vmatprep.mubr.bf16.mxu0 %v1120
        %2034 = vmatmul.mubr.bf16.gmra.mrb[0].mxu0 %v1066
        %v2035 = vpop.f32.mrb[0].mxu0
        %v2036 = vadd.f32 %v1567, %v2035
        %v2037 = vpop.f32.mrb[0].mxu0
        %v2038 = vpop.f32.mrb[0].mxu0
        %v2039 = vadd.f32 %v1567, %v2038
        %v2040 = vpop.f32.mrb[0].mxu0
        %2041 = vmatprep.mubr.bf16.mxu0 %v1121
        %2042 = vmatmul.mubr.bf16.gmra.mrb[0].mxu0 %v1067
        %v2043 = vpop.f32.mrb[0].mxu0
        %v2044 = vadd.f32 %v1567, %v2043
        %v2045 = vpop.f32.mrb[0].mxu0
        %v2046 = vpop.f32.mrb[0].mxu0
        %v2047 = vadd.f32 %v1567, %v2046
        %v2048 = vpop.f32.mrb[0].mxu0
        %2049 = vmatprep.mubr.bf16.mxu0 %v1122
        %2050 = vmatmul.mubr.bf16.gmra.mrb[0].mxu0 %v1068
        %v2051 = vpop.f32.mrb[0].mxu0
        %v2052 = vadd.f32 %v1567, %v2051
        %v2053 = vpop.f32.mrb[0].mxu0
        %v2054 = vpop.f32.mrb[0].mxu0
        %v2055 = vadd.f32 %v1567, %v2054
        %v2056 = vpop.f32.mrb[0].mxu0
        %2057 = vmatprep.mubr.bf16.mxu0 %v1123
        %2058 = vmatmul.mubr.bf16.gmra.mrb[0].mxu0 %v1069
        %v2059 = vpop.f32.mrb[0].mxu0
        %v2060 = vadd.f32 %v1567, %v2059
        %v2061 = vpop.f32.mrb[0].mxu0
        %v2062 = vpop.f32.mrb[0].mxu0
        %v2063 = vadd.f32 %v1567, %v2062
        %v2064 = vpop.f32.mrb[0].mxu0
        %2065 = vmatprep.mubr.bf16.mxu0 %v1124
        %2066 = vmatmul.mubr.bf16.gmra.mrb[0].mxu0 %v1070
        %v2067 = vpop.f32.mrb[0].mxu0
        %v2068 = vadd.f32 %v1567, %v2067
        %v2069 = vpop.f32.mrb[0].mxu0
        %v2070 = vpop.f32.mrb[0].mxu0
        %v2071 = vadd.f32 %v1567, %v2070
        %v2072 = vpop.f32.mrb[0].mxu0
        %2073 = vmatprep.mubr.bf16.mxu0 %v1125
        %2074 = vmatmul.mubr.bf16.gmra.mrb[0].mxu0 %v1071
        %v2075 = vpop.f32.mrb[0].mxu0
        %v2076 = vadd.f32 %v1567, %v2075
        %v2077 = vpop.f32.mrb[0].mxu0
        %v2078 = vpop.f32.mrb[0].mxu0
        %v2079 = vadd.f32 %v1567, %v2078
        %v2080 = vpop.f32.mrb[0].mxu0
        %2081 = vmatprep.mubr.bf16.mxu0 %v1126
        %2082 = vmatmul.mubr.bf16.gmra.mrb[0].mxu0 %v1072
        %v2083 = vpop.f32.mrb[0].mxu0
        %v2084 = vadd.f32 %v1567, %v2083
        %v2085 = vpop.f32.mrb[0].mxu0
        %v2086 = vpop.f32.mrb[0].mxu0
        %v2087 = vadd.f32 %v1567, %v2086
        %v2088 = vpop.f32.mrb[0].mxu0
        %2089 = vmatprep.mubr.bf16.mxu0 %v1127
        %2090 = vmatmul.mubr.bf16.gmra.mrb[0].mxu0 %v1073
        %v2091 = vpop.f32.mrb[0].mxu0
        %v2092 = vadd.f32 %v1567, %v2091
        %v2093 = vpop.f32.mrb[0].mxu0
        %v2094 = vpop.f32.mrb[0].mxu0
        %v2095 = vadd.f32 %v1567, %v2094
        %v2096 = vpop.f32.mrb[0].mxu0
        %2097 = vmatprep.mubr.bf16.mxu0 %v1128
        %2098 = vmatmul.mubr.bf16.gmra.mrb[0].mxu0 %v1074
        %v2099 = vpop.f32.mrb[0].mxu0
        %v2100 = vadd.f32 %v1567, %v2099
        %v2101 = vpop.f32.mrb[0].mxu0
        %v2102 = vpop.f32.mrb[0].mxu0
        %v2103 = vadd.f32 %v1567, %v2102
        %v2104 = vpop.f32.mrb[0].mxu0
        %2105 = vmatprep.mubr.bf16.mxu0 %v1129
        %2106 = vmatmul.mubr.bf16.gmra.mrb[0].mxu0 %v1075
        %v2107 = vpop.f32.mrb[0].mxu0
        %v2108 = vadd.f32 %v1567, %v2107
        %v2109 = vpop.f32.mrb[0].mxu0
        %v2110 = vpop.f32.mrb[0].mxu0
        %v2111 = vadd.f32 %v1567, %v2110
        %v2112 = vpop.f32.mrb[0].mxu0
        %2113 = vmatprep.mubr.bf16.mxu0 %v1130
        %2114 = vmatmul.mubr.bf16.gmra.mrb[0].mxu0 %v1076
        %v2115 = vpop.f32.mrb[0].mxu0
        %v2116 = vadd.f32 %v1567, %v2115
        %v2117 = vpop.f32.mrb[0].mxu0
        %v2118 = vpop.f32.mrb[0].mxu0
        %v2119 = vadd.f32 %v1567, %v2118
        %v2120 = vpop.f32.mrb[0].mxu0
        %2121 = vmatprep.mubr.bf16.mxu0 %v1131
        %2122 = vmatmul.mubr.bf16.gmra.mrb[0].mxu0 %v1077
        %v2123 = vpop.f32.mrb[0].mxu0
        %v2124 = vadd.f32 %v1567, %v2123
        %v2125 = vpop.f32.mrb[0].mxu0
        %v2126 = vpop.f32.mrb[0].mxu0
        %v2127 = vadd.f32 %v1567, %v2126
        %v2128 = vpop.f32.mrb[0].mxu0
        %2129 = vmatprep.mubr.bf16.mxu0 %v1132
        %2130 = vmatmul.mubr.bf16.gmra.mrb[0].mxu0 %v1078
        %v2131 = vpop.f32.mrb[0].mxu0
        %v2132 = vadd.f32 %v1567, %v2131
        %v2133 = vpop.f32.mrb[0].mxu0
        %v2134 = vpop.f32.mrb[0].mxu0
        %v2135 = vadd.f32 %v1567, %v2134
        %v2136 = vpop.f32.mrb[0].mxu0
        %2137 = vmatprep.mubr.bf16.mxu0 %v1133
        %2138 = vmatmul.mubr.bf16.gmra.mrb[0].mxu0 %v1079
        %v2139 = vpop.f32.mrb[0].mxu0
        %v2140 = vadd.f32 %v1567, %v2139
        %v2141 = vpop.f32.mrb[0].mxu0
        %v2142 = vpop.f32.mrb[0].mxu0
        %v2143 = vadd.f32 %v1567, %v2142
        %v2144 = vpop.f32.mrb[0].mxu0
        %2145 = vmatprep.mubr.bf16.mxu0 %v1134
        %2146 = vmatmul.mubr.bf16.gmra.mrb[0].mxu0 %v1080
        %v2147 = vpop.f32.mrb[0].mxu0
        %v2148 = vadd.f32 %v1567, %v2147
        %v2149 = vpop.f32.mrb[0].mxu0
        %v2150 = vpop.f32.mrb[0].mxu0
        %v2151 = vadd.f32 %v1567, %v2150
        %v2152 = vpop.f32.mrb[0].mxu0
        %2153 = vmatprep.mubr.bf16.mxu0 %v1135
        %2154 = vmatmul.mubr.bf16.gmra.mrb[0].mxu0 %v1081
        %v2155 = vpop.f32.mrb[0].mxu0
        %v2156 = vadd.f32 %v1567, %v2155
        %v2157 = vpop.f32.mrb[0].mxu0
        %v2158 = vpop.f32.mrb[0].mxu0
        %v2159 = vadd.f32 %v1567, %v2158
        %v2160 = vpop.f32.mrb[0].mxu0
        %2161 = vmatprep.mubr.bf16.mxu0 %v1136
        %2162 = vmatmul.mubr.bf16.gmra.mrb[0].mxu0 %v1082
        %v2163 = vpop.f32.mrb[0].mxu0
        %v2164 = vadd.f32 %v1567, %v2163
        %v2165 = vpop.f32.mrb[0].mxu0
        %v2166 = vpop.f32.mrb[0].mxu0
        %v2167 = vadd.f32 %v1567, %v2166
        %v2168 = vpop.f32.mrb[0].mxu0
        %2169 = vmatprep.mubr.bf16.mxu0 %v1137
        %2170 = vmatmul.mubr.bf16.gmra.mrb[0].mxu0 %v1083
        %v2171 = vpop.f32.mrb[0].mxu0
        %v2172 = vadd.f32 %v1567, %v2171
        %v2173 = vpop.f32.mrb[0].mxu0
        %v2174 = vpop.f32.mrb[0].mxu0
        %v2175 = vadd.f32 %v1567, %v2174
        %v2176 = vpop.f32.mrb[0].mxu0
        %2177 = vdwg.mxu0
        %2178 = vmatprep.subr.bf16.mxu0 0
        %2179 = vmatpush1.bf16.msra.mxu0 %v1873
        %2180 = vmatprep.subr.bf16.mxu0 0
        %2181 = vmatpush1.bf16.msra.mxu0 %v1874
        %2182 = vmatprep.subr.bf16.mxu0 0
        %2183 = vmatpush1.bf16.msra.mxu0 %v1875
        %2184 = vmatprep.subr.bf16.mxu0 0
        %2185 = vmatpush1.bf16.msra.mxu0 %v1876
        %2186 = vmatprep.subr.bf16.mxu0 0
        %2187 = vmatpush1.bf16.msra.mxu0 %v1877
        %2188 = vmatprep.subr.bf16.mxu0 0
        %2189 = vmatpush1.bf16.msra.mxu0 %v1878
        %2190 = vmatprep.subr.bf16.mxu0 0
        %2191 = vmatpush1.bf16.msra.mxu0 %v1879
        %2192 = vmatprep.subr.bf16.mxu0 0
        %2193 = vmatpush1.bf16.msra.mxu0 %v1880
        %2194 = vmatprep.subr.bf16.mxu0 0
        %2195 = vmatpush1.bf16.msra.mxu0 %v1881
        %2196 = vmatprep.subr.bf16.mxu0 0
        %2197 = vmatpush1.bf16.msra.mxu0 %v1882
        %2198 = vmatprep.subr.bf16.mxu0 0
        %2199 = vmatpush1.bf16.msra.mxu0 %v1883
        %2200 = vmatprep.subr.bf16.mxu0 0
        %2201 = vmatpush1.bf16.msra.mxu0 %v1884
        %2202 = vmatprep.subr.bf16.mxu0 0
        %2203 = vmatpush1.bf16.msra.mxu0 %v1885
        %2204 = vmatprep.subr.bf16.mxu0 0
        %2205 = vmatpush1.bf16.msra.mxu0 %v1886
        %2206 = vmatprep.subr.bf16.mxu0 0
        %2207 = vmatpush1.bf16.msra.mxu0 %v1887
        %2208 = vmatprep.subr.bf16.mxu0 0
        %2209 = vmatpush1.bf16.msra.mxu0 %v1888
        %2210 = vmatprep.mubr.bf16.mxu0 %v1175
        %2211 = vmatmul.mubr.bf16.gmra.mrb[0].mxu0 %v1174
        %v2212 = vpop.f32.mrb[0].mxu0
        %v2213 = vadd.f32 %v2036, %v2212
        %v2214 = vpop.f32.mrb[0].mxu0
        %v2215 = vpop.f32.mrb[0].mxu0
        %v2216 = vadd.f32 %v2039, %v2215
        %v2217 = vpop.f32.mrb[0].mxu0
        %2218 = vmatprep.mubr.bf16.mxu0 %v1176
        %2219 = vmatmul.mubr.bf16.gmra.mrb[0].mxu0 %v1175
        %v2220 = vpop.f32.mrb[0].mxu0
        %v2221 = vadd.f32 %v2044, %v2220
        %v2222 = vpop.f32.mrb[0].mxu0
        %v2223 = vpop.f32.mrb[0].mxu0
        %v2224 = vadd.f32 %v2047, %v2223
        %v2225 = vpop.f32.mrb[0].mxu0
        %2226 = vmatprep.mubr.bf16.mxu0 %v1177
        %2227 = vmatmul.mubr.bf16.gmra.mrb[0].mxu0 %v1176
        %v2228 = vpop.f32.mrb[0].mxu0
        %v2229 = vadd.f32 %v2052, %v2228
        %v2230 = vpop.f32.mrb[0].mxu0
        %v2231 = vpop.f32.mrb[0].mxu0
        %v2232 = vadd.f32 %v2055, %v2231
        %v2233 = vpop.f32.mrb[0].mxu0
        %2234 = vmatprep.mubr.bf16.mxu0 %v1178
        %2235 = vmatmul.mubr.bf16.gmra.mrb[0].mxu0 %v1177
        %v2236 = vpop.f32.mrb[0].mxu0
        %v2237 = vadd.f32 %v2060, %v2236
        %v2238 = vpop.f32.mrb[0].mxu0
        %v2239 = vpop.f32.mrb[0].mxu0
        %v2240 = vadd.f32 %v2063, %v2239
        %v2241 = vpop.f32.mrb[0].mxu0
        %2242 = vmatprep.mubr.bf16.mxu0 %v1179
        %2243 = vmatmul.mubr.bf16.gmra.mrb[0].mxu0 %v1178
        %v2244 = vpop.f32.mrb[0].mxu0
        %v2245 = vadd.f32 %v2068, %v2244
        %v2246 = vpop.f32.mrb[0].mxu0
        %v2247 = vpop.f32.mrb[0].mxu0
        %v2248 = vadd.f32 %v2071, %v2247
        %v2249 = vpop.f32.mrb[0].mxu0
        %2250 = vmatprep.mubr.bf16.mxu0 %v1180
        %2251 = vmatmul.mubr.bf16.gmra.mrb[0].mxu0 %v1179
        %v2252 = vpop.f32.mrb[0].mxu0
        %v2253 = vadd.f32 %v2076, %v2252
        %v2254 = vpop.f32.mrb[0].mxu0
        %v2255 = vpop.f32.mrb[0].mxu0
        %v2256 = vadd.f32 %v2079, %v2255
        %v2257 = vpop.f32.mrb[0].mxu0
        %2258 = vmatprep.mubr.bf16.mxu0 %v1181
        %2259 = vmatmul.mubr.bf16.gmra.mrb[0].mxu0 %v1180
        %v2260 = vpop.f32.mrb[0].mxu0
        %v2261 = vadd.f32 %v2084, %v2260
        %v2262 = vpop.f32.mrb[0].mxu0
        %v2263 = vpop.f32.mrb[0].mxu0
        %v2264 = vadd.f32 %v2087, %v2263
        %v2265 = vpop.f32.mrb[0].mxu0
        %2266 = vmatprep.mubr.bf16.mxu0 %v1182
        %2267 = vmatmul.mubr.bf16.gmra.mrb[0].mxu0 %v1181
        %v2268 = vpop.f32.mrb[0].mxu0
        %v2269 = vadd.f32 %v2092, %v2268
        %v2270 = vpop.f32.mrb[0].mxu0
        %v2271 = vpop.f32.mrb[0].mxu0
        %v2272 = vadd.f32 %v2095, %v2271
        %v2273 = vpop.f32.mrb[0].mxu0
        %2274 = vmatprep.mubr.bf16.mxu0 %v1183
        %2275 = vmatmul.mubr.bf16.gmra.mrb[0].mxu0 %v1182
        %v2276 = vpop.f32.mrb[0].mxu0
        %v2277 = vadd.f32 %v2100, %v2276
        %v2278 = vpop.f32.mrb[0].mxu0
        %v2279 = vpop.f32.mrb[0].mxu0
        %v2280 = vadd.f32 %v2103, %v2279
        %v2281 = vpop.f32.mrb[0].mxu0
        %2282 = vmatprep.mubr.bf16.mxu0 %v1184
        %2283 = vmatmul.mubr.bf16.gmra.mrb[0].mxu0 %v1183
        %v2284 = vpop.f32.mrb[0].mxu0
        %v2285 = vadd.f32 %v2108, %v2284
        %v2286 = vpop.f32.mrb[0].mxu0
        %v2287 = vpop.f32.mrb[0].mxu0
        %v2288 = vadd.f32 %v2111, %v2287
        %v2289 = vpop.f32.mrb[0].mxu0
        %2290 = vmatprep.mubr.bf16.mxu0 %v1185
        %2291 = vmatmul.mubr.bf16.gmra.mrb[0].mxu0 %v1184
        %v2292 = vpop.f32.mrb[0].mxu0
        %v2293 = vadd.f32 %v2116, %v2292
        %v2294 = vpop.f32.mrb[0].mxu0
        %v2295 = vpop.f32.mrb[0].mxu0
        %v2296 = vadd.f32 %v2119, %v2295
        %v2297 = vpop.f32.mrb[0].mxu0
        %2298 = vmatprep.mubr.bf16.mxu0 %v1186
        %2299 = vmatmul.mubr.bf16.gmra.mrb[0].mxu0 %v1185
        %v2300 = vpop.f32.mrb[0].mxu0
        %v2301 = vadd.f32 %v2124, %v2300
        %v2302 = vpop.f32.mrb[0].mxu0
        %v2303 = vpop.f32.mrb[0].mxu0
        %v2304 = vadd.f32 %v2127, %v2303
        %v2305 = vpop.f32.mrb[0].mxu0
        %2306 = vmatprep.mubr.bf16.mxu0 %v1187
        %2307 = vmatmul.mubr.bf16.gmra.mrb[0].mxu0 %v1186
        %v2308 = vpop.f32.mrb[0].mxu0
        %v2309 = vadd.f32 %v2132, %v2308
        %v2310 = vpop.f32.mrb[0].mxu0
        %v2311 = vpop.f32.mrb[0].mxu0
        %v2312 = vadd.f32 %v2135, %v2311
        %v2313 = vpop.f32.mrb[0].mxu0
        %2314 = vmatprep.mubr.bf16.mxu0 %v1188
        %2315 = vmatmul.mubr.bf16.gmra.mrb[0].mxu0 %v1187
        %v2316 = vpop.f32.mrb[0].mxu0
        %v2317 = vadd.f32 %v2140, %v2316
        %v2318 = vpop.f32.mrb[0].mxu0
        %v2319 = vpop.f32.mrb[0].mxu0
        %v2320 = vadd.f32 %v2143, %v2319
        %v2321 = vpop.f32.mrb[0].mxu0
        %2322 = vmatprep.mubr.bf16.mxu0 %v1189
        %2323 = vmatmul.mubr.bf16.gmra.mrb[0].mxu0 %v1188
        %v2324 = vpop.f32.mrb[0].mxu0
        %v2325 = vadd.f32 %v2148, %v2324
        %v2326 = vpop.f32.mrb[0].mxu0
        %v2327 = vpop.f32.mrb[0].mxu0
        %v2328 = vadd.f32 %v2151, %v2327
        %v2329 = vpop.f32.mrb[0].mxu0
        %2330 = vmatprep.mubr.bf16.mxu0 %v1190
        %2331 = vmatmul.mubr.bf16.gmra.mrb[0].mxu0 %v1189
        %v2332 = vpop.f32.mrb[0].mxu0
        %v2333 = vadd.f32 %v2156, %v2332
        %v2334 = vpop.f32.mrb[0].mxu0
        %v2335 = vpop.f32.mrb[0].mxu0
        %v2336 = vadd.f32 %v2159, %v2335
        %v2337 = vpop.f32.mrb[0].mxu0
        %2338 = vmatprep.mubr.bf16.mxu0 %v1195
        %2339 = vmatmul.mubr.bf16.gmra.mrb[0].mxu0 %v1190
        %v2340 = vpop.f32.mrb[0].mxu0
        %v2341 = vadd.f32 %v2164, %v2340
        %v2342 = vpop.f32.mrb[0].mxu0
        %v2343 = vpop.f32.mrb[0].mxu0
        %v2344 = vadd.f32 %v2167, %v2343
        %v2345 = vpop.f32.mrb[0].mxu0
        %2346 = vmatprep.mubr.bf16.mxu0 %v1196
        %2347 = vmatmul.mubr.bf16.gmra.mrb[0].mxu0 %v1191
        %v2348 = vpop.f32.mrb[0].mxu0
        %v2349 = vadd.f32 %v2172, %v2348
        %v2350 = vpop.f32.mrb[0].mxu0
        %v2351 = vpop.f32.mrb[0].mxu0
        %v2352 = vadd.f32 %v2175, %v2351
        %v2353 = vpop.f32.mrb[0].mxu0
        %2354 = vdwg.mxu0
        %2355 = vmatprep.subr.bf16.mxu0 0
        %2356 = vmatpush1.bf16.msra.mxu0 %v1889
        %2357 = vmatprep.subr.bf16.mxu0 0
        %2358 = vmatpush1.bf16.msra.mxu0 %v1890
        %2359 = vmatprep.subr.bf16.mxu0 0
        %2360 = vmatpush1.bf16.msra.mxu0 %v1891
        %2361 = vmatprep.subr.bf16.mxu0 0
        %2362 = vmatpush1.bf16.msra.mxu0 %v1892
        %2363 = vmatprep.subr.bf16.mxu0 0
        %2364 = vmatpush1.bf16.msra.mxu0 %v1893
        %2365 = vmatprep.subr.bf16.mxu0 0
        %2366 = vmatpush1.bf16.msra.mxu0 %v1894
        %2367 = vmatprep.subr.bf16.mxu0 0
        %2368 = vmatpush1.bf16.msra.mxu0 %v1895
        %2369 = vmatprep.subr.bf16.mxu0 0
        %2370 = vmatpush1.bf16.msra.mxu0 %v1896
        %2371 = vmatprep.subr.bf16.mxu0 0
        %2372 = vmatpush1.bf16.msra.mxu0 %v1897
        %2373 = vmatprep.subr.bf16.mxu0 0
        %2374 = vmatpush1.bf16.msra.mxu0 %v1898
        %2375 = vmatprep.subr.bf16.mxu0 0
        %2376 = vmatpush1.bf16.msra.mxu0 %v1899
        %2377 = vmatprep.subr.bf16.mxu0 0
        %2378 = vmatpush1.bf16.msra.mxu0 %v1900
        %2379 = vmatprep.subr.bf16.mxu0 0
        %2380 = vmatpush1.bf16.msra.mxu0 %v1901
        %2381 = vmatprep.subr.bf16.mxu0 0
        %2382 = vmatpush1.bf16.msra.mxu0 %v1902
        %2383 = vmatprep.subr.bf16.mxu0 0
        %2384 = vmatpush1.bf16.msra.mxu0 %v1903
        %2385 = vmatprep.subr.bf16.mxu0 0
        %2386 = vmatpush1.bf16.msra.mxu0 %v1904
        %2387 = vmatprep.mubr.bf16.mxu0 %v1287
        %2388 = vmatmul.mubr.bf16.gmra.mrb[0].mxu0 %v1233
        %v2389 = vpop.f32.mrb[0].mxu0
        %v2390 = vadd.f32 %v2213, %v2389
        %v2391 = vpop.f32.mrb[0].mxu0
        %v2392 = vpop.f32.mrb[0].mxu0
        %v2393 = vadd.f32 %v2216, %v2392
        %v2394 = vpop.f32.mrb[0].mxu0
        %2395 = vmatprep.mubr.bf16.mxu0 %v1288
        %2396 = vmatmul.mubr.bf16.gmra.mrb[0].mxu0 %v1234
        %v2397 = vpop.f32.mrb[0].mxu0
        %v2398 = vadd.f32 %v2221, %v2397
        %v2399 = vpop.f32.mrb[0].mxu0
        %v2400 = vpop.f32.mrb[0].mxu0
        %v2401 = vadd.f32 %v2224, %v2400
        %v2402 = vpop.f32.mrb[0].mxu0
        %2403 = vmatprep.mubr.bf16.mxu0 %v1289
        %2404 = vmatmul.mubr.bf16.gmra.mrb[0].mxu0 %v1235
        %v2405 = vpop.f32.mrb[0].mxu0
        %v2406 = vadd.f32 %v2229, %v2405
        %v2407 = vpop.f32.mrb[0].mxu0
        %v2408 = vpop.f32.mrb[0].mxu0
        %v2409 = vadd.f32 %v2232, %v2408
        %v2410 = vpop.f32.mrb[0].mxu0
        %2411 = vmatprep.mubr.bf16.mxu0 %v1290
        %2412 = vmatmul.mubr.bf16.gmra.mrb[0].mxu0 %v1236
        %v2413 = vpop.f32.mrb[0].mxu0
        %v2414 = vadd.f32 %v2237, %v2413
        %v2415 = vpop.f32.mrb[0].mxu0
        %v2416 = vpop.f32.mrb[0].mxu0
        %v2417 = vadd.f32 %v2240, %v2416
        %v2418 = vpop.f32.mrb[0].mxu0
        %2419 = vmatprep.mubr.bf16.mxu0 %v1291
        %2420 = vmatmul.mubr.bf16.gmra.mrb[0].mxu0 %v1237
        %v2421 = vpop.f32.mrb[0].mxu0
        %v2422 = vadd.f32 %v2245, %v2421
        %v2423 = vpop.f32.mrb[0].mxu0
        %v2424 = vpop.f32.mrb[0].mxu0
        %v2425 = vadd.f32 %v2248, %v2424
        %v2426 = vpop.f32.mrb[0].mxu0
        %2427 = vmatprep.mubr.bf16.mxu0 %v1292
        %2428 = vmatmul.mubr.bf16.gmra.mrb[0].mxu0 %v1238
        %v2429 = vpop.f32.mrb[0].mxu0
        %v2430 = vadd.f32 %v2253, %v2429
        %v2431 = vpop.f32.mrb[0].mxu0
        %v2432 = vpop.f32.mrb[0].mxu0
        %v2433 = vadd.f32 %v2256, %v2432
        %v2434 = vpop.f32.mrb[0].mxu0
        %2435 = vmatprep.mubr.bf16.mxu0 %v1293
        %2436 = vmatmul.mubr.bf16.gmra.mrb[0].mxu0 %v1239
        %v2437 = vpop.f32.mrb[0].mxu0
        %v2438 = vadd.f32 %v2261, %v2437
        %v2439 = vpop.f32.mrb[0].mxu0
        %v2440 = vpop.f32.mrb[0].mxu0
        %v2441 = vadd.f32 %v2264, %v2440
        %v2442 = vpop.f32.mrb[0].mxu0
        %2443 = vmatprep.mubr.bf16.mxu0 %v1294
        %2444 = vmatmul.mubr.bf16.gmra.mrb[0].mxu0 %v1240
        %v2445 = vpop.f32.mrb[0].mxu0
        %v2446 = vadd.f32 %v2269, %v2445
        %v2447 = vpop.f32.mrb[0].mxu0
        %v2448 = vpop.f32.mrb[0].mxu0
        %v2449 = vadd.f32 %v2272, %v2448
        %v2450 = vpop.f32.mrb[0].mxu0
        %2451 = vmatprep.mubr.bf16.mxu0 %v1295
        %2452 = vmatmul.mubr.bf16.gmra.mrb[0].mxu0 %v1241
        %v2453 = vpop.f32.mrb[0].mxu0
        %v2454 = vadd.f32 %v2277, %v2453
        %v2455 = vpop.f32.mrb[0].mxu0
        %v2456 = vpop.f32.mrb[0].mxu0
        %v2457 = vadd.f32 %v2280, %v2456
        %v2458 = vpop.f32.mrb[0].mxu0
        %2459 = vmatprep.mubr.bf16.mxu0 %v1296
        %2460 = vmatmul.mubr.bf16.gmra.mrb[0].mxu0 %v1242
        %v2461 = vpop.f32.mrb[0].mxu0
        %v2462 = vadd.f32 %v2285, %v2461
        %v2463 = vpop.f32.mrb[0].mxu0
        %v2464 = vpop.f32.mrb[0].mxu0
        %v2465 = vadd.f32 %v2288, %v2464
        %v2466 = vpop.f32.mrb[0].mxu0
        %2467 = vmatprep.mubr.bf16.mxu0 %v1297
        %2468 = vmatmul.mubr.bf16.gmra.mrb[0].mxu0 %v1243
        %v2469 = vpop.f32.mrb[0].mxu0
        %v2470 = vadd.f32 %v2293, %v2469
        %v2471 = vpop.f32.mrb[0].mxu0
        %v2472 = vpop.f32.mrb[0].mxu0
        %v2473 = vadd.f32 %v2296, %v2472
        %v2474 = vpop.f32.mrb[0].mxu0
        %2475 = vmatprep.mubr.bf16.mxu0 %v1298
        %2476 = vmatmul.mubr.bf16.gmra.mrb[0].mxu0 %v1244
        %v2477 = vpop.f32.mrb[0].mxu0
        %v2478 = vadd.f32 %v2301, %v2477
        %v2479 = vpop.f32.mrb[0].mxu0
        %v2480 = vpop.f32.mrb[0].mxu0
        %v2481 = vadd.f32 %v2304, %v2480
        %v2482 = vpop.f32.mrb[0].mxu0
        %2483 = vmatprep.mubr.bf16.mxu0 %v1299
        %2484 = vmatmul.mubr.bf16.gmra.mrb[0].mxu0 %v1245
        %v2485 = vpop.f32.mrb[0].mxu0
        %v2486 = vadd.f32 %v2309, %v2485
        %v2487 = vpop.f32.mrb[0].mxu0
        %v2488 = vpop.f32.mrb[0].mxu0
        %v2489 = vadd.f32 %v2312, %v2488
        %v2490 = vpop.f32.mrb[0].mxu0
        %2491 = vmatprep.mubr.bf16.mxu0 %v1300
        %2492 = vmatmul.mubr.bf16.gmra.mrb[0].mxu0 %v1246
        %v2493 = vpop.f32.mrb[0].mxu0
        %v2494 = vadd.f32 %v2317, %v2493
        %v2495 = vpop.f32.mrb[0].mxu0
        %v2496 = vpop.f32.mrb[0].mxu0
        %v2497 = vadd.f32 %v2320, %v2496
        %v2498 = vpop.f32.mrb[0].mxu0
        %2499 = vmatprep.mubr.bf16.mxu0 %v1301
        %2500 = vmatmul.mubr.bf16.gmra.mrb[0].mxu0 %v1247
        %v2501 = vpop.f32.mrb[0].mxu0
        %v2502 = vadd.f32 %v2325, %v2501
        %v2503 = vpop.f32.mrb[0].mxu0
        %v2504 = vpop.f32.mrb[0].mxu0
        %v2505 = vadd.f32 %v2328, %v2504
        %v2506 = vpop.f32.mrb[0].mxu0
        %2507 = vmatprep.mubr.bf16.mxu0 %v1302
        %2508 = vmatmul.mubr.bf16.gmra.mrb[0].mxu0 %v1248
        %v2509 = vpop.f32.mrb[0].mxu0
        %v2510 = vadd.f32 %v2333, %v2509
        %v2511 = vpop.f32.mrb[0].mxu0
        %v2512 = vpop.f32.mrb[0].mxu0
        %v2513 = vadd.f32 %v2336, %v2512
        %v2514 = vpop.f32.mrb[0].mxu0
        %2515 = vmatprep.mubr.bf16.mxu0 %v1303
        %2516 = vmatmul.mubr.bf16.gmra.mrb[0].mxu0 %v1249
        %v2517 = vpop.f32.mrb[0].mxu0
        %v2518 = vadd.f32 %v2341, %v2517
        %v2519 = vpop.f32.mrb[0].mxu0
        %v2520 = vpop.f32.mrb[0].mxu0
        %v2521 = vadd.f32 %v2344, %v2520
        %v2522 = vpop.f32.mrb[0].mxu0
        %2523 = vmatprep.mubr.bf16.mxu0 %v1304
        %2524 = vmatmul.mubr.bf16.gmra.mrb[0].mxu0 %v1250
        %v2525 = vpop.f32.mrb[0].mxu0
        %v2526 = vadd.f32 %v2349, %v2525
        %v2527 = vpop.f32.mrb[0].mxu0
        %v2528 = vpop.f32.mrb[0].mxu0
        %v2529 = vadd.f32 %v2352, %v2528
        %v2530 = vpop.f32.mrb[0].mxu0
        %2531 = vdwg.mxu0
        %2532 = vmatprep.subr.bf16.mxu0 0
        %2533 = vmatpush1.bf16.msra.mxu0 %v1905
        %2534 = vmatprep.subr.bf16.mxu0 0
        %2535 = vmatpush1.bf16.msra.mxu0 %v1906
        %2536 = vmatprep.subr.bf16.mxu0 0
        %2537 = vmatpush1.bf16.msra.mxu0 %v1907
        %2538 = vmatprep.subr.bf16.mxu0 0
        %2539 = vmatpush1.bf16.msra.mxu0 %v1908
        %2540 = vmatprep.subr.bf16.mxu0 0
        %2541 = vmatpush1.bf16.msra.mxu0 %v1909
        %2542 = vmatprep.subr.bf16.mxu0 0
        %2543 = vmatpush1.bf16.msra.mxu0 %v1910
        %2544 = vmatprep.subr.bf16.mxu0 0
        %2545 = vmatpush1.bf16.msra.mxu0 %v1911
        %2546 = vmatprep.subr.bf16.mxu0 0
        %2547 = vmatpush1.bf16.msra.mxu0 %v1912
        %2548 = vmatprep.subr.bf16.mxu0 0
        %2549 = vmatpush1.bf16.msra.mxu0 %v1913
        %2550 = vmatprep.subr.bf16.mxu0 0
        %2551 = vmatpush1.bf16.msra.mxu0 %v1914
        %2552 = vmatprep.subr.bf16.mxu0 0
        %2553 = vmatpush1.bf16.msra.mxu0 %v1915
        %2554 = vmatprep.subr.bf16.mxu0 0
        %2555 = vmatpush1.bf16.msra.mxu0 %v1916
        %2556 = vmatprep.subr.bf16.mxu0 0
        %2557 = vmatpush1.bf16.msra.mxu0 %v1917
        %2558 = vmatprep.subr.bf16.mxu0 0
        %2559 = vmatpush1.bf16.msra.mxu0 %v1918
        %2560 = vmatprep.subr.bf16.mxu0 0
        %2561 = vmatpush1.bf16.msra.mxu0 %v1919
        %2562 = vmatprep.subr.bf16.mxu0 0
        %2563 = vmatpush1.bf16.msra.mxu0 %v1920
        %2564 = vmatprep.mubr.bf16.mxu0 %v1346
        %2565 = vmatmul.mubr.bf16.gmra.mrb[0].mxu0 %v1288
        %v2566 = vpop.f32.mrb[0].mxu0
        %v2567 = vadd.f32 %v2390, %v2566
        %v2568 = vpop.f32.mrb[0].mxu0
        %v2569 = vpop.f32.mrb[0].mxu0
        %v2570 = vadd.f32 %v2393, %v2569
        %v2571 = vpop.f32.mrb[0].mxu0
        %2572 = vmatprep.mubr.bf16.mxu0 %v1347
        %2573 = vmatmul.mubr.bf16.gmra.mrb[0].mxu0 %v1289
        %v2574 = vpop.f32.mrb[0].mxu0
        %v2575 = vadd.f32 %v2398, %v2574
        %v2576 = vpop.f32.mrb[0].mxu0
        %v2577 = vpop.f32.mrb[0].mxu0
        %v2578 = vadd.f32 %v2401, %v2577
        %v2579 = vpop.f32.mrb[0].mxu0
        %2580 = vmatprep.mubr.bf16.mxu0 %v1348
        %2581 = vmatmul.mubr.bf16.gmra.mrb[0].mxu0 %v1290
        %v2582 = vpop.f32.mrb[0].mxu0
        %v2583 = vadd.f32 %v2406, %v2582
        %v2584 = vpop.f32.mrb[0].mxu0
        %v2585 = vpop.f32.mrb[0].mxu0
        %v2586 = vadd.f32 %v2409, %v2585
        %v2587 = vpop.f32.mrb[0].mxu0
        %2588 = vmatprep.mubr.bf16.mxu0 %v1349
        %2589 = vmatmul.mubr.bf16.gmra.mrb[0].mxu0 %v1291
        %v2590 = vpop.f32.mrb[0].mxu0
        %v2591 = vadd.f32 %v2414, %v2590
        %v2592 = vpop.f32.mrb[0].mxu0
        %v2593 = vpop.f32.mrb[0].mxu0
        %v2594 = vadd.f32 %v2417, %v2593
        %v2595 = vpop.f32.mrb[0].mxu0
        %2596 = vmatprep.mubr.bf16.mxu0 %v1350
        %2597 = vmatmul.mubr.bf16.gmra.mrb[0].mxu0 %v1292
        %v2598 = vpop.f32.mrb[0].mxu0
        %v2599 = vadd.f32 %v2422, %v2598
        %v2600 = vpop.f32.mrb[0].mxu0
        %v2601 = vpop.f32.mrb[0].mxu0
        %v2602 = vadd.f32 %v2425, %v2601
        %v2603 = vpop.f32.mrb[0].mxu0
        %2604 = vmatprep.mubr.bf16.mxu0 %v1351
        %2605 = vmatmul.mubr.bf16.gmra.mrb[0].mxu0 %v1293
        %v2606 = vpop.f32.mrb[0].mxu0
        %v2607 = vadd.f32 %v2430, %v2606
        %v2608 = vpop.f32.mrb[0].mxu0
        %v2609 = vpop.f32.mrb[0].mxu0
        %v2610 = vadd.f32 %v2433, %v2609
        %v2611 = vpop.f32.mrb[0].mxu0
        %2612 = vmatprep.mubr.bf16.mxu0 %v1352
        %2613 = vmatmul.mubr.bf16.gmra.mrb[0].mxu0 %v1294
        %v2614 = vpop.f32.mrb[0].mxu0
        %v2615 = vadd.f32 %v2438, %v2614
        %v2616 = vpop.f32.mrb[0].mxu0
        %v2617 = vpop.f32.mrb[0].mxu0
        %v2618 = vadd.f32 %v2441, %v2617
        %v2619 = vpop.f32.mrb[0].mxu0
        %2620 = vmatprep.mubr.bf16.mxu0 %v1353
        %2621 = vmatmul.mubr.bf16.gmra.mrb[0].mxu0 %v1295
        %v2622 = vpop.f32.mrb[0].mxu0
        %v2623 = vadd.f32 %v2446, %v2622
        %v2624 = vpop.f32.mrb[0].mxu0
        %v2625 = vpop.f32.mrb[0].mxu0
        %v2626 = vadd.f32 %v2449, %v2625
        %v2627 = vpop.f32.mrb[0].mxu0
        %2628 = vmatprep.mubr.bf16.mxu0 %v1354
        %2629 = vmatmul.mubr.bf16.gmra.mrb[0].mxu0 %v1296
        %v2630 = vpop.f32.mrb[0].mxu0
        %v2631 = vadd.f32 %v2454, %v2630
        %v2632 = vpop.f32.mrb[0].mxu0
        %v2633 = vpop.f32.mrb[0].mxu0
        %v2634 = vadd.f32 %v2457, %v2633
        %v2635 = vpop.f32.mrb[0].mxu0
        %2636 = vmatprep.mubr.bf16.mxu0 %v1355
        %2637 = vmatmul.mubr.bf16.gmra.mrb[0].mxu0 %v1297
        %v2638 = vpop.f32.mrb[0].mxu0
        %v2639 = vadd.f32 %v2462, %v2638
        %v2640 = vpop.f32.mrb[0].mxu0
        %v2641 = vpop.f32.mrb[0].mxu0
        %v2642 = vadd.f32 %v2465, %v2641
        %v2643 = vpop.f32.mrb[0].mxu0
        %2644 = vmatprep.mubr.bf16.mxu0 %v1356
        %2645 = vmatmul.mubr.bf16.gmra.mrb[0].mxu0 %v1298
        %v2646 = vpop.f32.mrb[0].mxu0
        %v2647 = vadd.f32 %v2470, %v2646
        %v2648 = vpop.f32.mrb[0].mxu0
        %v2649 = vpop.f32.mrb[0].mxu0
        %v2650 = vadd.f32 %v2473, %v2649
        %v2651 = vpop.f32.mrb[0].mxu0
        %2652 = vmatprep.mubr.bf16.mxu0 %v1357
        %2653 = vmatmul.mubr.bf16.gmra.mrb[0].mxu0 %v1299
        %v2654 = vpop.f32.mrb[0].mxu0
        %v2655 = vadd.f32 %v2478, %v2654
        %v2656 = vpop.f32.mrb[0].mxu0
        %v2657 = vpop.f32.mrb[0].mxu0
        %v2658 = vadd.f32 %v2481, %v2657
        %v2659 = vpop.f32.mrb[0].mxu0
        %2660 = vmatprep.mubr.bf16.mxu0 %v1358
        %2661 = vmatmul.mubr.bf16.gmra.mrb[0].mxu0 %v1300
        %v2662 = vpop.f32.mrb[0].mxu0
        %v2663 = vadd.f32 %v2486, %v2662
        %v2664 = vpop.f32.mrb[0].mxu0
        %v2665 = vpop.f32.mrb[0].mxu0
        %v2666 = vadd.f32 %v2489, %v2665
        %v2667 = vpop.f32.mrb[0].mxu0
        %2668 = vmatprep.mubr.bf16.mxu0 %v1359
        %2669 = vmatmul.mubr.bf16.gmra.mrb[0].mxu0 %v1301
        %v2670 = vpop.f32.mrb[0].mxu0
        %v2671 = vadd.f32 %v2494, %v2670
        %v2672 = vpop.f32.mrb[0].mxu0
        %v2673 = vpop.f32.mrb[0].mxu0
        %v2674 = vadd.f32 %v2497, %v2673
        %v2675 = vpop.f32.mrb[0].mxu0
        %2676 = vmatprep.mubr.bf16.mxu0 %v1360
        %2677 = vmatmul.mubr.bf16.gmra.mrb[0].mxu0 %v1302
        %v2678 = vpop.f32.mrb[0].mxu0
        %v2679 = vadd.f32 %v2502, %v2678
        %v2680 = vpop.f32.mrb[0].mxu0
        %v2681 = vpop.f32.mrb[0].mxu0
        %v2682 = vadd.f32 %v2505, %v2681
        %v2683 = vpop.f32.mrb[0].mxu0
        %2684 = vmatprep.mubr.bf16.mxu0 %v1361
        %2685 = vmatmul.mubr.bf16.gmra.mrb[0].mxu0 %v1303
        %v2686 = vpop.f32.mrb[0].mxu0
        %v2687 = vadd.f32 %v2510, %v2686
        %v2688 = vpop.f32.mrb[0].mxu0
        %v2689 = vpop.f32.mrb[0].mxu0
        %v2690 = vadd.f32 %v2513, %v2689
        %v2691 = vpop.f32.mrb[0].mxu0
        %2692 = vmatprep.mubr.bf16.mxu0 %v1362
        %2693 = vmatmul.mubr.bf16.gmra.mrb[0].mxu0 %v1308
        %v2694 = vpop.f32.mrb[0].mxu0
        %v2695 = vadd.f32 %v2518, %v2694
        %v2696 = vpop.f32.mrb[0].mxu0
        %v2697 = vpop.f32.mrb[0].mxu0
        %v2698 = vadd.f32 %v2521, %v2697
        %v2699 = vpop.f32.mrb[0].mxu0
        %2700 = vmatprep.mubr.bf16.mxu0 %v1363
        %2701 = vmatmul.mubr.bf16.gmra.mrb[0].mxu0 %v1309
        %v2702 = vpop.f32.mrb[0].mxu0
        %v2703 = vadd.f32 %v2526, %v2702
        %v2704 = vpop.f32.mrb[0].mxu0
        %v2705 = vpop.f32.mrb[0].mxu0
        %v2706 = vadd.f32 %v2529, %v2705
        %v2707 = vpop.f32.mrb[0].mxu0
        %2708 = vdwg.mxu0
        %2709 = vmatprep.subr.bf16.mxu0 0
        %2710 = vmatpush1.bf16.msra.mxu0 %v1921
        %2711 = vmatprep.subr.bf16.mxu0 0
        %2712 = vmatpush1.bf16.msra.mxu0 %v1922
        %2713 = vmatprep.subr.bf16.mxu0 0
        %2714 = vmatpush1.bf16.msra.mxu0 %v1923
        %2715 = vmatprep.subr.bf16.mxu0 0
        %2716 = vmatpush1.bf16.msra.mxu0 %v1924
        %2717 = vmatprep.subr.bf16.mxu0 0
        %2718 = vmatpush1.bf16.msra.mxu0 %v1925
        %2719 = vmatprep.subr.bf16.mxu0 0
        %2720 = vmatpush1.bf16.msra.mxu0 %v1926
        %2721 = vmatprep.subr.bf16.mxu0 0
        %2722 = vmatpush1.bf16.msra.mxu0 %v1927
        %2723 = vmatprep.subr.bf16.mxu0 0
        %2724 = vmatpush1.bf16.msra.mxu0 %v1928
        %2725 = vmatprep.subr.bf16.mxu0 0
        %2726 = vmatpush1.bf16.msra.mxu0 0
        %2727 = vmatprep.subr.bf16.mxu0 0
        %2728 = vmatpush1.bf16.msra.mxu0 0
        %2729 = vmatprep.subr.bf16.mxu0 0
        %2730 = vmatpush1.bf16.msra.mxu0 0
        %2731 = vmatprep.subr.bf16.mxu0 0
        %2732 = vmatpush1.bf16.msra.mxu0 0
        %2733 = vmatprep.subr.bf16.mxu0 0
        %2734 = vmatpush1.bf16.msra.mxu0 0
        %2735 = vmatprep.subr.bf16.mxu0 0
        %2736 = vmatpush1.bf16.msra.mxu0 0
        %2737 = vmatprep.subr.bf16.mxu0 0
        %2738 = vmatpush1.bf16.msra.mxu0 0
        %2739 = vmatprep.subr.bf16.mxu0 0
        %2740 = vmatpush1.bf16.msra.mxu0 0
        %2741 = vmatprep.mubr.bf16.mxu0 0
        %2742 = vmatmul.mubr.bf16.gmra.mrb[0].mxu0 %v1400
        %v2743 = vpop.f32.mrb[0].mxu0
        %v2744 = vadd.f32 %v2567, %v2743
        %v2745 = vpop.f32.mrb[0].mxu0
        %v2746 = vpop.f32.mrb[0].mxu0
        %v2747 = vadd.f32 %v2570, %v2746
        %v2748 = vpop.f32.mrb[0].mxu0
        %2749 = vmatprep.mubr.bf16.mxu0 0
        %2750 = vmatmul.mubr.bf16.gmra.mrb[0].mxu0 %v1401
        %v2751 = vpop.f32.mrb[0].mxu0
        %v2752 = vadd.f32 %v2575, %v2751
        %v2753 = vpop.f32.mrb[0].mxu0
        %v2754 = vpop.f32.mrb[0].mxu0
        %v2755 = vadd.f32 %v2578, %v2754
        %v2756 = vpop.f32.mrb[0].mxu0
        %2757 = vmatprep.mubr.bf16.mxu0 0
        %2758 = vmatmul.mubr.bf16.gmra.mrb[0].mxu0 %v1402
        %v2759 = vpop.f32.mrb[0].mxu0
        %v2760 = vadd.f32 %v2583, %v2759
        %v2761 = vpop.f32.mrb[0].mxu0
        %v2762 = vpop.f32.mrb[0].mxu0
        %v2763 = vadd.f32 %v2586, %v2762
        %v2764 = vpop.f32.mrb[0].mxu0
        %2765 = vmatprep.mubr.bf16.mxu0 0
        %2766 = vmatmul.mubr.bf16.gmra.mrb[0].mxu0 %v1403
        %v2767 = vpop.f32.mrb[0].mxu0
        %v2768 = vadd.f32 %v2591, %v2767
        %v2769 = vpop.f32.mrb[0].mxu0
        %v2770 = vpop.f32.mrb[0].mxu0
        %v2771 = vadd.f32 %v2594, %v2770
        %v2772 = vpop.f32.mrb[0].mxu0
        %2773 = vmatprep.mubr.bf16.mxu0 0
        %2774 = vmatmul.mubr.bf16.gmra.mrb[0].mxu0 %v1404
        %v2775 = vpop.f32.mrb[0].mxu0
        %v2776 = vadd.f32 %v2599, %v2775
        %v2777 = vpop.f32.mrb[0].mxu0
        %v2778 = vpop.f32.mrb[0].mxu0
        %v2779 = vadd.f32 %v2602, %v2778
        %v2780 = vpop.f32.mrb[0].mxu0
        %2781 = vmatprep.mubr.bf16.mxu0 0
        %2782 = vmatmul.mubr.bf16.gmra.mrb[0].mxu0 %v1405
        %v2783 = vpop.f32.mrb[0].mxu0
        %v2784 = vadd.f32 %v2607, %v2783
        %v2785 = vpop.f32.mrb[0].mxu0
        %v2786 = vpop.f32.mrb[0].mxu0
        %v2787 = vadd.f32 %v2610, %v2786
        %v2788 = vpop.f32.mrb[0].mxu0
        %2789 = vmatprep.mubr.bf16.mxu0 0
        %2790 = vmatmul.mubr.bf16.gmra.mrb[0].mxu0 %v1406
        %v2791 = vpop.f32.mrb[0].mxu0
        %v2792 = vadd.f32 %v2615, %v2791
        %v2793 = vpop.f32.mrb[0].mxu0
        %v2794 = vpop.f32.mrb[0].mxu0
        %v2795 = vadd.f32 %v2618, %v2794
        %v2796 = vpop.f32.mrb[0].mxu0
        %2797 = vmatprep.mubr.bf16.mxu0 0
        %2798 = vmatmul.mubr.bf16.gmra.mrb[0].mxu0 %v1407
        %v2799 = vpop.f32.mrb[0].mxu0
        %v2800 = vadd.f32 %v2623, %v2799
        %v2801 = vpop.f32.mrb[0].mxu0
        %v2802 = vpop.f32.mrb[0].mxu0
        %v2803 = vadd.f32 %v2626, %v2802
        %v2804 = vpop.f32.mrb[0].mxu0
        %2805 = vmatprep.mubr.bf16.mxu0 0
        %2806 = vmatmul.mubr.bf16.gmra.mrb[0].mxu0 %v1408
        %v2807 = vpop.f32.mrb[0].mxu0
        %v2808 = vadd.f32 %v2631, %v2807
        %v2809 = vpop.f32.mrb[0].mxu0
        %v2810 = vpop.f32.mrb[0].mxu0
        %v2811 = vadd.f32 %v2634, %v2810
        %v2812 = vpop.f32.mrb[0].mxu0
        %2813 = vmatprep.mubr.bf16.mxu0 0
        %2814 = vmatmul.mubr.bf16.gmra.mrb[0].mxu0 %v1409
        %v2815 = vpop.f32.mrb[0].mxu0
        %v2816 = vadd.f32 %v2639, %v2815
        %v2817 = vpop.f32.mrb[0].mxu0
        %v2818 = vpop.f32.mrb[0].mxu0
        %v2819 = vadd.f32 %v2642, %v2818
        %v2820 = vpop.f32.mrb[0].mxu0
        %2821 = vmatprep.mubr.bf16.mxu0 0
        %2822 = vmatmul.mubr.bf16.gmra.mrb[0].mxu0 %v1410
        %v2823 = vpop.f32.mrb[0].mxu0
        %v2824 = vadd.f32 %v2647, %v2823
        %v2825 = vpop.f32.mrb[0].mxu0
        %v2826 = vpop.f32.mrb[0].mxu0
        %v2827 = vadd.f32 %v2650, %v2826
        %v2828 = vpop.f32.mrb[0].mxu0
        %2829 = vmatprep.mubr.bf16.mxu0 0
        %2830 = vmatmul.mubr.bf16.gmra.mrb[0].mxu0 %v1411
        %v2831 = vpop.f32.mrb[0].mxu0
        %v2832 = vadd.f32 %v2655, %v2831
        %v2833 = vpop.f32.mrb[0].mxu0
        %v2834 = vpop.f32.mrb[0].mxu0
        %v2835 = vadd.f32 %v2658, %v2834
        %v2836 = vpop.f32.mrb[0].mxu0
        %2837 = vmatprep.mubr.bf16.mxu0 0
        %2838 = vmatmul.mubr.bf16.gmra.mrb[0].mxu0 %v1412
        %v2839 = vpop.f32.mrb[0].mxu0
        %v2840 = vadd.f32 %v2663, %v2839
        %v2841 = vpop.f32.mrb[0].mxu0
        %v2842 = vpop.f32.mrb[0].mxu0
        %v2843 = vadd.f32 %v2666, %v2842
        %v2844 = vpop.f32.mrb[0].mxu0
        %2845 = vmatprep.mubr.bf16.mxu0 0
        %2846 = vmatmul.mubr.bf16.gmra.mrb[0].mxu0 %v1413
        %v2847 = vpop.f32.mrb[0].mxu0
        %v2848 = vadd.f32 %v2671, %v2847
        %v2849 = vpop.f32.mrb[0].mxu0
        %v2850 = vpop.f32.mrb[0].mxu0
        %v2851 = vadd.f32 %v2674, %v2850
        %v2852 = vpop.f32.mrb[0].mxu0
        %2853 = vmatprep.mubr.bf16.mxu0 0
        %2854 = vmatmul.mubr.bf16.gmra.mrb[0].mxu0 %v1414
        %v2855 = vpop.f32.mrb[0].mxu0
        %v2856 = vadd.f32 %v2679, %v2855
        %v2857 = vpop.f32.mrb[0].mxu0
        %v2858 = vpop.f32.mrb[0].mxu0
        %v2859 = vadd.f32 %v2682, %v2858
        %v2860 = vpop.f32.mrb[0].mxu0
        %2861 = vmatprep.mubr.bf16.mxu0 0
        %2862 = vmatmul.mubr.bf16.gmra.mrb[0].mxu0 %v1415
        %v2863 = vpop.f32.mrb[0].mxu0
        %v2864 = vadd.f32 %v2687, %v2863
        %v2865 = vpop.f32.mrb[0].mxu0
        %v2866 = vpop.f32.mrb[0].mxu0
        %v2867 = vadd.f32 %v2690, %v2866
        %v2868 = vpop.f32.mrb[0].mxu0
        %2869 = vmatprep.mubr.bf16.mxu0 0
        %2870 = vmatmul.mubr.bf16.gmra.mrb[0].mxu0 %v1416
        %v2871 = vpop.f32.mrb[0].mxu0
        %v2872 = vadd.f32 %v2695, %v2871
        %v2873 = vpop.f32.mrb[0].mxu0
        %v2874 = vpop.f32.mrb[0].mxu0
        %v2875 = vadd.f32 %v2698, %v2874
        %v2876 = vpop.f32.mrb[0].mxu0
        %2877 = vmatprep.mubr.bf16.mxu0 0
        %2878 = vmatmul.mubr.bf16.gmra.mrb[0].mxu0 %v1417
        %v2879 = vpop.f32.mrb[0].mxu0
        %v2880 = vadd.f32 %v2703, %v2879
        %v2881 = vpop.f32.mrb[0].mxu0
        %v2882 = vpop.f32.mrb[0].mxu0
        %v2883 = vadd.f32 %v2706, %v2882
        %v2884 = vpop.f32.mrb[0].mxu0
        %2885 = vdwg.mxu0
        %v2886 = vmax.f32 %v2744, 0.0
        %v2887 = vmax.f32 %v2747, 0.0
        %v2888 = vmax.f32 %v2752, 0.0
        %v2889 = vmax.f32 %v2755, 0.0
        %v2890 = vmax.f32 %v2760, 0.0
        %v2891 = vmax.f32 %v2763, 0.0
        %v2892 = vmax.f32 %v2768, 0.0
        %v2893 = vmax.f32 %v2771, 0.0
        %v2894 = vmax.f32 %v2776, 0.0
        %v2895 = vmax.f32 %v2779, 0.0
        %v2896 = vmax.f32 %v2784, 0.0
        %v2897 = vmax.f32 %v2787, 0.0
        %v2898 = vmax.f32 %v2792, 0.0
        %v2899 = vmax.f32 %v2795, 0.0
        %v2900 = vmax.f32 %v2800, 0.0
        %v2901 = vmax.f32 %v2803, 0.0
        %v2902 = vmax.f32 %v2808, 0.0
        %v2903 = vmax.f32 %v2811, 0.0
        %v2904 = vmax.f32 %v2816, 0.0
        %v2905 = vmax.f32 %v2819, 0.0
        %v2906 = vmax.f32 %v2824, 0.0
        %v2907 = vmax.f32 %v2827, 0.0
        %v2908 = vmax.f32 %v2832, 0.0
        %v2909 = vmax.f32 %v2835, 0.0
        %v2910 = vmax.f32 %v2840, 0.0
        %v2911 = vmax.f32 %v2843, 0.0
        %v2912 = vmax.f32 %v2848, 0.0
        %v2913 = vmax.f32 %v2851, 0.0
        %v2914 = vmax.f32 %v2856, 0.0
        %v2915 = vmax.f32 %v2859, 0.0
        %v2916 = vmax.f32 %v2864, 0.0
        %v2917 = vmax.f32 %v2867, 0.0
        %v2918 = vmax.f32 %v2872, 0.0
        %v2919 = vmax.f32 %v2875, 0.0
        %v2920 = vmax.f32 %v2880, 0.0
        %v2921 = vmax.f32 %v2883, 0.0
        %v2922 = vsel %vm994, 1, 0
        %v2923 = vsel %vm995, 1, 0
        %v2924 = vsel %vm996, 1, 0
        %v2925 = vsel %vm997, 1, 0
        %v2926 = vsel %vm998, 1, 0
        %v2927 = vsel %vm999, 1, 0
        %v2928 = vsel %vm1000, 1, 0
        %v2929 = vsel %vm1001, 1, 0
        %v2930 = vsel %vm1002, 1, 0
        %v2931 = vsel %vm1003, 1, 0
        %v2932 = vsel %vm1004, 1, 0
        %v2933 = vsel %vm1005, 1, 0
        %v2934 = vsel %vm1006, 1, 0
        %v2935 = vsel %vm1007, 1, 0
        %v2936 = vsel %vm1008, 1, 0
        %v2937 = vsel %vm1009, 1, 0
        %v2938 = vsel %vm1010, 1, 0
        %v2939 = vsel %vm1011, 1, 0
        %v2940 = vsel %vm1012, 1, 0
        %v2941 = vsel %vm1013, 1, 0
        %v2942 = vsel %vm1014, 1, 0
        %v2943 = vsel %vm1015, 1, 0
        %v2944 = vsel %vm1016, 1, 0
        %v2945 = vsel %vm1017, 1, 0
        %v2946 = vsel %vm1018, 1, 0
        %v2947 = vsel %vm1019, 1, 0
        %v2948 = vsel %vm1020, 1, 0
        %v2949 = vsel %vm1021, 1, 0
        %v2950 = vsel %vm1022, 1, 0
        %v2951 = vsel %vm1023, 1, 0
        %v2952 = vsel %vm1024, 1, 0
        %v2953 = vsel %vm1025, 1, 0
        %v2954 = vsel %vm1026, 1, 0
        %v2955 = vsel %vm1027, 1, 0
        %v2956 = vsel %vm1028, 1, 0
        %v2957 = vsel %vm1029, 1, 0
        %vm2958 = vcmp.eq.s32.totalorder %v2922, 1
        %vm2959 = vcmp.eq.s32.totalorder %v2923, 1
        %vm2960 = vcmp.eq.s32.totalorder %v2924, 1
        %vm2961 = vcmp.eq.s32.totalorder %v2925, 1
        %vm2962 = vcmp.eq.s32.totalorder %v2926, 1
        %vm2963 = vcmp.eq.s32.totalorder %v2927, 1
        %vm2964 = vcmp.eq.s32.totalorder %v2928, 1
        %vm2965 = vcmp.eq.s32.totalorder %v2929, 1
        %vm2966 = vcmp.eq.s32.totalorder %v2930, 1
        %vm2967 = vcmp.eq.s32.totalorder %v2931, 1
        %vm2968 = vcmp.eq.s32.totalorder %v2932, 1
        %vm2969 = vcmp.eq.s32.totalorder %v2933, 1
        %vm2970 = vcmp.eq.s32.totalorder %v2934, 1
        %vm2971 = vcmp.eq.s32.totalorder %v2935, 1
        %vm2972 = vcmp.eq.s32.totalorder %v2936, 1
        %vm2973 = vcmp.eq.s32.totalorder %v2937, 1
        %vm2974 = vcmp.eq.s32.totalorder %v2938, 1
        %vm2975 = vcmp.eq.s32.totalorder %v2939, 1
        %vm2976 = vcmp.eq.s32.totalorder %v2940, 1
        %vm2977 = vcmp.eq.s32.totalorder %v2941, 1
        %vm2978 = vcmp.eq.s32.totalorder %v2942, 1
        %vm2979 = vcmp.eq.s32.totalorder %v2943, 1
        %vm2980 = vcmp.eq.s32.totalorder %v2944, 1
        %vm2981 = vcmp.eq.s32.totalorder %v2945, 1
        %vm2982 = vcmp.eq.s32.totalorder %v2946, 1
        %vm2983 = vcmp.eq.s32.totalorder %v2947, 1
        %vm2984 = vcmp.eq.s32.totalorder %v2948, 1
        %vm2985 = vcmp.eq.s32.totalorder %v2949, 1
        %vm2986 = vcmp.eq.s32.totalorder %v2950, 1
        %vm2987 = vcmp.eq.s32.totalorder %v2951, 1
        %vm2988 = vcmp.eq.s32.totalorder %v2952, 1
        %vm2989 = vcmp.eq.s32.totalorder %v2953, 1
        %vm2990 = vcmp.eq.s32.totalorder %v2954, 1
        %vm2991 = vcmp.eq.s32.totalorder %v2955, 1
        %vm2992 = vcmp.eq.s32.totalorder %v2956, 1
        %vm2993 = vcmp.eq.s32.totalorder %v2957, 1
        %v2994 = vsel %vm2958, %v2886, 0.0
        %v2995 = vsel %vm2959, %v2887, 0.0
        %v2996 = vsel %vm2960, %v2888, 0.0
        %v2997 = vsel %vm2961, %v2889, 0.0
        %v2998 = vsel %vm2962, %v2890, 0.0
        %v2999 = vsel %vm2963, %v2891, 0.0
        %v3000 = vsel %vm2964, %v2892, 0.0
        %v3001 = vsel %vm2965, %v2893, 0.0
        %v3002 = vsel %vm2966, %v2894, 0.0
        %v3003 = vsel %vm2967, %v2895, 0.0
        %v3004 = vsel %vm2968, %v2896, 0.0
        %v3005 = vsel %vm2969, %v2897, 0.0
        %v3006 = vsel %vm2970, %v2898, 0.0
        %v3007 = vsel %vm2971, %v2899, 0.0
        %v3008 = vsel %vm2972, %v2900, 0.0
        %v3009 = vsel %vm2973, %v2901, 0.0
        %v3010 = vsel %vm2974, %v2902, 0.0
        %v3011 = vsel %vm2975, %v2903, 0.0
        %v3012 = vsel %vm2976, %v2904, 0.0
        %v3013 = vsel %vm2977, %v2905, 0.0
        %v3014 = vsel %vm2978, %v2906, 0.0
        %v3015 = vsel %vm2979, %v2907, 0.0
        %v3016 = vsel %vm2980, %v2908, 0.0
        %v3017 = vsel %vm2981, %v2909, 0.0
        %v3018 = vsel %vm2982, %v2910, 0.0
        %v3019 = vsel %vm2983, %v2911, 0.0
        %v3020 = vsel %vm2984, %v2912, 0.0
        %v3021 = vsel %vm2985, %v2913, 0.0
        %v3022 = vsel %vm2986, %v2914, 0.0
        %v3023 = vsel %vm2987, %v2915, 0.0
        %v3024 = vsel %vm2988, %v2916, 0.0
        %v3025 = vsel %vm2989, %v2917, 0.0
        %v3026 = vsel %vm2990, %v2918, 0.0
        %v3027 = vsel %vm2991, %v2919, 0.0
        %v3028 = vsel %vm2992, %v2920, 0.0
        %v3029 = vsel %vm2993, %v2921, 0.0
        %3030 = vst [vmem:[#allocation2] sm:$0xf] 0
        %3031 = vst [vmem:[#allocation2 + $0x4] sm:$0xf] 0
        %vm3032 = vcmask 1041408
        %vm3033 = vsmask.f32 1280
        %vm3034 = vmand %vm3032, %vm3033
        %v3035 = vld [vmem:[#allocation2 + $0x8] sm:$0x3]
        %v3036 = vsel %vm3034, 0, %v3035
        %3037 = vst [vmem:[#allocation2 + $0x8] sm:$0x3] %v3036
        %vm3038 = vcmask 1043456
        %vm3039 = vsmask.f32 7938
        %vm3040 = vmand %vm3038, %vm3039
        %v3041 = vld [vmem:[#allocation2 + $0x98] sm:$0xf]
        %v3042 = vsel %vm3040, 0, %v3041
        %3043 = vst [vmem:[#allocation2 + $0x98] sm:$0xf] %v3042
        %3044 = vst [vmem:[#allocation2 + $0x9c] sm:$0xf] 0
        %3045 = vst [vmem:[#allocation2 + $0xa0] sm:$0xf] 0
        %v3046 = vpack.c.bf16 %v2995, %v2994
        %v3047 = vpack.c.bf16 %v2997, %v2996
        %v3048 = vpack.c.bf16 %v2999, %v2998
        %v3049 = vpack.c.bf16 %v3001, %v3000
        %v3050 = vpack.c.bf16 %v3003, %v3002
        %v3051 = vpack.c.bf16 %v3005, %v3004
        %v3052 = vpack.c.bf16 %v3007, %v3006
        %v3053 = vpack.c.bf16 %v3009, %v3008
        %v3054 = vpack.c.bf16 %v3011, %v3010
        %v3055 = vpack.c.bf16 %v3013, %v3012
        %v3056 = vpack.c.bf16 %v3015, %v3014
        %v3057 = vpack.c.bf16 %v3017, %v3016
        %v3058 = vpack.c.bf16 %v3019, %v3018
        %v3059 = vpack.c.bf16 %v3021, %v3020
        %v3060 = vpack.c.bf16 %v3023, %v3022
        %v3061 = vpack.c.bf16 %v3025, %v3024
        %v3062 = vpack.c.bf16 %v3027, %v3026
        %v3063 = vpack.c.bf16 %v3029, %v3028
        %v3082 = vunpack.c.l.b16 %v3046
        %v3083 = vunpack.c.h.b16 %v3046
        %v3084 = vunpack.c.l.b16 %v3047
        %v3085 = vunpack.c.h.b16 %v3047
        %v3086 = vunpack.c.l.b16 %v3048
        %v3087 = vunpack.c.h.b16 %v3048
        %v3088 = vunpack.c.l.b16 %v3049
        %v3089 = vunpack.c.h.b16 %v3049
        %v3090 = vunpack.c.l.b16 %v3050
        %v3091 = vunpack.c.h.b16 %v3050
        %v3092 = vunpack.c.l.b16 %v3051
        %v3093 = vunpack.c.h.b16 %v3051
        %v3094 = vunpack.c.l.b16 %v3052
        %v3095 = vunpack.c.h.b16 %v3052
        %v3096 = vunpack.c.l.b16 %v3053
        %v3097 = vunpack.c.h.b16 %v3053
        %v3098 = vunpack.c.l.b16 %v3054
        %v3099 = vunpack.c.h.b16 %v3054
        %v3100 = vunpack.c.l.b16 %v3055
        %v3101 = vunpack.c.h.b16 %v3055
        %v3102 = vunpack.c.l.b16 %v3056
        %v3103 = vunpack.c.h.b16 %v3056
        %v3104 = vunpack.c.l.b16 %v3057
        %v3105 = vunpack.c.h.b16 %v3057
        %v3106 = vunpack.c.l.b16 %v3058
        %v3107 = vunpack.c.h.b16 %v3058
        %v3108 = vunpack.c.l.b16 %v3059
        %v3109 = vunpack.c.h.b16 %v3059
        %v3110 = vunpack.c.l.b16 %v3060
        %v3111 = vunpack.c.h.b16 %v3060
        %v3112 = vunpack.c.l.b16 %v3061
        %v3113 = vunpack.c.h.b16 %v3061
        %v3114 = vunpack.c.l.b16 %v3062
        %v3115 = vunpack.c.h.b16 %v3062
        %v3116 = vunpack.c.l.b16 %v3063
        %v3117 = vunpack.c.h.b16 %v3063
        %v3118 = vpack.c.b16 %v3082, %v3082
        %v3119 = vpack.c.b16 %v3083, %v3083
        %v3120 = vpack.c.b16 %v3084, %v3084
        %v3121 = vpack.c.b16 %v3085, %v3085
        %v3122 = vpack.c.b16 %v3086, %v3086
        %v3123 = vpack.c.b16 %v3087, %v3087
        %v3124 = vpack.c.b16 %v3088, %v3088
        %v3125 = vpack.c.b16 %v3089, %v3089
        %v3126 = vpack.c.b16 %v3090, %v3090
        %v3127 = vpack.c.b16 %v3091, %v3091
        %v3128 = vpack.c.b16 %v3092, %v3092
        %v3129 = vpack.c.b16 %v3093, %v3093
        %v3130 = vpack.c.b16 %v3094, %v3094
        %v3131 = vpack.c.b16 %v3095, %v3095
        %v3132 = vpack.c.b16 %v3096, %v3096
        %v3133 = vpack.c.b16 %v3097, %v3097
        %v3134 = vpack.c.b16 %v3098, %v3098
        %v3135 = vpack.c.b16 %v3099, %v3099
        %v3136 = vpack.c.b16 %v3100, %v3100
        %v3137 = vpack.c.b16 %v3101, %v3101
        %v3138 = vpack.c.b16 %v3102, %v3102
        %v3139 = vpack.c.b16 %v3103, %v3103
        %v3140 = vpack.c.b16 %v3104, %v3104
        %v3141 = vpack.c.b16 %v3105, %v3105
        %v3142 = vpack.c.b16 %v3106, %v3106
        %v3143 = vpack.c.b16 %v3107, %v3107
        %v3144 = vpack.c.b16 %v3108, %v3108
        %v3145 = vpack.c.b16 %v3109, %v3109
        %v3146 = vpack.c.b16 %v3110, %v3110
        %v3147 = vpack.c.b16 %v3111, %v3111
        %v3148 = vpack.c.b16 %v3112, %v3112
        %v3149 = vpack.c.b16 %v3113, %v3113
        %v3150 = vpack.c.b16 %v3114, %v3114
        %v3151 = vpack.c.b16 %v3115, %v3115
        %v3152 = vpack.c.b16 %v3116, %v3116
        %v3153 = vpack.c.b16 %v3117, %v3117
        %vm3154 = vsmask.f32 5392
        %vm3155 = vmor %vm3033, %vm3154
        %v3157 = vshrl.u32 %v3118, 16
        %v3159 = vrot.slane %v3157, 6
        %v3160 = vshll.u32 %v3118, 16
        %v3162 = vrot.slane %v3160, 7
        %v3163 = vor.u32 %v3159, %v3162
        %v3164 = vrot.slane %v3163, 4
        %v3166 = vshrl.u32 %v3119, 16
        %v3168 = vrot.slane %v3166, 6
        %v3169 = vshll.u32 %v3119, 16
        %v3171 = vrot.slane %v3169, 7
        %v3172 = vor.u32 %v3168, %v3171
        %v3173 = vsel %vm3155, %v3164, %v3172
        %v3174 = vrot.slane %v3172, 4
        %v3176 = vshrl.u32 %v3120, 16
        %v3178 = vrot.slane %v3176, 6
        %v3179 = vshll.u32 %v3120, 16
        %v3181 = vrot.slane %v3179, 7
        %v3182 = vor.u32 %v3178, %v3181
        %v3183 = vsel %vm3155, %v3174, %v3182
        %v3184 = vrot.slane %v3182, 4
        %v3186 = vshrl.u32 %v3121, 16
        %v3188 = vrot.slane %v3186, 6
        %v3189 = vshll.u32 %v3121, 16
        %v3191 = vrot.slane %v3189, 7
        %v3192 = vor.u32 %v3188, %v3191
        %v3193 = vsel %vm3155, %v3184, %v3192
        %v3194 = vrot.slane %v3192, 4
        %v3196 = vshrl.u32 %v3122, 16
        %v3198 = vrot.slane %v3196, 6
        %v3199 = vshll.u32 %v3122, 16
        %v3201 = vrot.slane %v3199, 7
        %v3202 = vor.u32 %v3198, %v3201
        %v3203 = vsel %vm3155, %v3194, %v3202
        %v3204 = vrot.slane %v3202, 4
        %v3206 = vshrl.u32 %v3123, 16
        %v3208 = vrot.slane %v3206, 6
        %v3209 = vshll.u32 %v3123, 16
        %v3211 = vrot.slane %v3209, 7
        %v3212 = vor.u32 %v3208, %v3211
        %v3213 = vsel %vm3155, %v3204, %v3212
        %v3214 = vrot.slane %v3212, 4
        %v3216 = vshrl.u32 %v3124, 16
        %v3218 = vrot.slane %v3216, 6
        %v3219 = vshll.u32 %v3124, 16
        %v3221 = vrot.slane %v3219, 7
        %v3222 = vor.u32 %v3218, %v3221
        %v3223 = vsel %vm3155, %v3214, %v3222
        %v3224 = vrot.slane %v3222, 4
        %v3226 = vshrl.u32 %v3125, 16
        %v3228 = vrot.slane %v3226, 6
        %v3229 = vshll.u32 %v3125, 16
        %v3231 = vrot.slane %v3229, 7
        %v3232 = vor.u32 %v3228, %v3231
        %v3233 = vsel %vm3155, %v3224, %v3232
        %v3234 = vrot.slane %v3232, 4
        %v3236 = vshrl.u32 %v3126, 16
        %v3238 = vrot.slane %v3236, 6
        %v3239 = vshll.u32 %v3126, 16
        %v3241 = vrot.slane %v3239, 7
        %v3242 = vor.u32 %v3238, %v3241
        %v3243 = vsel %vm3155, %v3234, %v3242
        %v3244 = vrot.slane %v3242, 4
        %v3246 = vshrl.u32 %v3127, 16
        %v3248 = vrot.slane %v3246, 6
        %v3249 = vshll.u32 %v3127, 16
        %v3251 = vrot.slane %v3249, 7
        %v3252 = vor.u32 %v3248, %v3251
        %v3253 = vsel %vm3155, %v3244, %v3252
        %v3254 = vrot.slane %v3252, 4
        %v3256 = vshrl.u32 %v3128, 16
        %v3258 = vrot.slane %v3256, 6
        %v3259 = vshll.u32 %v3128, 16
        %v3261 = vrot.slane %v3259, 7
        %v3262 = vor.u32 %v3258, %v3261
        %v3263 = vsel %vm3155, %v3254, %v3262
        %v3264 = vrot.slane %v3262, 4
        %v3266 = vshrl.u32 %v3129, 16
        %v3268 = vrot.slane %v3266, 6
        %v3269 = vshll.u32 %v3129, 16
        %v3271 = vrot.slane %v3269, 7
        %v3272 = vor.u32 %v3268, %v3271
        %v3273 = vsel %vm3155, %v3264, %v3272
        %v3274 = vrot.slane %v3272, 4
        %v3276 = vshrl.u32 %v3130, 16
        %v3278 = vrot.slane %v3276, 6
        %v3279 = vshll.u32 %v3130, 16
        %v3281 = vrot.slane %v3279, 7
        %v3282 = vor.u32 %v3278, %v3281
        %v3283 = vsel %vm3155, %v3274, %v3282
        %v3284 = vrot.slane %v3282, 4
        %v3286 = vshrl.u32 %v3131, 16
        %v3288 = vrot.slane %v3286, 6
        %v3289 = vshll.u32 %v3131, 16
        %v3291 = vrot.slane %v3289, 7
        %v3292 = vor.u32 %v3288, %v3291
        %v3293 = vsel %vm3155, %v3284, %v3292
        %v3294 = vrot.slane %v3292, 4
        %v3296 = vshrl.u32 %v3132, 16
        %v3298 = vrot.slane %v3296, 6
        %v3299 = vshll.u32 %v3132, 16
        %v3301 = vrot.slane %v3299, 7
        %v3302 = vor.u32 %v3298, %v3301
        %v3303 = vsel %vm3155, %v3294, %v3302
        %v3304 = vrot.slane %v3302, 4
        %v3306 = vshrl.u32 %v3133, 16
        %v3308 = vrot.slane %v3306, 6
        %v3309 = vshll.u32 %v3133, 16
        %v3311 = vrot.slane %v3309, 7
        %v3312 = vor.u32 %v3308, %v3311
        %v3313 = vsel %vm3155, %v3304, %v3312
        %v3314 = vrot.slane %v3312, 4
        %v3316 = vshrl.u32 %v3134, 16
        %v3318 = vrot.slane %v3316, 6
        %v3319 = vshll.u32 %v3134, 16
        %v3321 = vrot.slane %v3319, 7
        %v3322 = vor.u32 %v3318, %v3321
        %v3323 = vsel %vm3155, %v3314, %v3322
        %v3324 = vrot.slane %v3322, 4
        %v3326 = vshrl.u32 %v3135, 16
        %v3328 = vrot.slane %v3326, 6
        %v3329 = vshll.u32 %v3135, 16
        %v3331 = vrot.slane %v3329, 7
        %v3332 = vor.u32 %v3328, %v3331
        %v3333 = vsel %vm3155, %v3324, %v3332
        %v3334 = vrot.slane %v3332, 4
        %v3336 = vshrl.u32 %v3136, 16
        %v3338 = vrot.slane %v3336, 6
        %v3339 = vshll.u32 %v3136, 16
        %v3341 = vrot.slane %v3339, 7
        %v3342 = vor.u32 %v3338, %v3341
        %v3343 = vsel %vm3155, %v3334, %v3342
        %v3344 = vrot.slane %v3342, 4
        %v3346 = vshrl.u32 %v3137, 16
        %v3348 = vrot.slane %v3346, 6
        %v3349 = vshll.u32 %v3137, 16
        %v3351 = vrot.slane %v3349, 7
        %v3352 = vor.u32 %v3348, %v3351
        %v3353 = vsel %vm3155, %v3344, %v3352
        %v3354 = vrot.slane %v3352, 4
        %v3356 = vshrl.u32 %v3138, 16
        %v3358 = vrot.slane %v3356, 6
        %v3359 = vshll.u32 %v3138, 16
        %v3361 = vrot.slane %v3359, 7
        %v3362 = vor.u32 %v3358, %v3361
        %v3363 = vsel %vm3155, %v3354, %v3362
        %v3364 = vrot.slane %v3362, 4
        %v3366 = vshrl.u32 %v3139, 16
        %v3368 = vrot.slane %v3366, 6
        %v3369 = vshll.u32 %v3139, 16
        %v3371 = vrot.slane %v3369, 7
        %v3372 = vor.u32 %v3368, %v3371
        %v3373 = vsel %vm3155, %v3364, %v3372
        %v3374 = vrot.slane %v3372, 4
        %v3376 = vshrl.u32 %v3140, 16
        %v3378 = vrot.slane %v3376, 6
        %v3379 = vshll.u32 %v3140, 16
        %v3381 = vrot.slane %v3379, 7
        %v3382 = vor.u32 %v3378, %v3381
        %v3383 = vsel %vm3155, %v3374, %v3382
        %v3384 = vrot.slane %v3382, 4
        %v3386 = vshrl.u32 %v3141, 16
        %v3388 = vrot.slane %v3386, 6
        %v3389 = vshll.u32 %v3141, 16
        %v3391 = vrot.slane %v3389, 7
        %v3392 = vor.u32 %v3388, %v3391
        %v3393 = vsel %vm3155, %v3384, %v3392
        %v3394 = vrot.slane %v3392, 4
        %v3396 = vshrl.u32 %v3142, 16
        %v3398 = vrot.slane %v3396, 6
        %v3399 = vshll.u32 %v3142, 16
        %v3401 = vrot.slane %v3399, 7
        %v3402 = vor.u32 %v3398, %v3401
        %v3403 = vsel %vm3155, %v3394, %v3402
        %v3404 = vrot.slane %v3402, 4
        %v3406 = vshrl.u32 %v3143, 16
        %v3408 = vrot.slane %v3406, 6
        %v3409 = vshll.u32 %v3143, 16
        %v3411 = vrot.slane %v3409, 7
        %v3412 = vor.u32 %v3408, %v3411
        %v3413 = vsel %vm3155, %v3404, %v3412
        %v3414 = vrot.slane %v3412, 4
        %v3416 = vshrl.u32 %v3144, 16
        %v3418 = vrot.slane %v3416, 6
        %v3419 = vshll.u32 %v3144, 16
        %v3421 = vrot.slane %v3419, 7
        %v3422 = vor.u32 %v3418, %v3421
        %v3423 = vsel %vm3155, %v3414, %v3422
        %v3424 = vrot.slane %v3422, 4
        %v3426 = vshrl.u32 %v3145, 16
        %v3428 = vrot.slane %v3426, 6
        %v3429 = vshll.u32 %v3145, 16
        %v3431 = vrot.slane %v3429, 7
        %v3432 = vor.u32 %v3428, %v3431
        %v3433 = vsel %vm3155, %v3424, %v3432
        %v3434 = vrot.slane %v3432, 4
        %v3436 = vshrl.u32 %v3146, 16
        %v3438 = vrot.slane %v3436, 6
        %v3439 = vshll.u32 %v3146, 16
        %v3441 = vrot.slane %v3439, 7
        %v3442 = vor.u32 %v3438, %v3441
        %v3443 = vsel %vm3155, %v3434, %v3442
        %v3444 = vrot.slane %v3442, 4
        %v3446 = vshrl.u32 %v3147, 16
        %v3448 = vrot.slane %v3446, 6
        %v3449 = vshll.u32 %v3147, 16
        %v3451 = vrot.slane %v3449, 7
        %v3452 = vor.u32 %v3448, %v3451
        %v3453 = vsel %vm3155, %v3444, %v3452
        %v3454 = vrot.slane %v3452, 4
        %v3456 = vshrl.u32 %v3148, 16
        %v3458 = vrot.slane %v3456, 6
        %v3459 = vshll.u32 %v3148, 16
        %v3461 = vrot.slane %v3459, 7
        %v3462 = vor.u32 %v3458, %v3461
        %v3463 = vsel %vm3155, %v3454, %v3462
        %v3464 = vrot.slane %v3462, 4
        %v3466 = vshrl.u32 %v3149, 16
        %v3468 = vrot.slane %v3466, 6
        %v3469 = vshll.u32 %v3149, 16
        %v3471 = vrot.slane %v3469, 7
        %v3472 = vor.u32 %v3468, %v3471
        %v3473 = vsel %vm3155, %v3464, %v3472
        %v3474 = vrot.slane %v3472, 4
        %v3476 = vshrl.u32 %v3150, 16
        %v3478 = vrot.slane %v3476, 6
        %v3479 = vshll.u32 %v3150, 16
        %v3481 = vrot.slane %v3479, 7
        %v3482 = vor.u32 %v3478, %v3481
        %v3483 = vsel %vm3155, %v3474, %v3482
        %v3484 = vrot.slane %v3482, 4
        %v3486 = vshrl.u32 %v3151, 16
        %v3488 = vrot.slane %v3486, 6
        %v3489 = vshll.u32 %v3151, 16
        %v3491 = vrot.slane %v3489, 7
        %v3492 = vor.u32 %v3488, %v3491
        %v3493 = vsel %vm3155, %v3484, %v3492
        %v3494 = vrot.slane %v3492, 4
        %v3496 = vshrl.u32 %v3152, 16
        %v3498 = vrot.slane %v3496, 6
        %v3499 = vshll.u32 %v3152, 16
        %v3501 = vrot.slane %v3499, 7
        %v3502 = vor.u32 %v3498, %v3501
        %v3503 = vsel %vm3155, %v3494, %v3502
        %v3504 = vrot.slane %v3502, 4
        %v3506 = vshrl.u32 %v3153, 16
        %v3508 = vrot.slane %v3506, 6
        %v3509 = vshll.u32 %v3153, 16
        %v3511 = vrot.slane %v3509, 7
        %v3512 = vor.u32 %v3508, %v3511
        %v3513 = vsel %vm3155, %v3504, %v3512
        %v3514 = vrot.slane %v3508, 4
        %vm3552 = vcmask 1043457
        %vm3553 = vsmask.f32 7942
        %vm3554 = vmand %vm3552, %vm3553
        %v3555 = vld [vmem:[#allocation2 + $0x8] sm:$0xe]
        %v3556 = vsel %vm3554, %v3163, %v3555
        %3557 = vst [vmem:[#allocation2 + $0x8] sm:$0xe] %v3556
        %3558 = vst [vmem:[#allocation2 + $0xc] sm:$0xf] %v3173
        %3559 = vst [vmem:[#allocation2 + $0x10] sm:$0xf] %v3183
        %3560 = vst [vmem:[#allocation2 + $0x14] sm:$0xf] %v3193
        %3561 = vst [vmem:[#allocation2 + $0x18] sm:$0xf] %v3203
        %3562 = vst [vmem:[#allocation2 + $0x1c] sm:$0xf] %v3213
        %3563 = vst [vmem:[#allocation2 + $0x20] sm:$0xf] %v3223
        %3564 = vst [vmem:[#allocation2 + $0x24] sm:$0xf] %v3233
        %3565 = vst [vmem:[#allocation2 + $0x28] sm:$0xf] %v3243
        %3566 = vst [vmem:[#allocation2 + $0x2c] sm:$0xf] %v3253
        %3567 = vst [vmem:[#allocation2 + $0x30] sm:$0xf] %v3263
        %3568 = vst [vmem:[#allocation2 + $0x34] sm:$0xf] %v3273
        %3569 = vst [vmem:[#allocation2 + $0x38] sm:$0xf] %v3283
        %3570 = vst [vmem:[#allocation2 + $0x3c] sm:$0xf] %v3293
        %3571 = vst [vmem:[#allocation2 + $0x40] sm:$0xf] %v3303
        %3572 = vst [vmem:[#allocation2 + $0x44] sm:$0xf] %v3313
        %3573 = vst [vmem:[#allocation2 + $0x48] sm:$0xf] %v3323
        %3574 = vst [vmem:[#allocation2 + $0x4c] sm:$0xf] %v3333
        %3575 = vst [vmem:[#allocation2 + $0x50] sm:$0xf] %v3343
        %3576 = vst [vmem:[#allocation2 + $0x54] sm:$0xf] %v3353
        %3577 = vst [vmem:[#allocation2 + $0x58] sm:$0xf] %v3363
        %3578 = vst [vmem:[#allocation2 + $0x5c] sm:$0xf] %v3373
        %3579 = vst [vmem:[#allocation2 + $0x60] sm:$0xf] %v3383
        %3580 = vst [vmem:[#allocation2 + $0x64] sm:$0xf] %v3393
        %3581 = vst [vmem:[#allocation2 + $0x68] sm:$0xf] %v3403
        %3582 = vst [vmem:[#allocation2 + $0x6c] sm:$0xf] %v3413
        %3583 = vst [vmem:[#allocation2 + $0x70] sm:$0xf] %v3423
        %3584 = vst [vmem:[#allocation2 + $0x74] sm:$0xf] %v3433
        %3585 = vst [vmem:[#allocation2 + $0x78] sm:$0xf] %v3443
        %3586 = vst [vmem:[#allocation2 + $0x7c] sm:$0xf] %v3453
        %3587 = vst [vmem:[#allocation2 + $0x80] sm:$0xf] %v3463
        %3588 = vst [vmem:[#allocation2 + $0x84] sm:$0xf] %v3473
        %3589 = vst [vmem:[#allocation2 + $0x88] sm:$0xf] %v3483
        %3590 = vst [vmem:[#allocation2 + $0x8c] sm:$0xf] %v3493
        %3591 = vst [vmem:[#allocation2 + $0x90] sm:$0xf] %v3503
        %3592 = vst [vmem:[#allocation2 + $0x94] sm:$0xf] %v3513
        %vm3593 = vcmask 1040384
        %vm3594 = vsmask.f32 256
        %vm3595 = vmand %vm3593, %vm3594
        %v3596 = vld [vmem:[#allocation2 + $0x98] sm:$0x1]
        %v3597 = vsel %vm3595, %v3514, %v3596
        %3598 = vst [vmem:[#allocation2 + $0x98] sm:$0x1] %v3597
        %v3599 = vld [vmem:[#allocation2] sm:$0xf]
        %v3600 = vld [vmem:[#allocation2 + $0x4] sm:$0xf]
        %v3601 = vld [vmem:[#allocation2 + $0x8] sm:$0xf]
        %v3602 = vld [vmem:[#allocation2 + $0xc] sm:$0xf]
        %v3603 = vld [vmem:[#allocation2 + $0x10] sm:$0xf]
        %v3604 = vld [vmem:[#allocation2 + $0x14] sm:$0xf]
        %v3605 = vld [vmem:[#allocation2 + $0x18] sm:$0xf]
        %v3606 = vld [vmem:[#allocation2 + $0x1c] sm:$0xf]
        %v3607 = vld [vmem:[#allocation2 + $0x20] sm:$0xf]
        %v3608 = vld [vmem:[#allocation2 + $0x24] sm:$0xf]
        %v3609 = vld [vmem:[#allocation2 + $0x28] sm:$0xf]
        %v3610 = vld [vmem:[#allocation2 + $0x2c] sm:$0xf]
        %v3611 = vld [vmem:[#allocation2 + $0x30] sm:$0xf]
        %v3612 = vld [vmem:[#allocation2 + $0x34] sm:$0xf]
        %v3613 = vld [vmem:[#allocation2 + $0x38] sm:$0xf]
        %v3614 = vld [vmem:[#allocation2 + $0x3c] sm:$0xf]
        %v3615 = vld [vmem:[#allocation2 + $0x40] sm:$0xf]
        %v3616 = vld [vmem:[#allocation2 + $0x44] sm:$0xf]
        %v3617 = vld [vmem:[#allocation2 + $0x48] sm:$0xf]
        %v3618 = vld [vmem:[#allocation2 + $0x4c] sm:$0xf]
        %v3619 = vld [vmem:[#allocation2 + $0x50] sm:$0xf]
        %v3620 = vld [vmem:[#allocation2 + $0x54] sm:$0xf]
        %v3621 = vld [vmem:[#allocation2 + $0x58] sm:$0xf]
        %v3622 = vld [vmem:[#allocation2 + $0x5c] sm:$0xf]
        %v3623 = vld [vmem:[#allocation2 + $0x60] sm:$0xf]
        %v3624 = vld [vmem:[#allocation2 + $0x64] sm:$0xf]
        %v3625 = vld [vmem:[#allocation2 + $0x68] sm:$0xf]
        %v3626 = vld [vmem:[#allocation2 + $0x6c] sm:$0xf]
        %v3627 = vld [vmem:[#allocation2 + $0x70] sm:$0xf]
        %v3628 = vld [vmem:[#allocation2 + $0x74] sm:$0xf]
        %v3629 = vld [vmem:[#allocation2 + $0x78] sm:$0xf]
        %v3630 = vld [vmem:[#allocation2 + $0x7c] sm:$0xf]
        %v3631 = vld [vmem:[#allocation2 + $0x80] sm:$0xf]
        %v3632 = vld [vmem:[#allocation2 + $0x84] sm:$0xf]
        %v3633 = vld [vmem:[#allocation2 + $0x88] sm:$0xf]
        %v3634 = vld [vmem:[#allocation2 + $0x8c] sm:$0x7]
        %v3635 = vld [vmem:[#allocation2 + $0x8c] sm:$0xf]
        %v3636 = vld [vmem:[#allocation2] sm:$0xe]
        %v3637 = vld [vmem:[#allocation2 + $0x8] sm:$0xe]
        %v3638 = vld [vmem:[#allocation2 + $0x90] sm:$0xf]
        %v3639 = vld [vmem:[#allocation2 + $0x94] sm:$0xf]
        %v3640 = vld [vmem:[#allocation2 + $0x98] sm:$0x1]
        %v3641 = vld [vmem:[#allocation2 + $0x8] sm:$0xc]
        %v3642 = vld [vmem:[#allocation2 + $0x10] sm:$0xc]
        %v3643 = vld [vmem:[#allocation2 + $0x14] sm:$0xf]
        %v3644 = vld [vmem:[#allocation2 + $0x18] sm:$0xf]
        %v3645 = vld [vmem:[#allocation2 + $0x1c] sm:$0xf]
        %v3646 = vld [vmem:[#allocation2 + $0x20] sm:$0xf]
        %v3647 = vld [vmem:[#allocation2 + $0x24] sm:$0xf]
        %v3648 = vld [vmem:[#allocation2 + $0x28] sm:$0xf]
        %v3649 = vld [vmem:[#allocation2 + $0x2c] sm:$0xf]
        %v3650 = vld [vmem:[#allocation2 + $0x30] sm:$0xf]
        %v3651 = vld [vmem:[#allocation2 + $0x34] sm:$0xf]
        %v3652 = vld [vmem:[#allocation2 + $0x38] sm:$0xf]
        %v3653 = vld [vmem:[#allocation2 + $0x3c] sm:$0xf]
        %v3654 = vld [vmem:[#allocation2 + $0x40] sm:$0xf]
        %v3655 = vld [vmem:[#allocation2 + $0x44] sm:$0xf]
        %v3656 = vld [vmem:[#allocation2 + $0x48] sm:$0xf]
        %v3657 = vld [vmem:[#allocation2 + $0x4c] sm:$0xf]
        %v3658 = vld [vmem:[#allocation2 + $0x50] sm:$0xf]
        %v3659 = vld [vmem:[#allocation2 + $0x54] sm:$0xf]
        %v3660 = vld [vmem:[#allocation2 + $0x58] sm:$0xf]
        %v3661 = vld [vmem:[#allocation2 + $0x5c] sm:$0xf]
        %v3662 = vld [vmem:[#allocation2 + $0x60] sm:$0xf]
        %v3663 = vld [vmem:[#allocation2 + $0x64] sm:$0xf]
        %v3664 = vld [vmem:[#allocation2 + $0x68] sm:$0xf]
        %v3665 = vld [vmem:[#allocation2 + $0x6c] sm:$0xf]
        %v3666 = vld [vmem:[#allocation2 + $0x70] sm:$0xf]
        %v3667 = vld [vmem:[#allocation2 + $0x74] sm:$0xf]
        %v3668 = vld [vmem:[#allocation2 + $0x78] sm:$0xf]
        %v3669 = vld [vmem:[#allocation2 + $0x7c] sm:$0xf]
        %v3670 = vld [vmem:[#allocation2 + $0x80] sm:$0xf]
        %v3671 = vld [vmem:[#allocation2 + $0x84] sm:$0xf]
        %v3672 = vld [vmem:[#allocation2 + $0x88] sm:$0xf]
        %v3673 = vld [vmem:[#allocation2 + $0x8c] sm:$0xf]
        %v3674 = vld [vmem:[#allocation2 + $0x90] sm:$0xf]
        %v3675 = vld [vmem:[#allocation2 + $0x94] sm:$0xf]
        %v3676 = vld [vmem:[#allocation2 + $0x98] sm:$0xf]
        %v3677 = vld [vmem:[#allocation2 + $0x9c] sm:$0xf]
        %v3678 = vld [vmem:[#allocation2 + $0xa0] sm:$0x1]
        %v3679 = vld [vmem:[#allocation2 + $0xa0] sm:$0x3]
        %v3680 = vld [vmem:[#allocation2 + $0x10] sm:$0x8]
        %v3717 = vunpack.c.l.b16 %v3599
        %v3718 = vunpack.c.l.b16 %v3600
        %v3719 = vunpack.c.l.b16 %v3601
        %v3720 = vunpack.c.l.b16 %v3602
        %v3721 = vunpack.c.l.b16 %v3603
        %v3722 = vunpack.c.l.b16 %v3604
        %v3723 = vunpack.c.l.b16 %v3605
        %v3724 = vunpack.c.l.b16 %v3606
        %v3725 = vunpack.c.l.b16 %v3607
        %v3726 = vunpack.c.l.b16 %v3608
        %v3727 = vunpack.c.l.b16 %v3609
        %v3728 = vunpack.c.l.b16 %v3610
        %v3729 = vunpack.c.l.b16 %v3611
        %v3730 = vunpack.c.l.b16 %v3612
        %v3731 = vunpack.c.l.b16 %v3613
        %v3732 = vunpack.c.l.b16 %v3614
        %v3733 = vunpack.c.l.b16 %v3615
        %v3734 = vunpack.c.l.b16 %v3616
        %v3735 = vunpack.c.l.b16 %v3617
        %v3736 = vunpack.c.l.b16 %v3618
        %v3737 = vunpack.c.l.b16 %v3619
        %v3738 = vunpack.c.l.b16 %v3620
        %v3739 = vunpack.c.l.b16 %v3621
        %v3740 = vunpack.c.l.b16 %v3622
        %v3741 = vunpack.c.l.b16 %v3623
        %v3742 = vunpack.c.l.b16 %v3624
        %v3743 = vunpack.c.l.b16 %v3625
        %v3744 = vunpack.c.l.b16 %v3626
        %v3745 = vunpack.c.l.b16 %v3627
        %v3746 = vunpack.c.l.b16 %v3628
        %v3747 = vunpack.c.l.b16 %v3629
        %v3748 = vunpack.c.l.b16 %v3630
        %v3749 = vunpack.c.l.b16 %v3631
        %v3750 = vunpack.c.l.b16 %v3632
        %v3751 = vunpack.c.l.b16 %v3633
        %v3752 = vunpack.c.l.b16 %v3634
        %v3753 = vpack.c.b16 %v3718, %v3717
        %v3754 = vpack.c.b16 %v3720, %v3719
        %v3755 = vpack.c.b16 %v3722, %v3721
        %v3756 = vpack.c.b16 %v3724, %v3723
        %v3757 = vpack.c.b16 %v3726, %v3725
        %v3758 = vpack.c.b16 %v3728, %v3727
        %v3759 = vpack.c.b16 %v3730, %v3729
        %v3760 = vpack.c.b16 %v3732, %v3731
        %v3761 = vpack.c.b16 %v3734, %v3733
        %v3762 = vpack.c.b16 %v3736, %v3735
        %v3763 = vpack.c.b16 %v3738, %v3737
        %v3764 = vpack.c.b16 %v3740, %v3739
        %v3765 = vpack.c.b16 %v3742, %v3741
        %v3766 = vpack.c.b16 %v3744, %v3743
        %v3767 = vpack.c.b16 %v3746, %v3745
        %v3768 = vpack.c.b16 %v3748, %v3747
        %v3769 = vpack.c.b16 %v3750, %v3749
        %v3770 = vpack.c.b16 %v3752, %v3751
        %v3790 = vunpack.c.l.b16 %v3635
        %v3791 = vpack.c.b16 %v3790, %v3751
        %vm3792 = vsmask.f32 7424
        %v3794 = vshrl.u32 %v3753, 16
        %v3796 = vshll.u32 %v3753, 16
        %v3798 = vrot.slane %v3796, 1
        %v3799 = vor.u32 %v3794, %v3798
        %v3801 = vshll.u32 %v3754, 16
        %v3803 = vrot.slane %v3801, 1
        %v3804 = vsel %vm3792, %v3799, %v3803
        %v3805 = vshrl.u32 %v3754, 16
        %v3807 = vor.u32 %v3805, %v3803
        %v3809 = vshll.u32 %v3755, 16
        %v3811 = vrot.slane %v3809, 1
        %v3812 = vsel %vm3792, %v3807, %v3811
        %v3813 = vshrl.u32 %v3755, 16
        %v3815 = vor.u32 %v3813, %v3811
        %v3817 = vshll.u32 %v3756, 16
        %v3819 = vrot.slane %v3817, 1
        %v3820 = vsel %vm3792, %v3815, %v3819
        %v3821 = vshrl.u32 %v3756, 16
        %v3823 = vor.u32 %v3821, %v3819
        %v3825 = vshll.u32 %v3757, 16
        %v3827 = vrot.slane %v3825, 1
        %v3828 = vsel %vm3792, %v3823, %v3827
        %v3829 = vshrl.u32 %v3757, 16
        %v3831 = vor.u32 %v3829, %v3827
        %v3833 = vshll.u32 %v3758, 16
        %v3835 = vrot.slane %v3833, 1
        %v3836 = vsel %vm3792, %v3831, %v3835
        %v3837 = vshrl.u32 %v3758, 16
        %v3839 = vor.u32 %v3837, %v3835
        %v3841 = vshll.u32 %v3759, 16
        %v3843 = vrot.slane %v3841, 1
        %v3844 = vsel %vm3792, %v3839, %v3843
        %v3845 = vshrl.u32 %v3759, 16
        %v3847 = vor.u32 %v3845, %v3843
        %v3849 = vshll.u32 %v3760, 16
        %v3851 = vrot.slane %v3849, 1
        %v3852 = vsel %vm3792, %v3847, %v3851
        %v3853 = vshrl.u32 %v3760, 16
        %v3855 = vor.u32 %v3853, %v3851
        %v3857 = vshll.u32 %v3761, 16
        %v3859 = vrot.slane %v3857, 1
        %v3860 = vsel %vm3792, %v3855, %v3859
        %v3861 = vshrl.u32 %v3761, 16
        %v3863 = vor.u32 %v3861, %v3859
        %v3865 = vshll.u32 %v3762, 16
        %v3867 = vrot.slane %v3865, 1
        %v3868 = vsel %vm3792, %v3863, %v3867
        %v3869 = vshrl.u32 %v3762, 16
        %v3871 = vor.u32 %v3869, %v3867
        %v3873 = vshll.u32 %v3763, 16
        %v3875 = vrot.slane %v3873, 1
        %v3876 = vsel %vm3792, %v3871, %v3875
        %v3877 = vshrl.u32 %v3763, 16
        %v3879 = vor.u32 %v3877, %v3875
        %v3881 = vshll.u32 %v3764, 16
        %v3883 = vrot.slane %v3881, 1
        %v3884 = vsel %vm3792, %v3879, %v3883
        %v3885 = vshrl.u32 %v3764, 16
        %v3887 = vor.u32 %v3885, %v3883
        %v3889 = vshll.u32 %v3765, 16
        %v3891 = vrot.slane %v3889, 1
        %v3892 = vsel %vm3792, %v3887, %v3891
        %v3893 = vshrl.u32 %v3765, 16
        %v3895 = vor.u32 %v3893, %v3891
        %v3897 = vshll.u32 %v3766, 16
        %v3899 = vrot.slane %v3897, 1
        %v3900 = vsel %vm3792, %v3895, %v3899
        %v3901 = vshrl.u32 %v3766, 16
        %v3903 = vor.u32 %v3901, %v3899
        %v3905 = vshll.u32 %v3767, 16
        %v3907 = vrot.slane %v3905, 1
        %v3908 = vsel %vm3792, %v3903, %v3907
        %v3909 = vshrl.u32 %v3767, 16
        %v3911 = vor.u32 %v3909, %v3907
        %v3913 = vshll.u32 %v3768, 16
        %v3915 = vrot.slane %v3913, 1
        %v3916 = vsel %vm3792, %v3911, %v3915
        %v3917 = vshrl.u32 %v3768, 16
        %v3919 = vor.u32 %v3917, %v3915
        %v3921 = vshll.u32 %v3769, 16
        %v3923 = vrot.slane %v3921, 1
        %v3924 = vsel %vm3792, %v3919, %v3923
        %v3925 = vshrl.u32 %v3769, 16
        %v3927 = vor.u32 %v3925, %v3923
        %v3929 = vshll.u32 %v3791, 16
        %v3931 = vrot.slane %v3929, 1
        %v3932 = vsel %vm3792, %v3927, %v3931
        %v3933 = vshrl.u32 %v3791, 16
        %v3935 = vor.u32 %v3933, %v3931
        %v3955 = vunpack.c.l.b16 %v3636
        %v3956 = vpack.c.b16 %v3718, %v3955
        %vm3957 = vcmask 1046528
        %v3958 = vrot.slane %v3956, 1
        %v3959 = vrot.slane %v3754, 1
        %v3960 = vsel %vm3957, %v3958, %v3959
        %v3961 = vrot.slane %v3755, 1
        %v3962 = vsel %vm3957, %v3959, %v3961
        %v3963 = vrot.slane %v3756, 1
        %v3964 = vsel %vm3957, %v3961, %v3963
        %v3965 = vrot.slane %v3757, 1
        %v3966 = vsel %vm3957, %v3963, %v3965
        %v3967 = vrot.slane %v3758, 1
        %v3968 = vsel %vm3957, %v3965, %v3967
        %v3969 = vrot.slane %v3759, 1
        %v3970 = vsel %vm3957, %v3967, %v3969
        %v3971 = vrot.slane %v3760, 1
        %v3972 = vsel %vm3957, %v3969, %v3971
        %v3973 = vrot.slane %v3761, 1
        %v3974 = vsel %vm3957, %v3971, %v3973
        %v3975 = vrot.slane %v3762, 1
        %v3976 = vsel %vm3957, %v3973, %v3975
        %v3977 = vrot.slane %v3763, 1
        %v3978 = vsel %vm3957, %v3975, %v3977
        %v3979 = vrot.slane %v3764, 1
        %v3980 = vsel %vm3957, %v3977, %v3979
        %v3981 = vrot.slane %v3765, 1
        %v3982 = vsel %vm3957, %v3979, %v3981
        %v3983 = vrot.slane %v3766, 1
        %v3984 = vsel %vm3957, %v3981, %v3983
        %v3985 = vrot.slane %v3767, 1
        %v3986 = vsel %vm3957, %v3983, %v3985
        %v3987 = vrot.slane %v3768, 1
        %v3988 = vsel %vm3957, %v3985, %v3987
        %v3989 = vrot.slane %v3769, 1
        %v3990 = vsel %vm3957, %v3987, %v3989
        %v3991 = vrot.slane %v3791, 1
        %v3992 = vsel %vm3957, %v3989, %v3991
        %v4014 = vunpack.c.l.b16 %v3637
        %v4015 = vunpack.c.l.b16 %v3638
        %v4016 = vunpack.c.l.b16 %v3639
        %v4017 = vpack.c.b16 %v3720, %v4014
        %v4018 = vpack.c.b16 %v4016, %v4015
        %v4019 = vrot.slane %v4017, 1
        %v4020 = vsel %vm3957, %v4019, %v3961
        %v4021 = vrot.slane %v4018, 1
        %v4022 = vsel %vm3957, %v3991, %v4021
        %v4027 = vunpack.c.l.b16 %v3640
        %v4028 = vpack.c.b16 %v4027, %v4027
        %vm4029 = vsmask.f32 6400
        %v4031 = vshrl.u32 %v4017, 16
        %v4033 = vrot.slane %v4031, 1
        %v4034 = vshll.u32 %v4017, 16
        %v4036 = vrot.slane %v4034, 2
        %v4037 = vor.u32 %v4033, %v4036
        %v4038 = vrot.slane %v3813, 1
        %v4039 = vrot.slane %v3809, 2
        %v4040 = vor.u32 %v4038, %v4039
        %v4041 = vsel %vm4029, %v4037, %v4040
        %v4042 = vrot.slane %v3821, 1
        %v4043 = vrot.slane %v3817, 2
        %v4044 = vor.u32 %v4042, %v4043
        %v4045 = vsel %vm4029, %v4040, %v4044
        %v4046 = vrot.slane %v3829, 1
        %v4047 = vrot.slane %v3825, 2
        %v4048 = vor.u32 %v4046, %v4047
        %v4049 = vsel %vm4029, %v4044, %v4048
        %v4050 = vrot.slane %v3837, 1
        %v4051 = vrot.slane %v3833, 2
        %v4052 = vor.u32 %v4050, %v4051
        %v4053 = vsel %vm4029, %v4048, %v4052
        %v4054 = vrot.slane %v3845, 1
        %v4055 = vrot.slane %v3841, 2
        %v4056 = vor.u32 %v4054, %v4055
        %v4057 = vsel %vm4029, %v4052, %v4056
        %v4058 = vrot.slane %v3853, 1
        %v4059 = vrot.slane %v3849, 2
        %v4060 = vor.u32 %v4058, %v4059
        %v4061 = vsel %vm4029, %v4056, %v4060
        %v4062 = vrot.slane %v3861, 1
        %v4063 = vrot.slane %v3857, 2
        %v4064 = vor.u32 %v4062, %v4063
        %v4065 = vsel %vm4029, %v4060, %v4064
        %v4066 = vrot.slane %v3869, 1
        %v4067 = vrot.slane %v3865, 2
        %v4068 = vor.u32 %v4066, %v4067
        %v4069 = vsel %vm4029, %v4064, %v4068
        %v4070 = vrot.slane %v3877, 1
        %v4071 = vrot.slane %v3873, 2
        %v4072 = vor.u32 %v4070, %v4071
        %v4073 = vsel %vm4029, %v4068, %v4072
        %v4074 = vrot.slane %v3885, 1
        %v4075 = vrot.slane %v3881, 2
        %v4076 = vor.u32 %v4074, %v4075
        %v4077 = vsel %vm4029, %v4072, %v4076
        %v4078 = vrot.slane %v3893, 1
        %v4079 = vrot.slane %v3889, 2
        %v4080 = vor.u32 %v4078, %v4079
        %v4081 = vsel %vm4029, %v4076, %v4080
        %v4082 = vrot.slane %v3901, 1
        %v4083 = vrot.slane %v3897, 2
        %v4084 = vor.u32 %v4082, %v4083
        %v4085 = vsel %vm4029, %v4080, %v4084
        %v4086 = vrot.slane %v3909, 1
        %v4087 = vrot.slane %v3905, 2
        %v4088 = vor.u32 %v4086, %v4087
        %v4089 = vsel %vm4029, %v4084, %v4088
        %v4090 = vrot.slane %v3917, 1
        %v4091 = vrot.slane %v3913, 2
        %v4092 = vor.u32 %v4090, %v4091
        %v4093 = vsel %vm4029, %v4088, %v4092
        %v4094 = vrot.slane %v3925, 1
        %v4095 = vrot.slane %v3921, 2
        %v4096 = vor.u32 %v4094, %v4095
        %v4097 = vsel %vm4029, %v4092, %v4096
        %v4098 = vrot.slane %v3933, 1
        %v4099 = vrot.slane %v3929, 2
        %v4100 = vor.u32 %v4098, %v4099
        %v4101 = vsel %vm4029, %v4096, %v4100
        %v4103 = vshrl.u32 %v4018, 16
        %v4105 = vrot.slane %v4103, 1
        %v4106 = vshll.u32 %v4018, 16
        %v4108 = vrot.slane %v4106, 2
        %v4109 = vor.u32 %v4105, %v4108
        %v4110 = vsel %vm4029, %v4100, %v4109
        %v4112 = vshll.u32 %v4028, 16
        %v4114 = vrot.slane %v4112, 2
        %v4115 = vsel %vm4029, %v4109, %v4114
        %v4135 = vunpack.c.l.b16 %v3641
        %v4136 = vpack.c.b16 %v3720, %v4135
        %vm4137 = vcmask 1045504
        %v4138 = vrot.slane %v4136, 2
        %v4139 = vrot.slane %v3755, 2
        %v4140 = vsel %vm4137, %v4138, %v4139
        %v4141 = vrot.slane %v3756, 2
        %v4142 = vsel %vm4137, %v4139, %v4141
        %v4143 = vrot.slane %v3757, 2
        %v4144 = vsel %vm4137, %v4141, %v4143
        %v4145 = vrot.slane %v3758, 2
        %v4146 = vsel %vm4137, %v4143, %v4145
        %v4147 = vrot.slane %v3759, 2
        %v4148 = vsel %vm4137, %v4145, %v4147
        %v4149 = vrot.slane %v3760, 2
        %v4150 = vsel %vm4137, %v4147, %v4149
        %v4151 = vrot.slane %v3761, 2
        %v4152 = vsel %vm4137, %v4149, %v4151
        %v4153 = vrot.slane %v3762, 2
        %v4154 = vsel %vm4137, %v4151, %v4153
        %v4155 = vrot.slane %v3763, 2
        %v4156 = vsel %vm4137, %v4153, %v4155
        %v4157 = vrot.slane %v3764, 2
        %v4158 = vsel %vm4137, %v4155, %v4157
        %v4159 = vrot.slane %v3765, 2
        %v4160 = vsel %vm4137, %v4157, %v4159
        %v4161 = vrot.slane %v3766, 2
        %v4162 = vsel %vm4137, %v4159, %v4161
        %v4163 = vrot.slane %v3767, 2
        %v4164 = vsel %vm4137, %v4161, %v4163
        %v4165 = vrot.slane %v3768, 2
        %v4166 = vsel %vm4137, %v4163, %v4165
        %v4167 = vrot.slane %v3769, 2
        %v4168 = vsel %vm4137, %v4165, %v4167
        %v4169 = vrot.slane %v3791, 2
        %v4170 = vsel %vm4137, %v4167, %v4169
        %v4171 = vrot.slane %v4018, 2
        %v4172 = vsel %vm4137, %v4169, %v4171
        %v4173 = vrot.slane %v4028, 2
        %v4174 = vsel %vm4137, %v4171, %v4173
        %v4230 = vunpack.c.l.b16 %v3642
        %v4231 = vunpack.c.l.b16 %v3643
        %v4232 = vunpack.c.l.b16 %v3644
        %v4233 = vunpack.c.l.b16 %v3645
        %v4234 = vunpack.c.l.b16 %v3646
        %v4235 = vunpack.c.l.b16 %v3647
        %v4236 = vunpack.c.l.b16 %v3648
        %v4237 = vunpack.c.l.b16 %v3649
        %v4238 = vunpack.c.l.b16 %v3650
        %v4239 = vunpack.c.l.b16 %v3651
        %v4240 = vunpack.c.l.b16 %v3652
        %v4241 = vunpack.c.l.b16 %v3653
        %v4242 = vunpack.c.l.b16 %v3654
        %v4243 = vunpack.c.l.b16 %v3655
        %v4244 = vunpack.c.l.b16 %v3656
        %v4245 = vunpack.c.l.b16 %v3657
        %v4246 = vunpack.c.l.b16 %v3658
        %v4247 = vunpack.c.l.b16 %v3659
        %v4248 = vunpack.c.l.b16 %v3660
        %v4249 = vunpack.c.l.b16 %v3661
        %v4250 = vunpack.c.l.b16 %v3662
        %v4251 = vunpack.c.l.b16 %v3663
        %v4252 = vunpack.c.l.b16 %v3664
        %v4253 = vunpack.c.l.b16 %v3665
        %v4254 = vunpack.c.l.b16 %v3666
        %v4255 = vunpack.c.l.b16 %v3667
        %v4256 = vunpack.c.l.b16 %v3668
        %v4257 = vunpack.c.l.b16 %v3669
        %v4258 = vunpack.c.l.b16 %v3670
        %v4259 = vunpack.c.l.b16 %v3671
        %v4260 = vunpack.c.l.b16 %v3672
        %v4261 = vunpack.c.l.b16 %v3673
        %v4262 = vunpack.c.l.b16 %v3674
        %v4263 = vunpack.c.l.b16 %v3675
        %v4264 = vunpack.c.l.b16 %v3676
        %v4265 = vunpack.c.l.b16 %v3677
        %v4266 = vunpack.c.l.b16 %v3678
        %v4267 = vpack.c.b16 %v4231, %v4230
        %v4268 = vpack.c.b16 %v4233, %v4232
        %v4269 = vpack.c.b16 %v4235, %v4234
        %v4270 = vpack.c.b16 %v4237, %v4236
        %v4271 = vpack.c.b16 %v4239, %v4238
        %v4272 = vpack.c.b16 %v4241, %v4240
        %v4273 = vpack.c.b16 %v4243, %v4242
        %v4274 = vpack.c.b16 %v4245, %v4244
        %v4275 = vpack.c.b16 %v4247, %v4246
        %v4276 = vpack.c.b16 %v4249, %v4248
        %v4277 = vpack.c.b16 %v4251, %v4250
        %v4278 = vpack.c.b16 %v4253, %v4252
        %v4279 = vpack.c.b16 %v4255, %v4254
        %v4280 = vpack.c.b16 %v4257, %v4256
        %v4281 = vpack.c.b16 %v4259, %v4258
        %v4282 = vpack.c.b16 %v4261, %v4260
        %v4283 = vpack.c.b16 %v4263, %v4262
        %v4284 = vpack.c.b16 %v4265, %v4264
        %v4285 = vpack.c.b16 %v4266, %v4266
        %v4286 = vrot.slane %v4267, 2
        %v4287 = vrot.slane %v4268, 2
        %v4288 = vsel %vm4137, %v4286, %v4287
        %v4289 = vrot.slane %v4269, 2
        %v4290 = vsel %vm4137, %v4287, %v4289
        %v4291 = vrot.slane %v4270, 2
        %v4292 = vsel %vm4137, %v4289, %v4291
        %v4293 = vrot.slane %v4271, 2
        %v4294 = vsel %vm4137, %v4291, %v4293
        %v4295 = vrot.slane %v4272, 2
        %v4296 = vsel %vm4137, %v4293, %v4295
        %v4297 = vrot.slane %v4273, 2
        %v4298 = vsel %vm4137, %v4295, %v4297
        %v4299 = vrot.slane %v4274, 2
        %v4300 = vsel %vm4137, %v4297, %v4299
        %v4301 = vrot.slane %v4275, 2
        %v4302 = vsel %vm4137, %v4299, %v4301
        %v4303 = vrot.slane %v4276, 2
        %v4304 = vsel %vm4137, %v4301, %v4303
        %v4305 = vrot.slane %v4277, 2
        %v4306 = vsel %vm4137, %v4303, %v4305
        %v4307 = vrot.slane %v4278, 2
        %v4308 = vsel %vm4137, %v4305, %v4307
        %v4309 = vrot.slane %v4279, 2
        %v4310 = vsel %vm4137, %v4307, %v4309
        %v4311 = vrot.slane %v4280, 2
        %v4312 = vsel %vm4137, %v4309, %v4311
        %v4313 = vrot.slane %v4281, 2
        %v4314 = vsel %vm4137, %v4311, %v4313
        %v4315 = vrot.slane %v4282, 2
        %v4316 = vsel %vm4137, %v4313, %v4315
        %v4317 = vrot.slane %v4283, 2
        %v4318 = vsel %vm4137, %v4315, %v4317
        %v4319 = vrot.slane %v4284, 2
        %v4320 = vsel %vm4137, %v4317, %v4319
        %v4321 = vrot.slane %v4285, 2
        %v4322 = vsel %vm4137, %v4319, %v4321
        %v4342 = vunpack.c.l.b16 %v3679
        %v4343 = vpack.c.b16 %v4342, %v4342
        %vm4344 = vsmask.f32 5376
        %v4346 = vshrl.u32 %v4267, 16
        %v4348 = vrot.slane %v4346, 2
        %v4349 = vshll.u32 %v4267, 16
        %v4351 = vrot.slane %v4349, 3
        %v4352 = vor.u32 %v4348, %v4351
        %v4354 = vshrl.u32 %v4268, 16
        %v4356 = vrot.slane %v4354, 2
        %v4357 = vshll.u32 %v4268, 16
        %v4359 = vrot.slane %v4357, 3
        %v4360 = vor.u32 %v4356, %v4359
        %v4361 = vsel %vm4344, %v4352, %v4360
        %v4363 = vshrl.u32 %v4269, 16
        %v4365 = vrot.slane %v4363, 2
        %v4366 = vshll.u32 %v4269, 16
        %v4368 = vrot.slane %v4366, 3
        %v4369 = vor.u32 %v4365, %v4368
        %v4370 = vsel %vm4344, %v4360, %v4369
        %v4372 = vshrl.u32 %v4270, 16
        %v4374 = vrot.slane %v4372, 2
        %v4375 = vshll.u32 %v4270, 16
        %v4377 = vrot.slane %v4375, 3
        %v4378 = vor.u32 %v4374, %v4377
        %v4379 = vsel %vm4344, %v4369, %v4378
        %v4381 = vshrl.u32 %v4271, 16
        %v4383 = vrot.slane %v4381, 2
        %v4384 = vshll.u32 %v4271, 16
        %v4386 = vrot.slane %v4384, 3
        %v4387 = vor.u32 %v4383, %v4386
        %v4388 = vsel %vm4344, %v4378, %v4387
        %v4390 = vshrl.u32 %v4272, 16
        %v4392 = vrot.slane %v4390, 2
        %v4393 = vshll.u32 %v4272, 16
        %v4395 = vrot.slane %v4393, 3
        %v4396 = vor.u32 %v4392, %v4395
        %v4397 = vsel %vm4344, %v4387, %v4396
        %v4399 = vshrl.u32 %v4273, 16
        %v4401 = vrot.slane %v4399, 2
        %v4402 = vshll.u32 %v4273, 16
        %v4404 = vrot.slane %v4402, 3
        %v4405 = vor.u32 %v4401, %v4404
        %v4406 = vsel %vm4344, %v4396, %v4405
        %v4408 = vshrl.u32 %v4274, 16
        %v4410 = vrot.slane %v4408, 2
        %v4411 = vshll.u32 %v4274, 16
        %v4413 = vrot.slane %v4411, 3
        %v4414 = vor.u32 %v4410, %v4413
        %v4415 = vsel %vm4344, %v4405, %v4414
        %v4417 = vshrl.u32 %v4275, 16
        %v4419 = vrot.slane %v4417, 2
        %v4420 = vshll.u32 %v4275, 16
        %v4422 = vrot.slane %v4420, 3
        %v4423 = vor.u32 %v4419, %v4422
        %v4424 = vsel %vm4344, %v4414, %v4423
        %v4426 = vshrl.u32 %v4276, 16
        %v4428 = vrot.slane %v4426, 2
        %v4429 = vshll.u32 %v4276, 16
        %v4431 = vrot.slane %v4429, 3
        %v4432 = vor.u32 %v4428, %v4431
        %v4433 = vsel %vm4344, %v4423, %v4432
        %v4435 = vshrl.u32 %v4277, 16
        %v4437 = vrot.slane %v4435, 2
        %v4438 = vshll.u32 %v4277, 16
        %v4440 = vrot.slane %v4438, 3
        %v4441 = vor.u32 %v4437, %v4440
        %v4442 = vsel %vm4344, %v4432, %v4441
        %v4444 = vshrl.u32 %v4278, 16
        %v4446 = vrot.slane %v4444, 2
        %v4447 = vshll.u32 %v4278, 16
        %v4449 = vrot.slane %v4447, 3
        %v4450 = vor.u32 %v4446, %v4449
        %v4451 = vsel %vm4344, %v4441, %v4450
        %v4453 = vshrl.u32 %v4279, 16
        %v4455 = vrot.slane %v4453, 2
        %v4456 = vshll.u32 %v4279, 16
        %v4458 = vrot.slane %v4456, 3
        %v4459 = vor.u32 %v4455, %v4458
        %v4460 = vsel %vm4344, %v4450, %v4459
        %v4462 = vshrl.u32 %v4280, 16
        %v4464 = vrot.slane %v4462, 2
        %v4465 = vshll.u32 %v4280, 16
        %v4467 = vrot.slane %v4465, 3
        %v4468 = vor.u32 %v4464, %v4467
        %v4469 = vsel %vm4344, %v4459, %v4468
        %v4471 = vshrl.u32 %v4281, 16
        %v4473 = vrot.slane %v4471, 2
        %v4474 = vshll.u32 %v4281, 16
        %v4476 = vrot.slane %v4474, 3
        %v4477 = vor.u32 %v4473, %v4476
        %v4478 = vsel %vm4344, %v4468, %v4477
        %v4480 = vshrl.u32 %v4282, 16
        %v4482 = vrot.slane %v4480, 2
        %v4483 = vshll.u32 %v4282, 16
        %v4485 = vrot.slane %v4483, 3
        %v4486 = vor.u32 %v4482, %v4485
        %v4487 = vsel %vm4344, %v4477, %v4486
        %v4489 = vshrl.u32 %v4283, 16
        %v4491 = vrot.slane %v4489, 2
        %v4492 = vshll.u32 %v4283, 16
        %v4494 = vrot.slane %v4492, 3
        %v4495 = vor.u32 %v4491, %v4494
        %v4496 = vsel %vm4344, %v4486, %v4495
        %v4498 = vshrl.u32 %v4284, 16
        %v4500 = vrot.slane %v4498, 2
        %v4501 = vshll.u32 %v4284, 16
        %v4503 = vrot.slane %v4501, 3
        %v4504 = vor.u32 %v4500, %v4503
        %v4505 = vsel %vm4344, %v4495, %v4504
        %v4507 = vshrl.u32 %v4343, 16
        %v4509 = vrot.slane %v4507, 2
        %v4510 = vshll.u32 %v4343, 16
        %v4512 = vrot.slane %v4510, 3
        %v4513 = vor.u32 %v4509, %v4512
        %v4514 = vsel %vm4344, %v4504, %v4513
        %v4534 = vunpack.c.l.b16 %v3680
        %v4535 = vpack.c.b16 %v4231, %v4534
        %vm4536 = vcmask 1044480
        %v4537 = vrot.slane %v4535, 3
        %v4538 = vrot.slane %v4268, 3
        %v4539 = vsel %vm4536, %v4537, %v4538
        %v4540 = vrot.slane %v4269, 3
        %v4541 = vsel %vm4536, %v4538, %v4540
        %v4542 = vrot.slane %v4270, 3
        %v4543 = vsel %vm4536, %v4540, %v4542
        %v4544 = vrot.slane %v4271, 3
        %v4545 = vsel %vm4536, %v4542, %v4544
        %v4546 = vrot.slane %v4272, 3
        %v4547 = vsel %vm4536, %v4544, %v4546
        %v4548 = vrot.slane %v4273, 3
        %v4549 = vsel %vm4536, %v4546, %v4548
        %v4550 = vrot.slane %v4274, 3
        %v4551 = vsel %vm4536, %v4548, %v4550
        %v4552 = vrot.slane %v4275, 3
        %v4553 = vsel %vm4536, %v4550, %v4552
        %v4554 = vrot.slane %v4276, 3
        %v4555 = vsel %vm4536, %v4552, %v4554
        %v4556 = vrot.slane %v4277, 3
        %v4557 = vsel %vm4536, %v4554, %v4556
        %v4558 = vrot.slane %v4278, 3
        %v4559 = vsel %vm4536, %v4556, %v4558
        %v4560 = vrot.slane %v4279, 3
        %v4561 = vsel %vm4536, %v4558, %v4560
        %v4562 = vrot.slane %v4280, 3
        %v4563 = vsel %vm4536, %v4560, %v4562
        %v4564 = vrot.slane %v4281, 3
        %v4565 = vsel %vm4536, %v4562, %v4564
        %v4566 = vrot.slane %v4282, 3
        %v4567 = vsel %vm4536, %v4564, %v4566
        %v4568 = vrot.slane %v4283, 3
        %v4569 = vsel %vm4536, %v4566, %v4568
        %v4570 = vrot.slane %v4284, 3
        %v4571 = vsel %vm4536, %v4568, %v4570
        %v4572 = vrot.slane %v4343, 3
        %v4573 = vsel %vm4536, %v4570, %v4572
        %v4592 = vld [vmem:[#allocation8] sm:$0xf]
        %v4593 = vld [vmem:[#allocation8 + $0x4] sm:$0xf]
        %v4594 = vld [vmem:[#allocation8 + $0x8] sm:$0xf]
        %v4595 = vld [vmem:[#allocation8 + $0xc] sm:$0xf]
        %v4596 = vld [vmem:[#allocation8 + $0x10] sm:$0xf]
        %v4597 = vld [vmem:[#allocation8 + $0x14] sm:$0xf]
        %v4598 = vld [vmem:[#allocation8 + $0x18] sm:$0xf]
        %v4599 = vld [vmem:[#allocation8 + $0x1c] sm:$0xf]
        %v4600 = vld [vmem:[#allocation8 + $0x20] sm:$0xf]
        %v4601 = vld [vmem:[#allocation8 + $0x24] sm:$0xf]
        %v4602 = vld [vmem:[#allocation8 + $0x28] sm:$0xf]
        %v4603 = vld [vmem:[#allocation8 + $0x2c] sm:$0xf]
        %v4604 = vld [vmem:[#allocation8 + $0x30] sm:$0xf]
        %v4605 = vld [vmem:[#allocation8 + $0x34] sm:$0xf]
        %v4606 = vld [vmem:[#allocation8 + $0x38] sm:$0xf]
        %v4607 = vld [vmem:[#allocation8 + $0x3c] sm:$0xf]
        %v4608 = vld [vmem:[#allocation8 + $0x40] sm:$0xf]
        %v4609 = vld [vmem:[#allocation8 + $0x44] sm:$0xf]
        %v4610 = vld [vmem:[#allocation8 + $0x48] sm:$0xf]
        %v4611 = vld [vmem:[#allocation8 + $0x4c] sm:$0xf]
        %v4612 = vld [vmem:[#allocation8 + $0x50] sm:$0xf]
        %v4613 = vld [vmem:[#allocation8 + $0x54] sm:$0xf]
        %v4614 = vld [vmem:[#allocation8 + $0x58] sm:$0xf]
        %v4615 = vld [vmem:[#allocation8 + $0x5c] sm:$0xf]
        %v4616 = vld [vmem:[#allocation8 + $0x60] sm:$0xf]
        %v4617 = vld [vmem:[#allocation8 + $0x64] sm:$0xf]
        %v4618 = vld [vmem:[#allocation8 + $0x68] sm:$0xf]
        %v4619 = vld [vmem:[#allocation8 + $0x6c] sm:$0xf]
        %v4620 = vld [vmem:[#allocation8 + $0x70] sm:$0xf]
        %v4621 = vld [vmem:[#allocation8 + $0x74] sm:$0xf]
        %v4622 = vld [vmem:[#allocation8 + $0x78] sm:$0xf]
        %v4623 = vld [vmem:[#allocation8 + $0x7c] sm:$0xf]
        %v4624 = vld [vmem:[#allocation8 + $0x80] sm:$0xf]
        %v4625 = vld [vmem:[#allocation8 + $0x84] sm:$0xf]
        %v4626 = vld [vmem:[#allocation8 + $0x88] sm:$0xf]
        %v4627 = vld [vmem:[#allocation8 + $0x8c] sm:$0xf]
        %v4628 = vld [vmem:[#allocation8 + $0x90] sm:$0xf]
        %v4629 = vld [vmem:[#allocation8 + $0x94] sm:$0xf]
        %v4630 = vld [vmem:[#allocation8 + $0x98] sm:$0xf]
        %v4631 = vld [vmem:[#allocation8 + $0x9c] sm:$0xf]
        %v4632 = vld [vmem:[#allocation8 + $0xa0] sm:$0xf]
        %v4633 = vld [vmem:[#allocation8 + $0xa4] sm:$0xf]
        %v4634 = vld [vmem:[#allocation8 + $0xa8] sm:$0xf]
        %v4635 = vld [vmem:[#allocation8 + $0xac] sm:$0xf]
        %v4636 = vld [vmem:[#allocation8 + $0xb0] sm:$0xf]
        %v4637 = vld [vmem:[#allocation8 + $0xb4] sm:$0xf]
        %v4638 = vld [vmem:[#allocation8 + $0xb8] sm:$0xf]
        %v4639 = vld [vmem:[#allocation8 + $0xbc] sm:$0xf]
        %v4640 = vld [vmem:[#allocation8 + $0xc0] sm:$0xf]
        %v4641 = vld [vmem:[#allocation8 + $0xc4] sm:$0xf]
        %v4642 = vld [vmem:[#allocation8 + $0xc8] sm:$0xf]
        %v4643 = vld [vmem:[#allocation8 + $0xcc] sm:$0xf]
        %v4644 = vld [vmem:[#allocation8 + $0xd0] sm:$0xf]
        %v4645 = vld [vmem:[#allocation8 + $0xd4] sm:$0xf]
        %v4646 = vld [vmem:[#allocation8 + $0xd8] sm:$0xf]
        %v4647 = vld [vmem:[#allocation8 + $0xdc] sm:$0xf]
        %v4648 = vld [vmem:[#allocation8 + $0xe0] sm:$0xf]
        %v4649 = vld [vmem:[#allocation8 + $0xe4] sm:$0xf]
        %v4650 = vld [vmem:[#allocation8 + $0xe8] sm:$0xf]
        %v4651 = vld [vmem:[#allocation8 + $0xec] sm:$0xf]
        %v4652 = vld [vmem:[#allocation8 + $0xf0] sm:$0xf]
        %v4653 = vld [vmem:[#allocation8 + $0xf4] sm:$0xf]
        %v4654 = vld [vmem:[#allocation8 + $0xf8] sm:$0xf]
        %v4655 = vld [vmem:[#allocation8 + $0xfc] sm:$0xf]
        %v4656 = vld [vmem:[#allocation8 + $0x100] sm:$0xf]
        %v4657 = vld [vmem:[#allocation8 + $0x104] sm:$0xf]
        %v4658 = vld [vmem:[#allocation8 + $0x108] sm:$0xf]
        %v4659 = vld [vmem:[#allocation8 + $0x10c] sm:$0xf]
        %v4660 = vld [vmem:[#allocation8 + $0x110] sm:$0xf]
        %v4661 = vld [vmem:[#allocation8 + $0x114] sm:$0xf]
        %v4662 = vld [vmem:[#allocation8 + $0x118] sm:$0xf]
        %v4663 = vld [vmem:[#allocation8 + $0x11c] sm:$0xf]
        %v4664 = vld [vmem:[#allocation8 + $0x120] sm:$0xf]
        %v4665 = vld [vmem:[#allocation8 + $0x124] sm:$0xf]
        %v4666 = vld [vmem:[#allocation8 + $0x128] sm:$0xf]
        %v4667 = vld [vmem:[#allocation8 + $0x12c] sm:$0xf]
        %v4668 = vld [vmem:[#allocation8 + $0x130] sm:$0xf]
        %v4669 = vld [vmem:[#allocation8 + $0x134] sm:$0xf]
        %v4670 = vld [vmem:[#allocation8 + $0x138] sm:$0xf]
        %v4671 = vld [vmem:[#allocation8 + $0x13c] sm:$0xf]
        %v4672 = vld [vmem:[#allocation8 + $0x140] sm:$0xf]
        %v4673 = vld [vmem:[#allocation8 + $0x144] sm:$0xf]
        %v4674 = vld [vmem:[#allocation8 + $0x148] sm:$0xf]
        %v4675 = vld [vmem:[#allocation8 + $0x14c] sm:$0xf]
        %v4676 = vld [vmem:[#allocation8 + $0x150] sm:$0xf]
        %v4677 = vld [vmem:[#allocation8 + $0x154] sm:$0xf]
        %v4678 = vld [vmem:[#allocation8 + $0x158] sm:$0xf]
        %v4679 = vld [vmem:[#allocation8 + $0x15c] sm:$0xf]
        %v4680 = vld [vmem:[#allocation8 + $0x160] sm:$0xf]
        %v4681 = vld [vmem:[#allocation8 + $0x164] sm:$0xf]
        %v4682 = vld [vmem:[#allocation8 + $0x168] sm:$0xf]
        %v4683 = vld [vmem:[#allocation8 + $0x16c] sm:$0xf]
        %v4684 = vld [vmem:[#allocation8 + $0x170] sm:$0xf]
        %v4685 = vld [vmem:[#allocation8 + $0x174] sm:$0xf]
        %v4686 = vld [vmem:[#allocation8 + $0x178] sm:$0xf]
        %v4687 = vld [vmem:[#allocation8 + $0x17c] sm:$0xf]
        %v4688 = vld [vmem:[#allocation8 + $0x180] sm:$0xf]
        %v4689 = vld [vmem:[#allocation8 + $0x184] sm:$0xf]
        %v4690 = vld [vmem:[#allocation8 + $0x188] sm:$0xf]
        %v4691 = vld [vmem:[#allocation8 + $0x18c] sm:$0xf]
        %v4692 = vld [vmem:[#allocation8 + $0x190] sm:$0xf]
        %v4693 = vld [vmem:[#allocation8 + $0x194] sm:$0xf]
        %v4694 = vld [vmem:[#allocation8 + $0x198] sm:$0xf]
        %v4695 = vld [vmem:[#allocation8 + $0x19c] sm:$0xf]
        %v4696 = vld [vmem:[#allocation8 + $0x1a0] sm:$0xf]
        %v4697 = vld [vmem:[#allocation8 + $0x1a4] sm:$0xf]
        %v4698 = vld [vmem:[#allocation8 + $0x1a8] sm:$0xf]
        %v4699 = vld [vmem:[#allocation8 + $0x1ac] sm:$0xf]
        %v4700 = vld [vmem:[#allocation8 + $0x1b0] sm:$0xf]
        %v4701 = vld [vmem:[#allocation8 + $0x1b4] sm:$0xf]
        %v4702 = vld [vmem:[#allocation8 + $0x1b8] sm:$0xf]
        %v4703 = vld [vmem:[#allocation8 + $0x1bc] sm:$0xf]
        %v4704 = vld [vmem:[#allocation8 + $0x1c0] sm:$0xf]
        %v4705 = vld [vmem:[#allocation8 + $0x1c4] sm:$0xf]
        %v4706 = vld [vmem:[#allocation8 + $0x1c8] sm:$0xf]
        %v4707 = vld [vmem:[#allocation8 + $0x1cc] sm:$0xf]
        %v4708 = vld [vmem:[#allocation8 + $0x1d0] sm:$0xf]
        %v4709 = vld [vmem:[#allocation8 + $0x1d4] sm:$0xf]
        %v4710 = vld [vmem:[#allocation8 + $0x1d8] sm:$0xf]
        %v4711 = vld [vmem:[#allocation8 + $0x1dc] sm:$0xf]
        %v4712 = vld [vmem:[#allocation8 + $0x1e0] sm:$0xf]
        %v4713 = vld [vmem:[#allocation8 + $0x1e4] sm:$0xf]
        %v4714 = vld [vmem:[#allocation8 + $0x1e8] sm:$0xf]
        %v4715 = vld [vmem:[#allocation8 + $0x1ec] sm:$0xf]
        %v4716 = vld [vmem:[#allocation8 + $0x1f0] sm:$0xf]
        %v4717 = vld [vmem:[#allocation8 + $0x1f4] sm:$0xf]
        %v4718 = vld [vmem:[#allocation8 + $0x1f8] sm:$0xf]
        %v4719 = vld [vmem:[#allocation8 + $0x1fc] sm:$0xf]
        %v4720 = vld [vmem:[#allocation8 + $0x200] sm:$0xf]
        %v4721 = vld [vmem:[#allocation8 + $0x204] sm:$0xf]
        %v4722 = vld [vmem:[#allocation8 + $0x208] sm:$0xf]
        %v4723 = vld [vmem:[#allocation8 + $0x20c] sm:$0xf]
        %v4724 = vld [vmem:[#allocation8 + $0x210] sm:$0xf]
        %v4725 = vld [vmem:[#allocation8 + $0x214] sm:$0xf]
        %v4726 = vld [vmem:[#allocation8 + $0x218] sm:$0xf]
        %v4727 = vld [vmem:[#allocation8 + $0x21c] sm:$0xf]
        %v4728 = vld [vmem:[#allocation8 + $0x220] sm:$0xf]
        %v4729 = vld [vmem:[#allocation8 + $0x224] sm:$0xf]
        %v4730 = vld [vmem:[#allocation8 + $0x228] sm:$0xf]
        %v4731 = vld [vmem:[#allocation8 + $0x22c] sm:$0xf]
        %v4732 = vld [vmem:[#allocation8 + $0x230] sm:$0xf]
        %v4733 = vld [vmem:[#allocation8 + $0x234] sm:$0xf]
        %v4734 = vld [vmem:[#allocation8 + $0x238] sm:$0xf]
        %v4735 = vld [vmem:[#allocation8 + $0x23c] sm:$0xf]
        %v4736 = vld [vmem:[%s237 + $0x13] sm:$0xff]
        %v4737 = vld [vmem:[%s237 + $0x1b] sm:$0xff]
        %v4738 = vld [vmem:[%s237 + $0x23] sm:$0xff]
        %v4739 = vld [vmem:[%s237 + $0x2b] sm:$0xff]
        %v4740 = vld [vmem:[%s237 + $0x33] sm:$0xff]
        %v4741 = vld [vmem:[%s237 + $0x3b] sm:$0xff]
        %v4742 = vld [vmem:[%s237 + $0x43] sm:$0xff]
        %v4743 = vld [vmem:[%s237 + $0x4b] sm:$0xff]
        %v4744 = vld [vmem:[%s237 + $0x53] sm:$0xff]
        %v4745 = vld [vmem:[%s237 + $0x5b] sm:$0xff]
        %v4746 = vld [vmem:[%s237 + $0x63] sm:$0xff]
        %v4747 = vld [vmem:[%s237 + $0x6b] sm:$0xff]
        %v4748 = vld [vmem:[%s237 + $0x73] sm:$0xff]
        %v4749 = vld [vmem:[%s237 + $0x7b] sm:$0xff]
        %v4750 = vld [vmem:[%s237 + $0x83] sm:$0xff]
        %v4751 = vld [vmem:[%s237 + $0x8b] sm:$0xff]
        %v4752 = vld [vmem:[%s237 + $0x93] sm:$0xff]
        %v4753 = vld [vmem:[%s237 + $0x9b] sm:$0xff]
        %v4754 = vld [vmem:[%s237 + $0xa3] sm:$0xff]
        %v4755 = vld [vmem:[%s237 + $0xab] sm:$0xff]
        %v4756 = vld [vmem:[%s237 + $0xb3] sm:$0xff]
        %v4757 = vld [vmem:[%s237 + $0xbb] sm:$0xff]
        %v4758 = vld [vmem:[%s237 + $0xc3] sm:$0xff]
        %v4759 = vld [vmem:[%s237 + $0xcb] sm:$0xff]
        %v4760 = vld [vmem:[%s237 + $0xd3] sm:$0xff]
        %v4761 = vld [vmem:[%s237 + $0xdb] sm:$0xff]
        %v4762 = vld [vmem:[%s237 + $0xe3] sm:$0xff]
        %v4763 = vld [vmem:[%s237 + $0xeb] sm:$0xff]
        %v4764 = vld [vmem:[%s237 + $0xf3] sm:$0xff]
        %v4765 = vld [vmem:[%s237 + $0xfb] sm:$0xff]
        %v4766 = vld [vmem:[%s237 + $0x103] sm:$0xff]
        %v4767 = vld [vmem:[%s237 + $0x10b] sm:$0xff]
        %v4768 = vld [vmem:[%s237 + $0x113] sm:$0xff]
        %v4769 = vld [vmem:[%s237 + $0x11b] sm:$0xff]
        %v4770 = vld [vmem:[%s237 + $0x123] sm:$0xff]
        %v4771 = vld [vmem:[%s237 + $0x12b] sm:$0x3f]
        %v4772 = vld [vmem:[%s4] sm:$0x1]
        %v4774 = vlaneseq
        %v4775 = vshrl.u32 %v4774, 7
        %v4776 = vsub.s32 0, %v4775
        %v4777 = vrot.slane %v4772, %v4776
        %v4923 = vunpack.c.l.b16 %v4592
        %v4924 = vunpack.c.l.b16 %v4593
        %v4925 = vunpack.c.l.b16 %v4594
        %v4926 = vunpack.c.l.b16 %v4595
        %v4927 = vunpack.c.l.b16 %v4596
        %v4928 = vunpack.c.l.b16 %v4597
        %v4929 = vunpack.c.l.b16 %v4598
        %v4930 = vunpack.c.l.b16 %v4599
        %v4931 = vunpack.c.l.b16 %v4600
        %v4932 = vunpack.c.l.b16 %v4601
        %v4933 = vunpack.c.l.b16 %v4602
        %v4934 = vunpack.c.l.b16 %v4603
        %v4935 = vunpack.c.l.b16 %v4604
        %v4936 = vunpack.c.l.b16 %v4605
        %v4937 = vunpack.c.l.b16 %v4606
        %v4938 = vunpack.c.l.b16 %v4607
        %v4939 = vunpack.c.l.b16 %v4608
        %v4940 = vunpack.c.l.b16 %v4609
        %v4941 = vunpack.c.l.b16 %v4610
        %v4942 = vunpack.c.l.b16 %v4611
        %v4943 = vunpack.c.l.b16 %v4612
        %v4944 = vunpack.c.l.b16 %v4613
        %v4945 = vunpack.c.l.b16 %v4614
        %v4946 = vunpack.c.l.b16 %v4615
        %v4947 = vunpack.c.l.b16 %v4616
        %v4948 = vunpack.c.l.b16 %v4617
        %v4949 = vunpack.c.l.b16 %v4618
        %v4950 = vunpack.c.l.b16 %v4619
        %v4951 = vunpack.c.l.b16 %v4620
        %v4952 = vunpack.c.l.b16 %v4621
        %v4953 = vunpack.c.l.b16 %v4622
        %v4954 = vunpack.c.l.b16 %v4623
        %v4955 = vunpack.c.l.b16 %v4624
        %v4956 = vunpack.c.l.b16 %v4625
        %v4957 = vunpack.c.l.b16 %v4626
        %v4958 = vunpack.c.l.b16 %v4627
        %v4959 = vunpack.c.l.b16 %v4628
        %v4960 = vunpack.c.l.b16 %v4629
        %v4961 = vunpack.c.l.b16 %v4630
        %v4962 = vunpack.c.l.b16 %v4631
        %v4963 = vunpack.c.l.b16 %v4632
        %v4964 = vunpack.c.l.b16 %v4633
        %v4965 = vunpack.c.l.b16 %v4634
        %v4966 = vunpack.c.l.b16 %v4635
        %v4967 = vunpack.c.l.b16 %v4636
        %v4968 = vunpack.c.l.b16 %v4637
        %v4969 = vunpack.c.l.b16 %v4638
        %v4970 = vunpack.c.l.b16 %v4639
        %v4971 = vunpack.c.l.b16 %v4640
        %v4972 = vunpack.c.l.b16 %v4641
        %v4973 = vunpack.c.l.b16 %v4642
        %v4974 = vunpack.c.l.b16 %v4643
        %v4975 = vunpack.c.l.b16 %v4644
        %v4976 = vunpack.c.l.b16 %v4645
        %v4977 = vunpack.c.l.b16 %v4646
        %v4978 = vunpack.c.l.b16 %v4647
        %v4979 = vunpack.c.l.b16 %v4648
        %v4980 = vunpack.c.l.b16 %v4649
        %v4981 = vunpack.c.l.b16 %v4650
        %v4982 = vunpack.c.l.b16 %v4651
        %v4983 = vunpack.c.l.b16 %v4652
        %v4984 = vunpack.c.l.b16 %v4653
        %v4985 = vunpack.c.l.b16 %v4654
        %v4986 = vunpack.c.l.b16 %v4655
        %v4987 = vunpack.c.l.b16 %v4656
        %v4988 = vunpack.c.l.b16 %v4657
        %v4989 = vunpack.c.l.b16 %v4658
        %v4990 = vunpack.c.l.b16 %v4659
        %v4991 = vunpack.c.l.b16 %v4660
        %v4992 = vunpack.c.l.b16 %v4661
        %v4993 = vunpack.c.l.b16 %v4662
        %v4994 = vunpack.c.l.b16 %v4663
        %v4995 = vunpack.c.l.b16 %v4664
        %v4996 = vunpack.c.l.b16 %v4665
        %v4997 = vunpack.c.l.b16 %v4666
        %v4998 = vunpack.c.l.b16 %v4667
        %v4999 = vunpack.c.l.b16 %v4668
        %v5000 = vunpack.c.l.b16 %v4669
        %v5001 = vunpack.c.l.b16 %v4670
        %v5002 = vunpack.c.l.b16 %v4671
        %v5003 = vunpack.c.l.b16 %v4672
        %v5004 = vunpack.c.l.b16 %v4673
        %v5005 = vunpack.c.l.b16 %v4674
        %v5006 = vunpack.c.l.b16 %v4675
        %v5007 = vunpack.c.l.b16 %v4676
        %v5008 = vunpack.c.l.b16 %v4677
        %v5009 = vunpack.c.l.b16 %v4678
        %v5010 = vunpack.c.l.b16 %v4679
        %v5011 = vunpack.c.l.b16 %v4680
        %v5012 = vunpack.c.l.b16 %v4681
        %v5013 = vunpack.c.l.b16 %v4682
        %v5014 = vunpack.c.l.b16 %v4683
        %v5015 = vunpack.c.l.b16 %v4684
        %v5016 = vunpack.c.l.b16 %v4685
        %v5017 = vunpack.c.l.b16 %v4686
        %v5018 = vunpack.c.l.b16 %v4687
        %v5019 = vunpack.c.l.b16 %v4688
        %v5020 = vunpack.c.l.b16 %v4689
        %v5021 = vunpack.c.l.b16 %v4690
        %v5022 = vunpack.c.l.b16 %v4691
        %v5023 = vunpack.c.l.b16 %v4692
        %v5024 = vunpack.c.l.b16 %v4693
        %v5025 = vunpack.c.l.b16 %v4694
        %v5026 = vunpack.c.l.b16 %v4695
        %v5027 = vunpack.c.l.b16 %v4696
        %v5028 = vunpack.c.l.b16 %v4697
        %v5029 = vunpack.c.l.b16 %v4698
        %v5030 = vunpack.c.l.b16 %v4699
        %v5031 = vunpack.c.l.b16 %v4700
        %v5032 = vunpack.c.l.b16 %v4701
        %v5033 = vunpack.c.l.b16 %v4702
        %v5034 = vunpack.c.l.b16 %v4703
        %v5035 = vunpack.c.l.b16 %v4704
        %v5036 = vunpack.c.l.b16 %v4705
        %v5037 = vunpack.c.l.b16 %v4706
        %v5038 = vunpack.c.l.b16 %v4707
        %v5039 = vunpack.c.l.b16 %v4708
        %v5040 = vunpack.c.l.b16 %v4709
        %v5041 = vunpack.c.l.b16 %v4710
        %v5042 = vunpack.c.l.b16 %v4711
        %v5043 = vunpack.c.l.b16 %v4712
        %v5044 = vunpack.c.l.b16 %v4713
        %v5045 = vunpack.c.l.b16 %v4714
        %v5046 = vunpack.c.l.b16 %v4715
        %v5047 = vunpack.c.l.b16 %v4716
        %v5048 = vunpack.c.l.b16 %v4717
        %v5049 = vunpack.c.l.b16 %v4718
        %v5050 = vunpack.c.l.b16 %v4719
        %v5051 = vunpack.c.l.b16 %v4720
        %v5052 = vunpack.c.l.b16 %v4721
        %v5053 = vunpack.c.l.b16 %v4722
        %v5054 = vunpack.c.l.b16 %v4723
        %v5055 = vunpack.c.l.b16 %v4724
        %v5056 = vunpack.c.l.b16 %v4725
        %v5057 = vunpack.c.l.b16 %v4726
        %v5058 = vunpack.c.l.b16 %v4727
        %v5059 = vunpack.c.l.b16 %v4728
        %v5060 = vunpack.c.l.b16 %v4729
        %v5061 = vunpack.c.l.b16 %v4730
        %v5062 = vunpack.c.l.b16 %v4731
        %v5063 = vunpack.c.l.b16 %v4732
        %v5064 = vunpack.c.l.b16 %v4733
        %v5065 = vunpack.c.l.b16 %v4734
        %v5066 = vunpack.c.l.b16 %v4735
        %v5067 = vpack.c.b16 %v4924, %v4923
        %v5068 = vpack.c.b16 %v4926, %v4925
        %v5069 = vpack.c.b16 %v4928, %v4927
        %v5070 = vpack.c.b16 %v4930, %v4929
        %v5071 = vpack.c.b16 %v4932, %v4931
        %v5072 = vpack.c.b16 %v4934, %v4933
        %v5073 = vpack.c.b16 %v4936, %v4935
        %v5074 = vpack.c.b16 %v4938, %v4937
        %v5075 = vpack.c.b16 %v4940, %v4939
        %v5076 = vpack.c.b16 %v4942, %v4941
        %v5077 = vpack.c.b16 %v4944, %v4943
        %v5078 = vpack.c.b16 %v4946, %v4945
        %v5079 = vpack.c.b16 %v4948, %v4947
        %v5080 = vpack.c.b16 %v4950, %v4949
        %v5081 = vpack.c.b16 %v4952, %v4951
        %v5082 = vpack.c.b16 %v4954, %v4953
        %v5083 = vpack.c.b16 %v4956, %v4955
        %v5084 = vpack.c.b16 %v4958, %v4957
        %v5085 = vpack.c.b16 %v4960, %v4959
        %v5086 = vpack.c.b16 %v4962, %v4961
        %v5087 = vpack.c.b16 %v4964, %v4963
        %v5088 = vpack.c.b16 %v4966, %v4965
        %v5089 = vpack.c.b16 %v4968, %v4967
        %v5090 = vpack.c.b16 %v4970, %v4969
        %v5091 = vpack.c.b16 %v4972, %v4971
        %v5092 = vpack.c.b16 %v4974, %v4973
        %v5093 = vpack.c.b16 %v4976, %v4975
        %v5094 = vpack.c.b16 %v4978, %v4977
        %v5095 = vpack.c.b16 %v4980, %v4979
        %v5096 = vpack.c.b16 %v4982, %v4981
        %v5097 = vpack.c.b16 %v4984, %v4983
        %v5098 = vpack.c.b16 %v4986, %v4985
        %v5099 = vpack.c.b16 %v4988, %v4987
        %v5100 = vpack.c.b16 %v4990, %v4989
        %v5101 = vpack.c.b16 %v4992, %v4991
        %v5102 = vpack.c.b16 %v4994, %v4993
        %v5103 = vpack.c.b16 %v4996, %v4995
        %v5104 = vpack.c.b16 %v4998, %v4997
        %v5105 = vpack.c.b16 %v5000, %v4999
        %v5106 = vpack.c.b16 %v5002, %v5001
        %v5107 = vpack.c.b16 %v5004, %v5003
        %v5108 = vpack.c.b16 %v5006, %v5005
        %v5109 = vpack.c.b16 %v5008, %v5007
        %v5110 = vpack.c.b16 %v5010, %v5009
        %v5111 = vpack.c.b16 %v5012, %v5011
        %v5112 = vpack.c.b16 %v5014, %v5013
        %v5113 = vpack.c.b16 %v5016, %v5015
        %v5114 = vpack.c.b16 %v5018, %v5017
        %v5115 = vpack.c.b16 %v5020, %v5019
        %v5116 = vpack.c.b16 %v5022, %v5021
        %v5117 = vpack.c.b16 %v5024, %v5023
        %v5118 = vpack.c.b16 %v5026, %v5025
        %v5119 = vpack.c.b16 %v5028, %v5027
        %v5120 = vpack.c.b16 %v5030, %v5029
        %v5121 = vpack.c.b16 %v5032, %v5031
        %v5122 = vpack.c.b16 %v5034, %v5033
        %v5123 = vpack.c.b16 %v5036, %v5035
        %v5124 = vpack.c.b16 %v5038, %v5037
        %v5125 = vpack.c.b16 %v5040, %v5039
        %v5126 = vpack.c.b16 %v5042, %v5041
        %v5127 = vpack.c.b16 %v5044, %v5043
        %v5128 = vpack.c.b16 %v5046, %v5045
        %v5129 = vpack.c.b16 %v5048, %v5047
        %v5130 = vpack.c.b16 %v5050, %v5049
        %v5131 = vpack.c.b16 %v5052, %v5051
        %v5132 = vpack.c.b16 %v5054, %v5053
        %v5133 = vpack.c.b16 %v5056, %v5055
        %v5134 = vpack.c.b16 %v5058, %v5057
        %v5135 = vpack.c.b16 %v5060, %v5059
        %v5136 = vpack.c.b16 %v5062, %v5061
        %v5137 = vpack.c.b16 %v5064, %v5063
        %v5138 = vpack.c.b16 %v5066, %v5065
        %5211 = vmatprep.subr.bf16.mxu0 0
        %5212 = vmatpush1.bf16.msra.mxu0 %v5067
        %5213 = vmatprep.subr.bf16.mxu0 0
        %5214 = vmatpush1.bf16.msra.mxu0 %v5068
        %5215 = vmatprep.subr.bf16.mxu0 0
        %5216 = vmatpush1.bf16.msra.mxu0 %v5069
        %5217 = vmatprep.subr.bf16.mxu0 0
        %5218 = vmatpush1.bf16.msra.mxu0 %v5070
        %5219 = vmatprep.subr.bf16.mxu0 0
        %5220 = vmatpush1.bf16.msra.mxu0 %v5071
        %5221 = vmatprep.subr.bf16.mxu0 0
        %5222 = vmatpush1.bf16.msra.mxu0 %v5072
        %5223 = vmatprep.subr.bf16.mxu0 0
        %5224 = vmatpush1.bf16.msra.mxu0 %v5073
        %5225 = vmatprep.subr.bf16.mxu0 0
        %5226 = vmatpush1.bf16.msra.mxu0 %v5074
        %5227 = vmatprep.subr.bf16.mxu0 0
        %5228 = vmatpush1.bf16.msra.mxu0 %v5075
        %5229 = vmatprep.subr.bf16.mxu0 0
        %5230 = vmatpush1.bf16.msra.mxu0 %v5076
        %5231 = vmatprep.subr.bf16.mxu0 0
        %5232 = vmatpush1.bf16.msra.mxu0 %v5077
        %5233 = vmatprep.subr.bf16.mxu0 0
        %5234 = vmatpush1.bf16.msra.mxu0 %v5078
        %5235 = vmatprep.subr.bf16.mxu0 0
        %5236 = vmatpush1.bf16.msra.mxu0 %v5079
        %5237 = vmatprep.subr.bf16.mxu0 0
        %5238 = vmatpush1.bf16.msra.mxu0 %v5080
        %5239 = vmatprep.subr.bf16.mxu0 0
        %5240 = vmatpush1.bf16.msra.mxu0 %v5081
        %5241 = vmatprep.subr.bf16.mxu0 0
        %5242 = vmatpush1.bf16.msra.mxu0 %v5082
        %5243 = vmatprep.mubr.bf16.mxu0 %v3804
        %5244 = vmatmul.mubr.bf16.gmra.mrb[0].mxu0 %v3753
        %v5245 = vpop.f32.mrb[0].mxu0
        %v5246 = vadd.f32 %v4777, %v5245
        %v5247 = vpop.f32.mrb[0].mxu0
        %v5248 = vpop.f32.mrb[0].mxu0
        %v5249 = vadd.f32 %v4777, %v5248
        %v5250 = vpop.f32.mrb[0].mxu0
        %5251 = vmatprep.mubr.bf16.mxu0 %v3812
        %5252 = vmatmul.mubr.bf16.gmra.mrb[0].mxu0 %v3754
        %v5253 = vpop.f32.mrb[0].mxu0
        %v5254 = vadd.f32 %v4777, %v5253
        %v5255 = vpop.f32.mrb[0].mxu0
        %v5256 = vpop.f32.mrb[0].mxu0
        %v5257 = vadd.f32 %v4777, %v5256
        %v5258 = vpop.f32.mrb[0].mxu0
        %5259 = vmatprep.mubr.bf16.mxu0 %v3820
        %5260 = vmatmul.mubr.bf16.gmra.mrb[0].mxu0 %v3755
        %v5261 = vpop.f32.mrb[0].mxu0
        %v5262 = vadd.f32 %v4777, %v5261
        %v5263 = vpop.f32.mrb[0].mxu0
        %v5264 = vpop.f32.mrb[0].mxu0
        %v5265 = vadd.f32 %v4777, %v5264
        %v5266 = vpop.f32.mrb[0].mxu0
        %5267 = vmatprep.mubr.bf16.mxu0 %v3828
        %5268 = vmatmul.mubr.bf16.gmra.mrb[0].mxu0 %v3756
        %v5269 = vpop.f32.mrb[0].mxu0
        %v5270 = vadd.f32 %v4777, %v5269
        %v5271 = vpop.f32.mrb[0].mxu0
        %v5272 = vpop.f32.mrb[0].mxu0
        %v5273 = vadd.f32 %v4777, %v5272
        %v5274 = vpop.f32.mrb[0].mxu0
        %5275 = vmatprep.mubr.bf16.mxu0 %v3836
        %5276 = vmatmul.mubr.bf16.gmra.mrb[0].mxu0 %v3757
        %v5277 = vpop.f32.mrb[0].mxu0
        %v5278 = vadd.f32 %v4777, %v5277
        %v5279 = vpop.f32.mrb[0].mxu0
        %v5280 = vpop.f32.mrb[0].mxu0
        %v5281 = vadd.f32 %v4777, %v5280
        %v5282 = vpop.f32.mrb[0].mxu0
        %5283 = vmatprep.mubr.bf16.mxu0 %v3844
        %5284 = vmatmul.mubr.bf16.gmra.mrb[0].mxu0 %v3758
        %v5285 = vpop.f32.mrb[0].mxu0
        %v5286 = vadd.f32 %v4777, %v5285
        %v5287 = vpop.f32.mrb[0].mxu0
        %v5288 = vpop.f32.mrb[0].mxu0
        %v5289 = vadd.f32 %v4777, %v5288
        %v5290 = vpop.f32.mrb[0].mxu0
        %5291 = vmatprep.mubr.bf16.mxu0 %v3852
        %5292 = vmatmul.mubr.bf16.gmra.mrb[0].mxu0 %v3759
        %v5293 = vpop.f32.mrb[0].mxu0
        %v5294 = vadd.f32 %v4777, %v5293
        %v5295 = vpop.f32.mrb[0].mxu0
        %v5296 = vpop.f32.mrb[0].mxu0
        %v5297 = vadd.f32 %v4777, %v5296
        %v5298 = vpop.f32.mrb[0].mxu0
        %5299 = vmatprep.mubr.bf16.mxu0 %v3860
        %5300 = vmatmul.mubr.bf16.gmra.mrb[0].mxu0 %v3760
        %v5301 = vpop.f32.mrb[0].mxu0
        %v5302 = vadd.f32 %v4777, %v5301
        %v5303 = vpop.f32.mrb[0].mxu0
        %v5304 = vpop.f32.mrb[0].mxu0
        %v5305 = vadd.f32 %v4777, %v5304
        %v5306 = vpop.f32.mrb[0].mxu0
        %5307 = vmatprep.mubr.bf16.mxu0 %v3868
        %5308 = vmatmul.mubr.bf16.gmra.mrb[0].mxu0 %v3761
        %v5309 = vpop.f32.mrb[0].mxu0
        %v5310 = vadd.f32 %v4777, %v5309
        %v5311 = vpop.f32.mrb[0].mxu0
        %v5312 = vpop.f32.mrb[0].mxu0
        %v5313 = vadd.f32 %v4777, %v5312
        %v5314 = vpop.f32.mrb[0].mxu0
        %5315 = vmatprep.mubr.bf16.mxu0 %v3876
        %5316 = vmatmul.mubr.bf16.gmra.mrb[0].mxu0 %v3762
        %v5317 = vpop.f32.mrb[0].mxu0
        %v5318 = vadd.f32 %v4777, %v5317
        %v5319 = vpop.f32.mrb[0].mxu0
        %v5320 = vpop.f32.mrb[0].mxu0
        %v5321 = vadd.f32 %v4777, %v5320
        %v5322 = vpop.f32.mrb[0].mxu0
        %5323 = vmatprep.mubr.bf16.mxu0 %v3884
        %5324 = vmatmul.mubr.bf16.gmra.mrb[0].mxu0 %v3763
        %v5325 = vpop.f32.mrb[0].mxu0
        %v5326 = vadd.f32 %v4777, %v5325
        %v5327 = vpop.f32.mrb[0].mxu0
        %v5328 = vpop.f32.mrb[0].mxu0
        %v5329 = vadd.f32 %v4777, %v5328
        %v5330 = vpop.f32.mrb[0].mxu0
        %5331 = vmatprep.mubr.bf16.mxu0 %v3892
        %5332 = vmatmul.mubr.bf16.gmra.mrb[0].mxu0 %v3764
        %v5333 = vpop.f32.mrb[0].mxu0
        %v5334 = vadd.f32 %v4777, %v5333
        %v5335 = vpop.f32.mrb[0].mxu0
        %v5336 = vpop.f32.mrb[0].mxu0
        %v5337 = vadd.f32 %v4777, %v5336
        %v5338 = vpop.f32.mrb[0].mxu0
        %5339 = vmatprep.mubr.bf16.mxu0 %v3900
        %5340 = vmatmul.mubr.bf16.gmra.mrb[0].mxu0 %v3765
        %v5341 = vpop.f32.mrb[0].mxu0
        %v5342 = vadd.f32 %v4777, %v5341
        %v5343 = vpop.f32.mrb[0].mxu0
        %v5344 = vpop.f32.mrb[0].mxu0
        %v5345 = vadd.f32 %v4777, %v5344
        %v5346 = vpop.f32.mrb[0].mxu0
        %5347 = vmatprep.mubr.bf16.mxu0 %v3908
        %5348 = vmatmul.mubr.bf16.gmra.mrb[0].mxu0 %v3766
        %v5349 = vpop.f32.mrb[0].mxu0
        %v5350 = vadd.f32 %v4777, %v5349
        %v5351 = vpop.f32.mrb[0].mxu0
        %v5352 = vpop.f32.mrb[0].mxu0
        %v5353 = vadd.f32 %v4777, %v5352
        %v5354 = vpop.f32.mrb[0].mxu0
        %5355 = vmatprep.mubr.bf16.mxu0 %v3916
        %5356 = vmatmul.mubr.bf16.gmra.mrb[0].mxu0 %v3767
        %v5357 = vpop.f32.mrb[0].mxu0
        %v5358 = vadd.f32 %v4777, %v5357
        %v5359 = vpop.f32.mrb[0].mxu0
        %v5360 = vpop.f32.mrb[0].mxu0
        %v5361 = vadd.f32 %v4777, %v5360
        %v5362 = vpop.f32.mrb[0].mxu0
        %5363 = vmatprep.mubr.bf16.mxu0 %v3924
        %5364 = vmatmul.mubr.bf16.gmra.mrb[0].mxu0 %v3768
        %v5365 = vpop.f32.mrb[0].mxu0
        %v5366 = vadd.f32 %v4777, %v5365
        %v5367 = vpop.f32.mrb[0].mxu0
        %v5368 = vpop.f32.mrb[0].mxu0
        %v5369 = vadd.f32 %v4777, %v5368
        %v5370 = vpop.f32.mrb[0].mxu0
        %5371 = vmatprep.mubr.bf16.mxu0 %v3932
        %5372 = vmatmul.mubr.bf16.gmra.mrb[0].mxu0 %v3769
        %v5373 = vpop.f32.mrb[0].mxu0
        %v5374 = vadd.f32 %v4777, %v5373
        %v5375 = vpop.f32.mrb[0].mxu0
        %v5376 = vpop.f32.mrb[0].mxu0
        %v5377 = vadd.f32 %v4777, %v5376
        %v5378 = vpop.f32.mrb[0].mxu0
        %5379 = vmatprep.mubr.bf16.mxu0 %v3935
        %5380 = vmatmul.mubr.bf16.gmra.mrb[0].mxu0 %v3770
        %v5381 = vpop.f32.mrb[0].mxu0
        %v5382 = vadd.f32 %v4777, %v5381
        %v5383 = vpop.f32.mrb[0].mxu0
        %v5384 = vpop.f32.mrb[0].mxu0
        %v5385 = vadd.f32 %v4777, %v5384
        %v5386 = vpop.f32.mrb[0].mxu0
        %5387 = vdwg.mxu0
        %5388 = vmatprep.subr.bf16.mxu0 0
        %5389 = vmatpush1.bf16.msra.mxu0 %v5083
        %5390 = vmatprep.subr.bf16.mxu0 0
        %5391 = vmatpush1.bf16.msra.mxu0 %v5084
        %5392 = vmatprep.subr.bf16.mxu0 0
        %5393 = vmatpush1.bf16.msra.mxu0 %v5085
        %5394 = vmatprep.subr.bf16.mxu0 0
        %5395 = vmatpush1.bf16.msra.mxu0 %v5086
        %5396 = vmatprep.subr.bf16.mxu0 0
        %5397 = vmatpush1.bf16.msra.mxu0 %v5087
        %5398 = vmatprep.subr.bf16.mxu0 0
        %5399 = vmatpush1.bf16.msra.mxu0 %v5088
        %5400 = vmatprep.subr.bf16.mxu0 0
        %5401 = vmatpush1.bf16.msra.mxu0 %v5089
        %5402 = vmatprep.subr.bf16.mxu0 0
        %5403 = vmatpush1.bf16.msra.mxu0 %v5090
        %5404 = vmatprep.subr.bf16.mxu0 0
        %5405 = vmatpush1.bf16.msra.mxu0 %v5091
        %5406 = vmatprep.subr.bf16.mxu0 0
        %5407 = vmatpush1.bf16.msra.mxu0 %v5092
        %5408 = vmatprep.subr.bf16.mxu0 0
        %5409 = vmatpush1.bf16.msra.mxu0 %v5093
        %5410 = vmatprep.subr.bf16.mxu0 0
        %5411 = vmatpush1.bf16.msra.mxu0 %v5094
        %5412 = vmatprep.subr.bf16.mxu0 0
        %5413 = vmatpush1.bf16.msra.mxu0 %v5095
        %5414 = vmatprep.subr.bf16.mxu0 0
        %5415 = vmatpush1.bf16.msra.mxu0 %v5096
        %5416 = vmatprep.subr.bf16.mxu0 0
        %5417 = vmatpush1.bf16.msra.mxu0 %v5097
        %5418 = vmatprep.subr.bf16.mxu0 0
        %5419 = vmatpush1.bf16.msra.mxu0 %v5098
        %5420 = vmatprep.mubr.bf16.mxu0 %v4020
        %5421 = vmatmul.mubr.bf16.gmra.mrb[0].mxu0 %v3960
        %v5422 = vpop.f32.mrb[0].mxu0
        %v5423 = vadd.f32 %v5246, %v5422
        %v5424 = vpop.f32.mrb[0].mxu0
        %v5425 = vpop.f32.mrb[0].mxu0
        %v5426 = vadd.f32 %v5249, %v5425
        %v5427 = vpop.f32.mrb[0].mxu0
        %5428 = vmatprep.mubr.bf16.mxu0 %v3964
        %5429 = vmatmul.mubr.bf16.gmra.mrb[0].mxu0 %v3962
        %v5430 = vpop.f32.mrb[0].mxu0
        %v5431 = vadd.f32 %v5254, %v5430
        %v5432 = vpop.f32.mrb[0].mxu0
        %v5433 = vpop.f32.mrb[0].mxu0
        %v5434 = vadd.f32 %v5257, %v5433
        %v5435 = vpop.f32.mrb[0].mxu0
        %5436 = vmatprep.mubr.bf16.mxu0 %v3966
        %5437 = vmatmul.mubr.bf16.gmra.mrb[0].mxu0 %v3964
        %v5438 = vpop.f32.mrb[0].mxu0
        %v5439 = vadd.f32 %v5262, %v5438
        %v5440 = vpop.f32.mrb[0].mxu0
        %v5441 = vpop.f32.mrb[0].mxu0
        %v5442 = vadd.f32 %v5265, %v5441
        %v5443 = vpop.f32.mrb[0].mxu0
        %5444 = vmatprep.mubr.bf16.mxu0 %v3968
        %5445 = vmatmul.mubr.bf16.gmra.mrb[0].mxu0 %v3966
        %v5446 = vpop.f32.mrb[0].mxu0
        %v5447 = vadd.f32 %v5270, %v5446
        %v5448 = vpop.f32.mrb[0].mxu0
        %v5449 = vpop.f32.mrb[0].mxu0
        %v5450 = vadd.f32 %v5273, %v5449
        %v5451 = vpop.f32.mrb[0].mxu0
        %5452 = vmatprep.mubr.bf16.mxu0 %v3970
        %5453 = vmatmul.mubr.bf16.gmra.mrb[0].mxu0 %v3968
        %v5454 = vpop.f32.mrb[0].mxu0
        %v5455 = vadd.f32 %v5278, %v5454
        %v5456 = vpop.f32.mrb[0].mxu0
        %v5457 = vpop.f32.mrb[0].mxu0
        %v5458 = vadd.f32 %v5281, %v5457
        %v5459 = vpop.f32.mrb[0].mxu0
        %5460 = vmatprep.mubr.bf16.mxu0 %v3972
        %5461 = vmatmul.mubr.bf16.gmra.mrb[0].mxu0 %v3970
        %v5462 = vpop.f32.mrb[0].mxu0
        %v5463 = vadd.f32 %v5286, %v5462
        %v5464 = vpop.f32.mrb[0].mxu0
        %v5465 = vpop.f32.mrb[0].mxu0
        %v5466 = vadd.f32 %v5289, %v5465
        %v5467 = vpop.f32.mrb[0].mxu0
        %5468 = vmatprep.mubr.bf16.mxu0 %v3974
        %5469 = vmatmul.mubr.bf16.gmra.mrb[0].mxu0 %v3972
        %v5470 = vpop.f32.mrb[0].mxu0
        %v5471 = vadd.f32 %v5294, %v5470
        %v5472 = vpop.f32.mrb[0].mxu0
        %v5473 = vpop.f32.mrb[0].mxu0
        %v5474 = vadd.f32 %v5297, %v5473
        %v5475 = vpop.f32.mrb[0].mxu0
        %5476 = vmatprep.mubr.bf16.mxu0 %v3976
        %5477 = vmatmul.mubr.bf16.gmra.mrb[0].mxu0 %v3974
        %v5478 = vpop.f32.mrb[0].mxu0
        %v5479 = vadd.f32 %v5302, %v5478
        %v5480 = vpop.f32.mrb[0].mxu0
        %v5481 = vpop.f32.mrb[0].mxu0
        %v5482 = vadd.f32 %v5305, %v5481
        %v5483 = vpop.f32.mrb[0].mxu0
        %5484 = vmatprep.mubr.bf16.mxu0 %v3978
        %5485 = vmatmul.mubr.bf16.gmra.mrb[0].mxu0 %v3976
        %v5486 = vpop.f32.mrb[0].mxu0
        %v5487 = vadd.f32 %v5310, %v5486
        %v5488 = vpop.f32.mrb[0].mxu0
        %v5489 = vpop.f32.mrb[0].mxu0
        %v5490 = vadd.f32 %v5313, %v5489
        %v5491 = vpop.f32.mrb[0].mxu0
        %5492 = vmatprep.mubr.bf16.mxu0 %v3980
        %5493 = vmatmul.mubr.bf16.gmra.mrb[0].mxu0 %v3978
        %v5494 = vpop.f32.mrb[0].mxu0
        %v5495 = vadd.f32 %v5318, %v5494
        %v5496 = vpop.f32.mrb[0].mxu0
        %v5497 = vpop.f32.mrb[0].mxu0
        %v5498 = vadd.f32 %v5321, %v5497
        %v5499 = vpop.f32.mrb[0].mxu0
        %5500 = vmatprep.mubr.bf16.mxu0 %v3982
        %5501 = vmatmul.mubr.bf16.gmra.mrb[0].mxu0 %v3980
        %v5502 = vpop.f32.mrb[0].mxu0
        %v5503 = vadd.f32 %v5326, %v5502
        %v5504 = vpop.f32.mrb[0].mxu0
        %v5505 = vpop.f32.mrb[0].mxu0
        %v5506 = vadd.f32 %v5329, %v5505
        %v5507 = vpop.f32.mrb[0].mxu0
        %5508 = vmatprep.mubr.bf16.mxu0 %v3984
        %5509 = vmatmul.mubr.bf16.gmra.mrb[0].mxu0 %v3982
        %v5510 = vpop.f32.mrb[0].mxu0
        %v5511 = vadd.f32 %v5334, %v5510
        %v5512 = vpop.f32.mrb[0].mxu0
        %v5513 = vpop.f32.mrb[0].mxu0
        %v5514 = vadd.f32 %v5337, %v5513
        %v5515 = vpop.f32.mrb[0].mxu0
        %5516 = vmatprep.mubr.bf16.mxu0 %v3986
        %5517 = vmatmul.mubr.bf16.gmra.mrb[0].mxu0 %v3984
        %v5518 = vpop.f32.mrb[0].mxu0
        %v5519 = vadd.f32 %v5342, %v5518
        %v5520 = vpop.f32.mrb[0].mxu0
        %v5521 = vpop.f32.mrb[0].mxu0
        %v5522 = vadd.f32 %v5345, %v5521
        %v5523 = vpop.f32.mrb[0].mxu0
        %5524 = vmatprep.mubr.bf16.mxu0 %v3988
        %5525 = vmatmul.mubr.bf16.gmra.mrb[0].mxu0 %v3986
        %v5526 = vpop.f32.mrb[0].mxu0
        %v5527 = vadd.f32 %v5350, %v5526
        %v5528 = vpop.f32.mrb[0].mxu0
        %v5529 = vpop.f32.mrb[0].mxu0
        %v5530 = vadd.f32 %v5353, %v5529
        %v5531 = vpop.f32.mrb[0].mxu0
        %5532 = vmatprep.mubr.bf16.mxu0 %v3990
        %5533 = vmatmul.mubr.bf16.gmra.mrb[0].mxu0 %v3988
        %v5534 = vpop.f32.mrb[0].mxu0
        %v5535 = vadd.f32 %v5358, %v5534
        %v5536 = vpop.f32.mrb[0].mxu0
        %v5537 = vpop.f32.mrb[0].mxu0
        %v5538 = vadd.f32 %v5361, %v5537
        %v5539 = vpop.f32.mrb[0].mxu0
        %5540 = vmatprep.mubr.bf16.mxu0 %v3992
        %5541 = vmatmul.mubr.bf16.gmra.mrb[0].mxu0 %v3990
        %v5542 = vpop.f32.mrb[0].mxu0
        %v5543 = vadd.f32 %v5366, %v5542
        %v5544 = vpop.f32.mrb[0].mxu0
        %v5545 = vpop.f32.mrb[0].mxu0
        %v5546 = vadd.f32 %v5369, %v5545
        %v5547 = vpop.f32.mrb[0].mxu0
        %5548 = vmatprep.mubr.bf16.mxu0 %v4022
        %5549 = vmatmul.mubr.bf16.gmra.mrb[0].mxu0 %v3992
        %v5550 = vpop.f32.mrb[0].mxu0
        %v5551 = vadd.f32 %v5374, %v5550
        %v5552 = vpop.f32.mrb[0].mxu0
        %v5553 = vpop.f32.mrb[0].mxu0
        %v5554 = vadd.f32 %v5377, %v5553
        %v5555 = vpop.f32.mrb[0].mxu0
        %5556 = vmatprep.mubr.bf16.mxu0 %v4021
        %5557 = vmatmul.mubr.bf16.gmra.mrb[0].mxu0 %v3991
        %v5558 = vpop.f32.mrb[0].mxu0
        %v5559 = vadd.f32 %v5382, %v5558
        %v5560 = vpop.f32.mrb[0].mxu0
        %v5561 = vpop.f32.mrb[0].mxu0
        %v5562 = vadd.f32 %v5385, %v5561
        %v5563 = vpop.f32.mrb[0].mxu0
        %5564 = vdwg.mxu0
        %5565 = vmatprep.subr.bf16.mxu0 0
        %5566 = vmatpush1.bf16.msra.mxu0 %v5099
        %5567 = vmatprep.subr.bf16.mxu0 0
        %5568 = vmatpush1.bf16.msra.mxu0 %v5100
        %5569 = vmatprep.subr.bf16.mxu0 0
        %5570 = vmatpush1.bf16.msra.mxu0 %v5101
        %5571 = vmatprep.subr.bf16.mxu0 0
        %5572 = vmatpush1.bf16.msra.mxu0 %v5102
        %5573 = vmatprep.subr.bf16.mxu0 0
        %5574 = vmatpush1.bf16.msra.mxu0 %v5103
        %5575 = vmatprep.subr.bf16.mxu0 0
        %5576 = vmatpush1.bf16.msra.mxu0 %v5104
        %5577 = vmatprep.subr.bf16.mxu0 0
        %5578 = vmatpush1.bf16.msra.mxu0 %v5105
        %5579 = vmatprep.subr.bf16.mxu0 0
        %5580 = vmatpush1.bf16.msra.mxu0 %v5106
        %5581 = vmatprep.subr.bf16.mxu0 0
        %5582 = vmatpush1.bf16.msra.mxu0 %v5107
        %5583 = vmatprep.subr.bf16.mxu0 0
        %5584 = vmatpush1.bf16.msra.mxu0 %v5108
        %5585 = vmatprep.subr.bf16.mxu0 0
        %5586 = vmatpush1.bf16.msra.mxu0 %v5109
        %5587 = vmatprep.subr.bf16.mxu0 0
        %5588 = vmatpush1.bf16.msra.mxu0 %v5110
        %5589 = vmatprep.subr.bf16.mxu0 0
        %5590 = vmatpush1.bf16.msra.mxu0 %v5111
        %5591 = vmatprep.subr.bf16.mxu0 0
        %5592 = vmatpush1.bf16.msra.mxu0 %v5112
        %5593 = vmatprep.subr.bf16.mxu0 0
        %5594 = vmatpush1.bf16.msra.mxu0 %v5113
        %5595 = vmatprep.subr.bf16.mxu0 0
        %5596 = vmatpush1.bf16.msra.mxu0 %v5114
        %5597 = vmatprep.mubr.bf16.mxu0 %v4140
        %5598 = vmatmul.mubr.bf16.gmra.mrb[0].mxu0 %v4041
        %v5599 = vpop.f32.mrb[0].mxu0
        %v5600 = vadd.f32 %v5423, %v5599
        %v5601 = vpop.f32.mrb[0].mxu0
        %v5602 = vpop.f32.mrb[0].mxu0
        %v5603 = vadd.f32 %v5426, %v5602
        %v5604 = vpop.f32.mrb[0].mxu0
        %5605 = vmatprep.mubr.bf16.mxu0 %v4142
        %5606 = vmatmul.mubr.bf16.gmra.mrb[0].mxu0 %v4045
        %v5607 = vpop.f32.mrb[0].mxu0
        %v5608 = vadd.f32 %v5431, %v5607
        %v5609 = vpop.f32.mrb[0].mxu0
        %v5610 = vpop.f32.mrb[0].mxu0
        %v5611 = vadd.f32 %v5434, %v5610
        %v5612 = vpop.f32.mrb[0].mxu0
        %5613 = vmatprep.mubr.bf16.mxu0 %v4144
        %5614 = vmatmul.mubr.bf16.gmra.mrb[0].mxu0 %v4049
        %v5615 = vpop.f32.mrb[0].mxu0
        %v5616 = vadd.f32 %v5439, %v5615
        %v5617 = vpop.f32.mrb[0].mxu0
        %v5618 = vpop.f32.mrb[0].mxu0
        %v5619 = vadd.f32 %v5442, %v5618
        %v5620 = vpop.f32.mrb[0].mxu0
        %5621 = vmatprep.mubr.bf16.mxu0 %v4146
        %5622 = vmatmul.mubr.bf16.gmra.mrb[0].mxu0 %v4053
        %v5623 = vpop.f32.mrb[0].mxu0
        %v5624 = vadd.f32 %v5447, %v5623
        %v5625 = vpop.f32.mrb[0].mxu0
        %v5626 = vpop.f32.mrb[0].mxu0
        %v5627 = vadd.f32 %v5450, %v5626
        %v5628 = vpop.f32.mrb[0].mxu0
        %5629 = vmatprep.mubr.bf16.mxu0 %v4148
        %5630 = vmatmul.mubr.bf16.gmra.mrb[0].mxu0 %v4057
        %v5631 = vpop.f32.mrb[0].mxu0
        %v5632 = vadd.f32 %v5455, %v5631
        %v5633 = vpop.f32.mrb[0].mxu0
        %v5634 = vpop.f32.mrb[0].mxu0
        %v5635 = vadd.f32 %v5458, %v5634
        %v5636 = vpop.f32.mrb[0].mxu0
        %5637 = vmatprep.mubr.bf16.mxu0 %v4150
        %5638 = vmatmul.mubr.bf16.gmra.mrb[0].mxu0 %v4061
        %v5639 = vpop.f32.mrb[0].mxu0
        %v5640 = vadd.f32 %v5463, %v5639
        %v5641 = vpop.f32.mrb[0].mxu0
        %v5642 = vpop.f32.mrb[0].mxu0
        %v5643 = vadd.f32 %v5466, %v5642
        %v5644 = vpop.f32.mrb[0].mxu0
        %5645 = vmatprep.mubr.bf16.mxu0 %v4152
        %5646 = vmatmul.mubr.bf16.gmra.mrb[0].mxu0 %v4065
        %v5647 = vpop.f32.mrb[0].mxu0
        %v5648 = vadd.f32 %v5471, %v5647
        %v5649 = vpop.f32.mrb[0].mxu0
        %v5650 = vpop.f32.mrb[0].mxu0
        %v5651 = vadd.f32 %v5474, %v5650
        %v5652 = vpop.f32.mrb[0].mxu0
        %5653 = vmatprep.mubr.bf16.mxu0 %v4154
        %5654 = vmatmul.mubr.bf16.gmra.mrb[0].mxu0 %v4069
        %v5655 = vpop.f32.mrb[0].mxu0
        %v5656 = vadd.f32 %v5479, %v5655
        %v5657 = vpop.f32.mrb[0].mxu0
        %v5658 = vpop.f32.mrb[0].mxu0
        %v5659 = vadd.f32 %v5482, %v5658
        %v5660 = vpop.f32.mrb[0].mxu0
        %5661 = vmatprep.mubr.bf16.mxu0 %v4156
        %5662 = vmatmul.mubr.bf16.gmra.mrb[0].mxu0 %v4073
        %v5663 = vpop.f32.mrb[0].mxu0
        %v5664 = vadd.f32 %v5487, %v5663
        %v5665 = vpop.f32.mrb[0].mxu0
        %v5666 = vpop.f32.mrb[0].mxu0
        %v5667 = vadd.f32 %v5490, %v5666
        %v5668 = vpop.f32.mrb[0].mxu0
        %5669 = vmatprep.mubr.bf16.mxu0 %v4158
        %5670 = vmatmul.mubr.bf16.gmra.mrb[0].mxu0 %v4077
        %v5671 = vpop.f32.mrb[0].mxu0
        %v5672 = vadd.f32 %v5495, %v5671
        %v5673 = vpop.f32.mrb[0].mxu0
        %v5674 = vpop.f32.mrb[0].mxu0
        %v5675 = vadd.f32 %v5498, %v5674
        %v5676 = vpop.f32.mrb[0].mxu0
        %5677 = vmatprep.mubr.bf16.mxu0 %v4160
        %5678 = vmatmul.mubr.bf16.gmra.mrb[0].mxu0 %v4081
        %v5679 = vpop.f32.mrb[0].mxu0
        %v5680 = vadd.f32 %v5503, %v5679
        %v5681 = vpop.f32.mrb[0].mxu0
        %v5682 = vpop.f32.mrb[0].mxu0
        %v5683 = vadd.f32 %v5506, %v5682
        %v5684 = vpop.f32.mrb[0].mxu0
        %5685 = vmatprep.mubr.bf16.mxu0 %v4162
        %5686 = vmatmul.mubr.bf16.gmra.mrb[0].mxu0 %v4085
        %v5687 = vpop.f32.mrb[0].mxu0
        %v5688 = vadd.f32 %v5511, %v5687
        %v5689 = vpop.f32.mrb[0].mxu0
        %v5690 = vpop.f32.mrb[0].mxu0
        %v5691 = vadd.f32 %v5514, %v5690
        %v5692 = vpop.f32.mrb[0].mxu0
        %5693 = vmatprep.mubr.bf16.mxu0 %v4164
        %5694 = vmatmul.mubr.bf16.gmra.mrb[0].mxu0 %v4089
        %v5695 = vpop.f32.mrb[0].mxu0
        %v5696 = vadd.f32 %v5519, %v5695
        %v5697 = vpop.f32.mrb[0].mxu0
        %v5698 = vpop.f32.mrb[0].mxu0
        %v5699 = vadd.f32 %v5522, %v5698
        %v5700 = vpop.f32.mrb[0].mxu0
        %5701 = vmatprep.mubr.bf16.mxu0 %v4166
        %5702 = vmatmul.mubr.bf16.gmra.mrb[0].mxu0 %v4093
        %v5703 = vpop.f32.mrb[0].mxu0
        %v5704 = vadd.f32 %v5527, %v5703
        %v5705 = vpop.f32.mrb[0].mxu0
        %v5706 = vpop.f32.mrb[0].mxu0
        %v5707 = vadd.f32 %v5530, %v5706
        %v5708 = vpop.f32.mrb[0].mxu0
        %5709 = vmatprep.mubr.bf16.mxu0 %v4168
        %5710 = vmatmul.mubr.bf16.gmra.mrb[0].mxu0 %v4097
        %v5711 = vpop.f32.mrb[0].mxu0
        %v5712 = vadd.f32 %v5535, %v5711
        %v5713 = vpop.f32.mrb[0].mxu0
        %v5714 = vpop.f32.mrb[0].mxu0
        %v5715 = vadd.f32 %v5538, %v5714
        %v5716 = vpop.f32.mrb[0].mxu0
        %5717 = vmatprep.mubr.bf16.mxu0 %v4170
        %5718 = vmatmul.mubr.bf16.gmra.mrb[0].mxu0 %v4101
        %v5719 = vpop.f32.mrb[0].mxu0
        %v5720 = vadd.f32 %v5543, %v5719
        %v5721 = vpop.f32.mrb[0].mxu0
        %v5722 = vpop.f32.mrb[0].mxu0
        %v5723 = vadd.f32 %v5546, %v5722
        %v5724 = vpop.f32.mrb[0].mxu0
        %5725 = vmatprep.mubr.bf16.mxu0 %v4172
        %5726 = vmatmul.mubr.bf16.gmra.mrb[0].mxu0 %v4110
        %v5727 = vpop.f32.mrb[0].mxu0
        %v5728 = vadd.f32 %v5551, %v5727
        %v5729 = vpop.f32.mrb[0].mxu0
        %v5730 = vpop.f32.mrb[0].mxu0
        %v5731 = vadd.f32 %v5554, %v5730
        %v5732 = vpop.f32.mrb[0].mxu0
        %5733 = vmatprep.mubr.bf16.mxu0 %v4174
        %5734 = vmatmul.mubr.bf16.gmra.mrb[0].mxu0 %v4115
        %v5735 = vpop.f32.mrb[0].mxu0
        %v5736 = vadd.f32 %v5559, %v5735
        %v5737 = vpop.f32.mrb[0].mxu0
        %v5738 = vpop.f32.mrb[0].mxu0
        %v5739 = vadd.f32 %v5562, %v5738
        %v5740 = vpop.f32.mrb[0].mxu0
        %5741 = vdwg.mxu0
        %5742 = vmatprep.subr.bf16.mxu0 0
        %5743 = vmatpush1.bf16.msra.mxu0 %v5115
        %5744 = vmatprep.subr.bf16.mxu0 0
        %5745 = vmatpush1.bf16.msra.mxu0 %v5116
        %5746 = vmatprep.subr.bf16.mxu0 0
        %5747 = vmatpush1.bf16.msra.mxu0 %v5117
        %5748 = vmatprep.subr.bf16.mxu0 0
        %5749 = vmatpush1.bf16.msra.mxu0 %v5118
        %5750 = vmatprep.subr.bf16.mxu0 0
        %5751 = vmatpush1.bf16.msra.mxu0 %v5119
        %5752 = vmatprep.subr.bf16.mxu0 0
        %5753 = vmatpush1.bf16.msra.mxu0 %v5120
        %5754 = vmatprep.subr.bf16.mxu0 0
        %5755 = vmatpush1.bf16.msra.mxu0 %v5121
        %5756 = vmatprep.subr.bf16.mxu0 0
        %5757 = vmatpush1.bf16.msra.mxu0 %v5122
        %5758 = vmatprep.subr.bf16.mxu0 0
        %5759 = vmatpush1.bf16.msra.mxu0 %v5123
        %5760 = vmatprep.subr.bf16.mxu0 0
        %5761 = vmatpush1.bf16.msra.mxu0 %v5124
        %5762 = vmatprep.subr.bf16.mxu0 0
        %5763 = vmatpush1.bf16.msra.mxu0 %v5125
        %5764 = vmatprep.subr.bf16.mxu0 0
        %5765 = vmatpush1.bf16.msra.mxu0 %v5126
        %5766 = vmatprep.subr.bf16.mxu0 0
        %5767 = vmatpush1.bf16.msra.mxu0 %v5127
        %5768 = vmatprep.subr.bf16.mxu0 0
        %5769 = vmatpush1.bf16.msra.mxu0 %v5128
        %5770 = vmatprep.subr.bf16.mxu0 0
        %5771 = vmatpush1.bf16.msra.mxu0 %v5129
        %5772 = vmatprep.subr.bf16.mxu0 0
        %5773 = vmatpush1.bf16.msra.mxu0 %v5130
        %5774 = vmatprep.mubr.bf16.mxu0 %v4361
        %5775 = vmatmul.mubr.bf16.gmra.mrb[0].mxu0 %v4288
        %v5776 = vpop.f32.mrb[0].mxu0
        %v5777 = vadd.f32 %v5600, %v5776
        %v5778 = vpop.f32.mrb[0].mxu0
        %v5779 = vpop.f32.mrb[0].mxu0
        %v5780 = vadd.f32 %v5603, %v5779
        %v5781 = vpop.f32.mrb[0].mxu0
        %5782 = vmatprep.mubr.bf16.mxu0 %v4370
        %5783 = vmatmul.mubr.bf16.gmra.mrb[0].mxu0 %v4290
        %v5784 = vpop.f32.mrb[0].mxu0
        %v5785 = vadd.f32 %v5608, %v5784
        %v5786 = vpop.f32.mrb[0].mxu0
        %v5787 = vpop.f32.mrb[0].mxu0
        %v5788 = vadd.f32 %v5611, %v5787
        %v5789 = vpop.f32.mrb[0].mxu0
        %5790 = vmatprep.mubr.bf16.mxu0 %v4379
        %5791 = vmatmul.mubr.bf16.gmra.mrb[0].mxu0 %v4292
        %v5792 = vpop.f32.mrb[0].mxu0
        %v5793 = vadd.f32 %v5616, %v5792
        %v5794 = vpop.f32.mrb[0].mxu0
        %v5795 = vpop.f32.mrb[0].mxu0
        %v5796 = vadd.f32 %v5619, %v5795
        %v5797 = vpop.f32.mrb[0].mxu0
        %5798 = vmatprep.mubr.bf16.mxu0 %v4388
        %5799 = vmatmul.mubr.bf16.gmra.mrb[0].mxu0 %v4294
        %v5800 = vpop.f32.mrb[0].mxu0
        %v5801 = vadd.f32 %v5624, %v5800
        %v5802 = vpop.f32.mrb[0].mxu0
        %v5803 = vpop.f32.mrb[0].mxu0
        %v5804 = vadd.f32 %v5627, %v5803
        %v5805 = vpop.f32.mrb[0].mxu0
        %5806 = vmatprep.mubr.bf16.mxu0 %v4397
        %5807 = vmatmul.mubr.bf16.gmra.mrb[0].mxu0 %v4296
        %v5808 = vpop.f32.mrb[0].mxu0
        %v5809 = vadd.f32 %v5632, %v5808
        %v5810 = vpop.f32.mrb[0].mxu0
        %v5811 = vpop.f32.mrb[0].mxu0
        %v5812 = vadd.f32 %v5635, %v5811
        %v5813 = vpop.f32.mrb[0].mxu0
        %5814 = vmatprep.mubr.bf16.mxu0 %v4406
        %5815 = vmatmul.mubr.bf16.gmra.mrb[0].mxu0 %v4298
        %v5816 = vpop.f32.mrb[0].mxu0
        %v5817 = vadd.f32 %v5640, %v5816
        %v5818 = vpop.f32.mrb[0].mxu0
        %v5819 = vpop.f32.mrb[0].mxu0
        %v5820 = vadd.f32 %v5643, %v5819
        %v5821 = vpop.f32.mrb[0].mxu0
        %5822 = vmatprep.mubr.bf16.mxu0 %v4415
        %5823 = vmatmul.mubr.bf16.gmra.mrb[0].mxu0 %v4300
        %v5824 = vpop.f32.mrb[0].mxu0
        %v5825 = vadd.f32 %v5648, %v5824
        %v5826 = vpop.f32.mrb[0].mxu0
        %v5827 = vpop.f32.mrb[0].mxu0
        %v5828 = vadd.f32 %v5651, %v5827
        %v5829 = vpop.f32.mrb[0].mxu0
        %5830 = vmatprep.mubr.bf16.mxu0 %v4424
        %5831 = vmatmul.mubr.bf16.gmra.mrb[0].mxu0 %v4302
        %v5832 = vpop.f32.mrb[0].mxu0
        %v5833 = vadd.f32 %v5656, %v5832
        %v5834 = vpop.f32.mrb[0].mxu0
        %v5835 = vpop.f32.mrb[0].mxu0
        %v5836 = vadd.f32 %v5659, %v5835
        %v5837 = vpop.f32.mrb[0].mxu0
        %5838 = vmatprep.mubr.bf16.mxu0 %v4433
        %5839 = vmatmul.mubr.bf16.gmra.mrb[0].mxu0 %v4304
        %v5840 = vpop.f32.mrb[0].mxu0
        %v5841 = vadd.f32 %v5664, %v5840
        %v5842 = vpop.f32.mrb[0].mxu0
        %v5843 = vpop.f32.mrb[0].mxu0
        %v5844 = vadd.f32 %v5667, %v5843
        %v5845 = vpop.f32.mrb[0].mxu0
        %5846 = vmatprep.mubr.bf16.mxu0 %v4442
        %5847 = vmatmul.mubr.bf16.gmra.mrb[0].mxu0 %v4306
        %v5848 = vpop.f32.mrb[0].mxu0
        %v5849 = vadd.f32 %v5672, %v5848
        %v5850 = vpop.f32.mrb[0].mxu0
        %v5851 = vpop.f32.mrb[0].mxu0
        %v5852 = vadd.f32 %v5675, %v5851
        %v5853 = vpop.f32.mrb[0].mxu0
        %5854 = vmatprep.mubr.bf16.mxu0 %v4451
        %5855 = vmatmul.mubr.bf16.gmra.mrb[0].mxu0 %v4308
        %v5856 = vpop.f32.mrb[0].mxu0
        %v5857 = vadd.f32 %v5680, %v5856
        %v5858 = vpop.f32.mrb[0].mxu0
        %v5859 = vpop.f32.mrb[0].mxu0
        %v5860 = vadd.f32 %v5683, %v5859
        %v5861 = vpop.f32.mrb[0].mxu0
        %5862 = vmatprep.mubr.bf16.mxu0 %v4460
        %5863 = vmatmul.mubr.bf16.gmra.mrb[0].mxu0 %v4310
        %v5864 = vpop.f32.mrb[0].mxu0
        %v5865 = vadd.f32 %v5688, %v5864
        %v5866 = vpop.f32.mrb[0].mxu0
        %v5867 = vpop.f32.mrb[0].mxu0
        %v5868 = vadd.f32 %v5691, %v5867
        %v5869 = vpop.f32.mrb[0].mxu0
        %5870 = vmatprep.mubr.bf16.mxu0 %v4469
        %5871 = vmatmul.mubr.bf16.gmra.mrb[0].mxu0 %v4312
        %v5872 = vpop.f32.mrb[0].mxu0
        %v5873 = vadd.f32 %v5696, %v5872
        %v5874 = vpop.f32.mrb[0].mxu0
        %v5875 = vpop.f32.mrb[0].mxu0
        %v5876 = vadd.f32 %v5699, %v5875
        %v5877 = vpop.f32.mrb[0].mxu0
        %5878 = vmatprep.mubr.bf16.mxu0 %v4478
        %5879 = vmatmul.mubr.bf16.gmra.mrb[0].mxu0 %v4314
        %v5880 = vpop.f32.mrb[0].mxu0
        %v5881 = vadd.f32 %v5704, %v5880
        %v5882 = vpop.f32.mrb[0].mxu0
        %v5883 = vpop.f32.mrb[0].mxu0
        %v5884 = vadd.f32 %v5707, %v5883
        %v5885 = vpop.f32.mrb[0].mxu0
        %5886 = vmatprep.mubr.bf16.mxu0 %v4487
        %5887 = vmatmul.mubr.bf16.gmra.mrb[0].mxu0 %v4316
        %v5888 = vpop.f32.mrb[0].mxu0
        %v5889 = vadd.f32 %v5712, %v5888
        %v5890 = vpop.f32.mrb[0].mxu0
        %v5891 = vpop.f32.mrb[0].mxu0
        %v5892 = vadd.f32 %v5715, %v5891
        %v5893 = vpop.f32.mrb[0].mxu0
        %5894 = vmatprep.mubr.bf16.mxu0 %v4496
        %5895 = vmatmul.mubr.bf16.gmra.mrb[0].mxu0 %v4318
        %v5896 = vpop.f32.mrb[0].mxu0
        %v5897 = vadd.f32 %v5720, %v5896
        %v5898 = vpop.f32.mrb[0].mxu0
        %v5899 = vpop.f32.mrb[0].mxu0
        %v5900 = vadd.f32 %v5723, %v5899
        %v5901 = vpop.f32.mrb[0].mxu0
        %5902 = vmatprep.mubr.bf16.mxu0 %v4505
        %5903 = vmatmul.mubr.bf16.gmra.mrb[0].mxu0 %v4320
        %v5904 = vpop.f32.mrb[0].mxu0
        %v5905 = vadd.f32 %v5728, %v5904
        %v5906 = vpop.f32.mrb[0].mxu0
        %v5907 = vpop.f32.mrb[0].mxu0
        %v5908 = vadd.f32 %v5731, %v5907
        %v5909 = vpop.f32.mrb[0].mxu0
        %5910 = vmatprep.mubr.bf16.mxu0 %v4514
        %5911 = vmatmul.mubr.bf16.gmra.mrb[0].mxu0 %v4322
        %v5912 = vpop.f32.mrb[0].mxu0
        %v5913 = vadd.f32 %v5736, %v5912
        %v5914 = vpop.f32.mrb[0].mxu0
        %v5915 = vpop.f32.mrb[0].mxu0
        %v5916 = vadd.f32 %v5739, %v5915
        %v5917 = vpop.f32.mrb[0].mxu0
        %5918 = vdwg.mxu0
        %5919 = vmatprep.subr.bf16.mxu0 0
        %5920 = vmatpush1.bf16.msra.mxu0 %v5131
        %5921 = vmatprep.subr.bf16.mxu0 0
        %5922 = vmatpush1.bf16.msra.mxu0 %v5132
        %5923 = vmatprep.subr.bf16.mxu0 0
        %5924 = vmatpush1.bf16.msra.mxu0 %v5133
        %5925 = vmatprep.subr.bf16.mxu0 0
        %5926 = vmatpush1.bf16.msra.mxu0 %v5134
        %5927 = vmatprep.subr.bf16.mxu0 0
        %5928 = vmatpush1.bf16.msra.mxu0 %v5135
        %5929 = vmatprep.subr.bf16.mxu0 0
        %5930 = vmatpush1.bf16.msra.mxu0 %v5136
        %5931 = vmatprep.subr.bf16.mxu0 0
        %5932 = vmatpush1.bf16.msra.mxu0 %v5137
        %5933 = vmatprep.subr.bf16.mxu0 0
        %5934 = vmatpush1.bf16.msra.mxu0 %v5138
        %5935 = vmatprep.subr.bf16.mxu0 0
        %5936 = vmatpush1.bf16.msra.mxu0 0
        %5937 = vmatprep.subr.bf16.mxu0 0
        %5938 = vmatpush1.bf16.msra.mxu0 0
        %5939 = vmatprep.subr.bf16.mxu0 0
        %5940 = vmatpush1.bf16.msra.mxu0 0
        %5941 = vmatprep.subr.bf16.mxu0 0
        %5942 = vmatpush1.bf16.msra.mxu0 0
        %5943 = vmatprep.subr.bf16.mxu0 0
        %5944 = vmatpush1.bf16.msra.mxu0 0
        %5945 = vmatprep.subr.bf16.mxu0 0
        %5946 = vmatpush1.bf16.msra.mxu0 0
        %5947 = vmatprep.subr.bf16.mxu0 0
        %5948 = vmatpush1.bf16.msra.mxu0 0
        %5949 = vmatprep.subr.bf16.mxu0 0
        %5950 = vmatpush1.bf16.msra.mxu0 0
        %5951 = vmatprep.mubr.bf16.mxu0 0
        %5952 = vmatmul.mubr.bf16.gmra.mrb[0].mxu0 %v4539
        %v5953 = vpop.f32.mrb[0].mxu0
        %v5954 = vadd.f32 %v5777, %v5953
        %v5955 = vpop.f32.mrb[0].mxu0
        %v5956 = vpop.f32.mrb[0].mxu0
        %v5957 = vadd.f32 %v5780, %v5956
        %v5958 = vpop.f32.mrb[0].mxu0
        %5959 = vmatprep.mubr.bf16.mxu0 0
        %5960 = vmatmul.mubr.bf16.gmra.mrb[0].mxu0 %v4541
        %v5961 = vpop.f32.mrb[0].mxu0
        %v5962 = vadd.f32 %v5785, %v5961
        %v5963 = vpop.f32.mrb[0].mxu0
        %v5964 = vpop.f32.mrb[0].mxu0
        %v5965 = vadd.f32 %v5788, %v5964
        %v5966 = vpop.f32.mrb[0].mxu0
        %5967 = vmatprep.mubr.bf16.mxu0 0
        %5968 = vmatmul.mubr.bf16.gmra.mrb[0].mxu0 %v4543
        %v5969 = vpop.f32.mrb[0].mxu0
        %v5970 = vadd.f32 %v5793, %v5969
        %v5971 = vpop.f32.mrb[0].mxu0
        %v5972 = vpop.f32.mrb[0].mxu0
        %v5973 = vadd.f32 %v5796, %v5972
        %v5974 = vpop.f32.mrb[0].mxu0
        %5975 = vmatprep.mubr.bf16.mxu0 0
        %5976 = vmatmul.mubr.bf16.gmra.mrb[0].mxu0 %v4545
        %v5977 = vpop.f32.mrb[0].mxu0
        %v5978 = vadd.f32 %v5801, %v5977
        %v5979 = vpop.f32.mrb[0].mxu0
        %v5980 = vpop.f32.mrb[0].mxu0
        %v5981 = vadd.f32 %v5804, %v5980
        %v5982 = vpop.f32.mrb[0].mxu0
        %5983 = vmatprep.mubr.bf16.mxu0 0
        %5984 = vmatmul.mubr.bf16.gmra.mrb[0].mxu0 %v4547
        %v5985 = vpop.f32.mrb[0].mxu0
        %v5986 = vadd.f32 %v5809, %v5985
        %v5987 = vpop.f32.mrb[0].mxu0
        %v5988 = vpop.f32.mrb[0].mxu0
        %v5989 = vadd.f32 %v5812, %v5988
        %v5990 = vpop.f32.mrb[0].mxu0
        %5991 = vmatprep.mubr.bf16.mxu0 0
        %5992 = vmatmul.mubr.bf16.gmra.mrb[0].mxu0 %v4549
        %v5993 = vpop.f32.mrb[0].mxu0
        %v5994 = vadd.f32 %v5817, %v5993
        %v5995 = vpop.f32.mrb[0].mxu0
        %v5996 = vpop.f32.mrb[0].mxu0
        %v5997 = vadd.f32 %v5820, %v5996
        %v5998 = vpop.f32.mrb[0].mxu0
        %5999 = vmatprep.mubr.bf16.mxu0 0
        %6000 = vmatmul.mubr.bf16.gmra.mrb[0].mxu0 %v4551
        %v6001 = vpop.f32.mrb[0].mxu0
        %v6002 = vadd.f32 %v5825, %v6001
        %v6003 = vpop.f32.mrb[0].mxu0
        %v6004 = vpop.f32.mrb[0].mxu0
        %v6005 = vadd.f32 %v5828, %v6004
        %v6006 = vpop.f32.mrb[0].mxu0
        %6007 = vmatprep.mubr.bf16.mxu0 0
        %6008 = vmatmul.mubr.bf16.gmra.mrb[0].mxu0 %v4553
        %v6009 = vpop.f32.mrb[0].mxu0
        %v6010 = vadd.f32 %v5833, %v6009
        %v6011 = vpop.f32.mrb[0].mxu0
        %v6012 = vpop.f32.mrb[0].mxu0
        %v6013 = vadd.f32 %v5836, %v6012
        %v6014 = vpop.f32.mrb[0].mxu0
        %6015 = vmatprep.mubr.bf16.mxu0 0
        %6016 = vmatmul.mubr.bf16.gmra.mrb[0].mxu0 %v4555
        %v6017 = vpop.f32.mrb[0].mxu0
        %v6018 = vadd.f32 %v5841, %v6017
        %v6019 = vpop.f32.mrb[0].mxu0
        %v6020 = vpop.f32.mrb[0].mxu0
        %v6021 = vadd.f32 %v5844, %v6020
        %v6022 = vpop.f32.mrb[0].mxu0
        %6023 = vmatprep.mubr.bf16.mxu0 0
        %6024 = vmatmul.mubr.bf16.gmra.mrb[0].mxu0 %v4557
        %v6025 = vpop.f32.mrb[0].mxu0
        %v6026 = vadd.f32 %v5849, %v6025
        %v6027 = vpop.f32.mrb[0].mxu0
        %v6028 = vpop.f32.mrb[0].mxu0
        %v6029 = vadd.f32 %v5852, %v6028
        %v6030 = vpop.f32.mrb[0].mxu0
        %6031 = vmatprep.mubr.bf16.mxu0 0
        %6032 = vmatmul.mubr.bf16.gmra.mrb[0].mxu0 %v4559
        %v6033 = vpop.f32.mrb[0].mxu0
        %v6034 = vadd.f32 %v5857, %v6033
        %v6035 = vpop.f32.mrb[0].mxu0
        %v6036 = vpop.f32.mrb[0].mxu0
        %v6037 = vadd.f32 %v5860, %v6036
        %v6038 = vpop.f32.mrb[0].mxu0
        %6039 = vmatprep.mubr.bf16.mxu0 0
        %6040 = vmatmul.mubr.bf16.gmra.mrb[0].mxu0 %v4561
        %v6041 = vpop.f32.mrb[0].mxu0
        %v6042 = vadd.f32 %v5865, %v6041
        %v6043 = vpop.f32.mrb[0].mxu0
        %v6044 = vpop.f32.mrb[0].mxu0
        %v6045 = vadd.f32 %v5868, %v6044
        %v6046 = vpop.f32.mrb[0].mxu0
        %6047 = vmatprep.mubr.bf16.mxu0 0
        %6048 = vmatmul.mubr.bf16.gmra.mrb[0].mxu0 %v4563
        %v6049 = vpop.f32.mrb[0].mxu0
        %v6050 = vadd.f32 %v5873, %v6049
        %v6051 = vpop.f32.mrb[0].mxu0
        %v6052 = vpop.f32.mrb[0].mxu0
        %v6053 = vadd.f32 %v5876, %v6052
        %v6054 = vpop.f32.mrb[0].mxu0
        %6055 = vmatprep.mubr.bf16.mxu0 0
        %6056 = vmatmul.mubr.bf16.gmra.mrb[0].mxu0 %v4565
        %v6057 = vpop.f32.mrb[0].mxu0
        %v6058 = vadd.f32 %v5881, %v6057
        %v6059 = vpop.f32.mrb[0].mxu0
        %v6060 = vpop.f32.mrb[0].mxu0
        %v6061 = vadd.f32 %v5884, %v6060
        %v6062 = vpop.f32.mrb[0].mxu0
        %6063 = vmatprep.mubr.bf16.mxu0 0
        %6064 = vmatmul.mubr.bf16.gmra.mrb[0].mxu0 %v4567
        %v6065 = vpop.f32.mrb[0].mxu0
        %v6066 = vadd.f32 %v5889, %v6065
        %v6067 = vpop.f32.mrb[0].mxu0
        %v6068 = vpop.f32.mrb[0].mxu0
        %v6069 = vadd.f32 %v5892, %v6068
        %v6070 = vpop.f32.mrb[0].mxu0
        %6071 = vmatprep.mubr.bf16.mxu0 0
        %6072 = vmatmul.mubr.bf16.gmra.mrb[0].mxu0 %v4569
        %v6073 = vpop.f32.mrb[0].mxu0
        %v6074 = vadd.f32 %v5897, %v6073
        %v6075 = vpop.f32.mrb[0].mxu0
        %v6076 = vpop.f32.mrb[0].mxu0
        %v6077 = vadd.f32 %v5900, %v6076
        %v6078 = vpop.f32.mrb[0].mxu0
        %6079 = vmatprep.mubr.bf16.mxu0 0
        %6080 = vmatmul.mubr.bf16.gmra.mrb[0].mxu0 %v4571
        %v6081 = vpop.f32.mrb[0].mxu0
        %v6082 = vadd.f32 %v5905, %v6081
        %v6083 = vpop.f32.mrb[0].mxu0
        %v6084 = vpop.f32.mrb[0].mxu0
        %v6085 = vadd.f32 %v5908, %v6084
        %v6086 = vpop.f32.mrb[0].mxu0
        %6087 = vmatprep.mubr.bf16.mxu0 0
        %6088 = vmatmul.mubr.bf16.gmra.mrb[0].mxu0 %v4573
        %v6089 = vpop.f32.mrb[0].mxu0
        %v6090 = vadd.f32 %v5913, %v6089
        %v6091 = vpop.f32.mrb[0].mxu0
        %v6092 = vpop.f32.mrb[0].mxu0
        %v6093 = vadd.f32 %v5916, %v6092
        %v6094 = vpop.f32.mrb[0].mxu0
        %6095 = vdwg.mxu0
        %v6096 = vadd.f32 %v5954, %v4736
        %v6097 = vadd.f32 %v5957, %v4737
        %v6098 = vadd.f32 %v5962, %v4738
        %v6099 = vadd.f32 %v5965, %v4739
        %v6100 = vadd.f32 %v5970, %v4740
        %v6101 = vadd.f32 %v5973, %v4741
        %v6102 = vadd.f32 %v5978, %v4742
        %v6103 = vadd.f32 %v5981, %v4743
        %v6104 = vadd.f32 %v5986, %v4744
        %v6105 = vadd.f32 %v5989, %v4745
        %v6106 = vadd.f32 %v5994, %v4746
        %v6107 = vadd.f32 %v5997, %v4747
        %v6108 = vadd.f32 %v6002, %v4748
        %v6109 = vadd.f32 %v6005, %v4749
        %v6110 = vadd.f32 %v6010, %v4750
        %v6111 = vadd.f32 %v6013, %v4751
        %v6112 = vadd.f32 %v6018, %v4752
        %v6113 = vadd.f32 %v6021, %v4753
        %v6114 = vadd.f32 %v6026, %v4754
        %v6115 = vadd.f32 %v6029, %v4755
        %v6116 = vadd.f32 %v6034, %v4756
        %v6117 = vadd.f32 %v6037, %v4757
        %v6118 = vadd.f32 %v6042, %v4758
        %v6119 = vadd.f32 %v6045, %v4759
        %v6120 = vadd.f32 %v6050, %v4760
        %v6121 = vadd.f32 %v6053, %v4761
        %v6122 = vadd.f32 %v6058, %v4762
        %v6123 = vadd.f32 %v6061, %v4763
        %v6124 = vadd.f32 %v6066, %v4764
        %v6125 = vadd.f32 %v6069, %v4765
        %v6126 = vadd.f32 %v6074, %v4766
        %v6127 = vadd.f32 %v6077, %v4767
        %v6128 = vadd.f32 %v6082, %v4768
        %v6129 = vadd.f32 %v6085, %v4769
        %v6130 = vadd.f32 %v6090, %v4770
        %v6131 = vadd.f32 %v6093, %v4771
        %v6132 = vmax.f32 %v6096, 0.0
        %v6133 = vmax.f32 %v6097, 0.0
        %v6134 = vmax.f32 %v6098, 0.0
        %v6135 = vmax.f32 %v6099, 0.0
        %v6136 = vmax.f32 %v6100, 0.0
        %v6137 = vmax.f32 %v6101, 0.0
        %v6138 = vmax.f32 %v6102, 0.0
        %v6139 = vmax.f32 %v6103, 0.0
        %v6140 = vmax.f32 %v6104, 0.0
        %v6141 = vmax.f32 %v6105, 0.0
        %v6142 = vmax.f32 %v6106, 0.0
        %v6143 = vmax.f32 %v6107, 0.0
        %v6144 = vmax.f32 %v6108, 0.0
        %v6145 = vmax.f32 %v6109, 0.0
        %v6146 = vmax.f32 %v6110, 0.0
        %v6147 = vmax.f32 %v6111, 0.0
        %v6148 = vmax.f32 %v6112, 0.0
        %v6149 = vmax.f32 %v6113, 0.0
        %v6150 = vmax.f32 %v6114, 0.0
        %v6151 = vmax.f32 %v6115, 0.0
        %v6152 = vmax.f32 %v6116, 0.0
        %v6153 = vmax.f32 %v6117, 0.0
        %v6154 = vmax.f32 %v6118, 0.0
        %v6155 = vmax.f32 %v6119, 0.0
        %v6156 = vmax.f32 %v6120, 0.0
        %v6157 = vmax.f32 %v6121, 0.0
        %v6158 = vmax.f32 %v6122, 0.0
        %v6159 = vmax.f32 %v6123, 0.0
        %v6160 = vmax.f32 %v6124, 0.0
        %v6161 = vmax.f32 %v6125, 0.0
        %v6162 = vmax.f32 %v6126, 0.0
        %v6163 = vmax.f32 %v6127, 0.0
        %v6164 = vmax.f32 %v6128, 0.0
        %v6165 = vmax.f32 %v6129, 0.0
        %v6166 = vmax.f32 %v6130, 0.0
        %v6167 = vmax.f32 %v6131, 0.0
        %6168 = vst [vmem:[%s271] sm:$0xff] %v6132
        %6169 = vst [vmem:[%s271 + $0x8] sm:$0xff] %v6133
        %6170 = vst [vmem:[%s271 + $0x10] sm:$0xff] %v6134
        %6171 = vst [vmem:[%s271 + $0x18] sm:$0xff] %v6135
        %6172 = vst [vmem:[%s271 + $0x20] sm:$0xff] %v6136
        %6173 = vst [vmem:[%s271 + $0x28] sm:$0xff] %v6137
        %6174 = vst [vmem:[%s271 + $0x30] sm:$0xff] %v6138
        %6175 = vst [vmem:[%s271 + $0x38] sm:$0xff] %v6139
        %6176 = vst [vmem:[%s271 + $0x40] sm:$0xff] %v6140
        %6177 = vst [vmem:[%s271 + $0x48] sm:$0xff] %v6141
        %6178 = vst [vmem:[%s271 + $0x50] sm:$0xff] %v6142
        %6179 = vst [vmem:[%s271 + $0x58] sm:$0xff] %v6143
        %6180 = vst [vmem:[%s271 + $0x60] sm:$0xff] %v6144
        %6181 = vst [vmem:[%s271 + $0x68] sm:$0xff] %v6145
        %6182 = vst [vmem:[%s271 + $0x70] sm:$0xff] %v6146
        %6183 = vst [vmem:[%s271 + $0x78] sm:$0xff] %v6147
        %6184 = vst [vmem:[%s271 + $0x80] sm:$0xff] %v6148
        %6185 = vst [vmem:[%s271 + $0x88] sm:$0xff] %v6149
        %6186 = vst [vmem:[%s271 + $0x90] sm:$0xff] %v6150
        %6187 = vst [vmem:[%s271 + $0x98] sm:$0xff] %v6151
        %6188 = vst [vmem:[%s271 + $0xa0] sm:$0xff] %v6152
        %6189 = vst [vmem:[%s271 + $0xa8] sm:$0xff] %v6153
        %6190 = vst [vmem:[%s271 + $0xb0] sm:$0xff] %v6154
        %6191 = vst [vmem:[%s271 + $0xb8] sm:$0xff] %v6155
        %6192 = vst [vmem:[%s271 + $0xc0] sm:$0xff] %v6156
        %6193 = vst [vmem:[%s271 + $0xc8] sm:$0xff] %v6157
        %6194 = vst [vmem:[%s271 + $0xd0] sm:$0xff] %v6158
        %6195 = vst [vmem:[%s271 + $0xd8] sm:$0xff] %v6159
        %6196 = vst [vmem:[%s271 + $0xe0] sm:$0xff] %v6160
        %6197 = vst [vmem:[%s271 + $0xe8] sm:$0xff] %v6161
        %6198 = vst [vmem:[%s271 + $0xf0] sm:$0xff] %v6162
        %6199 = vst [vmem:[%s271 + $0xf8] sm:$0xff] %v6163
        %6200 = vst [vmem:[%s271 + $0x100] sm:$0xff] %v6164
        %6201 = vst [vmem:[%s271 + $0x108] sm:$0xff] %v6165
        %6202 = vst [vmem:[%s271 + $0x110] sm:$0xff] %v6166
        %6203 = vst [vmem:[%s271 + $0x118] sm:$0x3f] %v6167
        %s6204 = sand.u32 %s141, 1
        %s6205 = scalar_lea.sflag [#allocation5], %s6204
        %s6206 = sand.u32 %s141, 1
        %s6207 = smul.addr %s6206, 288
        %s6208 = scalar_lea.vmem [#allocation9], %s6207
        // Predicated region
        $region53: #{tpu_custom_call.1} parent=39 // pred_check
          %p6209 = pneg %p151
        $region54: #{tpu_custom_call.1} parent=39 // pred_check_branch
          %6211 = sbr.rel (%p6209) target = $region56
        $region55: #{tpu_custom_call.1} parent=39 // pred_region
          %s6213 = ssub.s32 4608, 4608
          %6214 = vsyncadd %s6205, %s6213
          %s6215 = smul.addr %s23, 36
          %s6216 = smul.addr %s6215, 128
          %s6217 = scalar_lea.hbm %s5, %s6216
          %s6218 = sshll.u32 %s6208, 4
          %s6219 = int_to_ptr.vmem [resolvable:$true] %s6218
          %6224 = dma.vmem_to_hbm [thread:$0]  %s6219, 4608, %s6217, %s6205, 128, 128, 8
        $region56: #{tpu_custom_call.1} parent=39 // pred_fallthru
          _
      $region40: #{tpu_custom_call.1} parent=5 // pred_fallthru
        _
      %p6225 = scmp.le.s32.totalorder 2, %s18
      // Predicated region
      $region57: #{tpu_custom_call.1} parent=5 // pred_check
        %p6226 = pneg %p6225
      $region58: #{tpu_custom_call.1} parent=5 // pred_check_branch
        %6228 = sbr.rel (%p6226) target = $region60
      $region59: #{tpu_custom_call.1} parent=5 // pred_region
        %s6229 = ssub.s32 %s18, 2
        // Predicated region
        $region61: #{tpu_custom_call.1} parent=59 // pred_check
          %p6230 = pneg %p157
        $region62: #{tpu_custom_call.1} parent=59 // pred_check_branch
          %6232 = sbr.rel (%p6230) target = $region64
        $region63: #{tpu_custom_call.1} parent=59 // pred_region
          %s6233 = sand.u32 %s142, 1
          %s6234 = scalar_lea.sflag [#allocation5], %s6233
          %s6235 = sand.u32 %s142, 1
          %s6236 = smul.addr %s6235, 288
          %s6237 = scalar_lea.vmem [#allocation9], %s6236
          %6238 = dma.done %s6234, 4608
        $region64: #{tpu_custom_call.1} parent=59 // pred_fallthru
          _
      $region60: #{tpu_custom_call.1} parent=5 // pred_fallthru
        _
    $region6: #{tpu_custom_call.1} parent=1 // loop_footer
      %s22 = sadd.s32 1, %s18
    $region7: #{tpu_custom_call.1} parent=1 // loop_footer_branch
      %17 = sbr.rel target = $region3
    $region8: #{tpu_custom_call.1} parent=1 // loop_exit
      _
    %6239 = vsyncpa [#allocation4], 1
    %s6240 = scalar_lea.sflag [#allocation4], 1
    %6241 = vsyncpa %s6240, 1
    %6242 = vsyncpa [#allocation7], 1
    %6243 = vsyncpa [#allocation5], 1
    %s6244 = scalar_lea.sflag [#allocation5], 1
    %6245 = vsyncpa %s6244, 1

</llo_original>
